<compile_context>
chip_gen: v6e
topology: v6e:2x2x1
jax: 0.10.0
libtpu: 0.0.40
codegen_flags: <defaults>
</compile_context>

<pallas_src>
import jax
import jax.numpy as jnp
from jax.experimental import pallas as pl
from jax.experimental.pallas import tpu as pltpu

# ----- module hyper-parameters (globals in the original LAB4 script) --------
HIDDEN_SIZE = 32          # hidden_size (= embedding dim E, LSTM input size)
CONDITIONAL_SIZE = 8      # conditional_size
LATENT_SIZE = 32          # latent_size
TENSE_SIZE = 4            # tense_size
OUTPUT_SIZE = 28          # output_size (26 letters + SOS + EOS)
LSTM_HIDDEN = HIDDEN_SIZE + CONDITIONAL_SIZE   # H = 40

# ----- lane-padded sizes used inside the kernel ------------------------------
XP = 128                  # embedding width padded 32 -> 128
HP = 128                  # hidden width   padded 40 -> 128 (per-gate lane block)
VP = 128                  # vocab width    padded 28 -> 128
G4 = 4 * HP               # fused gate width = 512


# ------------------------------- Pallas kernel ------------------------------
def decoder_seq_kernel(x_ref, wih_ref, whh_ref, b_ref, wout_ref, bout_ref,
                       h0_ref, c0_ref,
                       logits_ref, h_ref, c_ref,
                       gx_ref, hall_ref):
    """Whole decode loop in one kernel invocation.

    x_ref:     (T, B, XP)  relu(embedding(token)), lane-padded, bf16
    wih_ref:   (XP, G4)    W_ih  (bf16), each gate on a 128-lane boundary
    whh_ref:   (HP, G4)    W_hh  (bf16)
    b_ref:     (1, G4)     b_ih + b_hh (f32), gate-padded with zeros
    wout_ref:  (HP, VP)    output projection (bf16), zero-padded
    bout_ref:  (1, VP)     output bias (f32)
    h0/c0_ref: (B, HP)     initial state (f32, zero-padded past lane 40)
    logits_ref:(T, B, VP)  all-step logits
    h_ref/c_ref:(B, HP)    final state
    gx_ref:    (T, B, G4)  f32 scratch: input-side gate pre-activations
    hall_ref:  (T, B, HP)  f32 scratch: h_t for the batched output projection
    """
    T, B, _ = x_ref.shape

    # (1) Input-side gate pre-activations for ALL timesteps: one MXU call,
    #     bias broadcast folded in (happens once, outside the recurrence).
    x_flat = x_ref[...].reshape(T * B, XP)                       # bf16
    gx = jnp.dot(x_flat, wih_ref[...],
                 preferred_element_type=jnp.float32) + b_ref[...]
    gx_ref[...] = gx.reshape(T, B, G4)

    # (2) Recurrence: h/c are loop-carried vreg values; per step only the
    #     h @ W_hh matmul hits the MXU.  h_t is parked in VMEM for step (3).
    def step(t, carry):
        h, c = carry
        gates = gx_ref[t] + jnp.dot(h.astype(jnp.bfloat16), whh_ref[...],
                                    preferred_element_type=jnp.float32)
        i_g = jax.nn.sigmoid(gates[:, 0 * HP:1 * HP])            # vreg-aligned
        f_g = jax.nn.sigmoid(gates[:, 1 * HP:2 * HP])
        g_g = jnp.tanh(gates[:, 2 * HP:3 * HP])
        o_g = jax.nn.sigmoid(gates[:, 3 * HP:4 * HP])
        c_new = f_g * c + i_g * g_g
        h_new = o_g * jnp.tanh(c_new)
        hall_ref[t] = h_new
        return h_new, c_new

    h_fin, c_fin = jax.lax.fori_loop(0, T, step,
                                     (h0_ref[...], c0_ref[...]),
                                     unroll=True)
    h_ref[...] = h_fin
    c_ref[...] = c_fin

    # (3) Output projection hoisted out of the loop: ONE (T*B, HP) @ (HP, VP).
    h_all = hall_ref[...].reshape(T * B, HP).astype(jnp.bfloat16)
    logits = jnp.dot(h_all, wout_ref[...],
                     preferred_element_type=jnp.float32) + bout_ref[...]
    logits_ref[...] = logits.reshape(T, B, VP)


# ------------------------- parameter packing (padding) -----------------------
def pack_params(params):
    """Zero-pad so each gate starts on a 128-lane boundary; weights -> bf16.

    Also pre-applies ReLU to the embedding table (relu(E)[tok] == relu(E[tok]))
    and lane-pads it, so the wrapper only does one bf16 gather per call.
    """
    E, H, V = HIDDEN_SIZE, LSTM_HIDDEN, OUTPUT_SIZE
    w_ih_p = jnp.zeros((XP, G4), jnp.float32)
    w_hh_p = jnp.zeros((HP, G4), jnp.float32)
    b_p = jnp.zeros((1, G4), jnp.float32)
    for g in range(4):
        w_ih_p = w_ih_p.at[:E, g * HP:g * HP + H].set(
            params["w_ih_t"][:, g * H:(g + 1) * H])
        w_hh_p = w_hh_p.at[:H, g * HP:g * HP + H].set(
            params["w_hh_t"][:, g * H:(g + 1) * H])
        b_p = b_p.at[:, g * HP:g * HP + H].set(
            params["b_gates"][:, g * H:(g + 1) * H])
    w_out_p = jnp.zeros((HP, VP), jnp.float32).at[:H, :V].set(params["w_out_t"])
    b_out_p = jnp.zeros((1, VP), jnp.float32).at[:, :V].set(params["b_out"])
    emb_p = jnp.zeros((V, XP), jnp.float32).at[:, :E].set(
        jax.nn.relu(params["embedding"]))
    return {
        "emb": emb_p.astype(jnp.bfloat16),          # relu + pad pre-applied
        "w_ih": w_ih_p.astype(jnp.bfloat16),
        "w_hh": w_hh_p.astype(jnp.bfloat16),
        "b": b_p,                                   # biases stay f32
        "w_out": w_out_p.astype(jnp.bfloat16),
        "b_out": b_out_p,
    }


# ------------------------------- fused wrapper -------------------------------
@jax.jit
def decode_sequence(packed, tokens, h0, c0):
    """Run the full teacher-forced decode loop in ONE pallas_call invocation.

    tokens: (T, B) int32;  h0, c0: (B, LSTM_HIDDEN) float32.
    Returns (logits (T, B, V), h_T (B, H), c_T (B, H)).
    """
    T, B = tokens.shape
    x_seq = packed["emb"][tokens]                               # (T, B, XP) bf16
    h0p = jnp.zeros((B, HP), jnp.float32).at[:, :LSTM_HIDDEN].set(h0)
    c0p = jnp.zeros((B, HP), jnp.float32).at[:, :LSTM_HIDDEN].set(c0)

    full3 = lambda i: (0, 0, 0)
    full2 = lambda i: (0, 0)
    grid_spec = pltpu.PrefetchScalarGridSpec(
        num_scalar_prefetch=0,
        grid=(1,),                                   # whole loop in one step
        in_specs=[
            pl.BlockSpec((T, B, XP), full3),         # x_seq (fully resident)
            pl.BlockSpec((XP, G4), full2),           # W_ih
            pl.BlockSpec((HP, G4), full2),           # W_hh
            pl.BlockSpec((1, G4), full2),            # gate bias
            pl.BlockSpec((HP, VP), full2),           # W_out
            pl.BlockSpec((1, VP), full2),            # output bias
            pl.BlockSpec((B, HP), full2),            # h0
            pl.BlockSpec((B, HP), full2),            # c0
        ],
        out_specs=(
            pl.BlockSpec((T, B, VP), full3),         # all-step logits
            pl.BlockSpec((B, HP), full2),            # final h
            pl.BlockSpec((B, HP), full2),            # final c
        ),
        scratch_shapes=[
            pltpu.VMEM((T, B, G4), jnp.float32),     # input-side gate preacts
            pltpu.VMEM((T, B, HP), jnp.float32),     # h_t buffer for out-proj
        ],
    )
    logits_p, h_p, c_p = pl.pallas_call(
        decoder_seq_kernel,
        out_shape=(
            jax.ShapeDtypeStruct((T, B, VP), jnp.float32),
            jax.ShapeDtypeStruct((B, HP), jnp.float32),
            jax.ShapeDtypeStruct((B, HP), jnp.float32),
        ),
        grid_spec=grid_spec,
        compiler_params=pltpu.CompilerParams(
            dimension_semantics=("arbitrary",)),
    )(x_seq, packed["w_ih"], packed["w_hh"], packed["b"],
      packed["w_out"], packed["b_out"], h0p, c0p)

    return (logits_p[:, :, :OUTPUT_SIZE],
            h_p[:, :LSTM_HIDDEN],
            c_p[:, :LSTM_HIDDEN])


def decoder_forward(packed, token, hidden):
    """Pallas-backed equivalent of DecoderRNN.forward(input, hidden) (one step).

    The batch is replicated to a full sublane group (8 rows) so the step uses
    dense vreg rows; only row 0 is meaningful.  Distinct (T, B) shapes trace a
    separate jit variant (one-time cost).
    """
    h0, c0 = hidden                                          # each (1, 1, H)
    BPAD = 8
    tok = jnp.asarray(token, jnp.int32).reshape(())
    tokens = jnp.full((1, BPAD), tok, dtype=jnp.int32)       # T=1, B=8 (replicated)
    h0b = jnp.broadcast_to(h0.reshape(1, LSTM_HIDDEN), (BPAD, LSTM_HIDDEN))
    c0b = jnp.broadcast_to(c0.reshape(1, LSTM_HIDDEN), (BPAD, LSTM_HIDDEN))
    logits, h1, c1 = decode_sequence(packed, tokens, h0b, c0b)
    return logits[0, :1], (h1[:1].reshape(1, 1, LSTM_HIDDEN),
                           c1[:1].reshape(1, 1, LSTM_HIDDEN))


# ------------------------------ plain-JAX glue --------------------------------
def init_hidden(params, latent, tense):
    """DecoderRNN.initHidden (batched): latent (B, L), tense (B,) -> (B, H)."""
    cond = params["condition_embedding"][tense]                      # (B, COND)
    hid = latent @ params["w_l2h_t"] + params["b_l2h"]               # (B, E)
    return jnp.concatenate([hid, cond], axis=-1)


def init_cell(params, latent, tense):
    """DecoderRNN.initCell (batched)."""
    cond = params["condition_embedding"][tense]
    cel = latent @ params["w_l2c_t"] + params["b_l2c"]
    return jnp.concatenate([cel, cond], axis=-1)


def make_params(key):
    """Deterministic synthetic parameters matching DecoderRNN.__init__ shapes."""
    ks = jax.random.split(key, 12)
    s = 0.1
    H4 = 4 * LSTM_HIDDEN
    return {
        # nn.Embedding(output_size, hidden_size)
        "embedding": s * jax.random.normal(ks[0], (OUTPUT_SIZE, HIDDEN_SIZE), jnp.float32),
        # nn.Embedding(tense_size, conditional_size)
        "condition_embedding": s * jax.random.normal(ks[1], (TENSE_SIZE, CONDITIONAL_SIZE), jnp.float32),
        # nn.Linear(latent_size, hidden_size)  (stored transposed: (in, out))
        "w_l2h_t": s * jax.random.normal(ks[2], (LATENT_SIZE, HIDDEN_SIZE), jnp.float32),
        "b_l2h": s * jax.random.normal(ks[3], (HIDDEN_SIZE,), jnp.float32),
        "w_l2c_t": s * jax.random.normal(ks[4], (LATENT_SIZE, HIDDEN_SIZE), jnp.float32),
        "b_l2c": s * jax.random.normal(ks[5], (HIDDEN_SIZE,), jnp.float32),
        # nn.LSTM(hidden_size, hidden_size + conditional_size): stored transposed
        # for x @ W; biases b_ih + b_hh pre-summed. Gate order [i, f, g, o].
        "w_ih_t": s * jax.random.normal(ks[6], (HIDDEN_SIZE, H4), jnp.float32),
        "w_hh_t": s * jax.random.normal(ks[7], (LSTM_HIDDEN, H4), jnp.float32),
        "b_gates": (s * jax.random.normal(ks[8], (1, H4), jnp.float32)
                    + s * jax.random.normal(ks[9], (1, H4), jnp.float32)),
        # nn.Linear(hidden_size + conditional_size, output_size)
        "w_out_t": s * jax.random.normal(ks[10], (LSTM_HIDDEN, OUTPUT_SIZE), jnp.float32),
        "b_out": s * jax.random.normal(ks[11], (1, OUTPUT_SIZE), jnp.float32),
    }


def reference_decode(params, tokens, h0, c0):
    """Pure-JAX f32 reference mirroring the PyTorch module step-by-step."""
    H = LSTM_HIDDEN

    def step(carry, tok):
        h, c = carry
        x = jax.nn.relu(params["embedding"][tok])                    # (B, E)
        gates = x @ params["w_ih_t"] + h @ params["w_hh_t"] + params["b_gates"]
        i = jax.nn.sigmoid(gates[:, 0 * H:1 * H])
        f = jax.nn.sigmoid(gates[:, 1 * H:2 * H])
        g = jnp.tanh(gates[:, 2 * H:3 * H])
        o = jax.nn.sigmoid(gates[:, 3 * H:4 * H])
        c = f * c + i * g
        h = o * jnp.tanh(c)
        logits = h @ params["w_out_t"] + params["b_out"]
        return (h, c), logits

    (h, c), logits = jax.lax.scan(step, (h0, c0), tokens)
    return logits, h, c


if __name__ == "__main__":
    key = jax.random.PRNGKey(0)
    pkey, lkey, tnkey, tokkey = jax.random.split(key, 4)
    params = make_params(pkey)
    packed = pack_params(params)

    # Batched teacher-forced decode: B sequences, T steps.
    B, T = 8, 8
    latent = jax.random.normal(lkey, (B, LATENT_SIZE), jnp.float32)
    tense = jax.random.randint(tnkey, (B,), 0, TENSE_SIZE)
    tokens = jax.random.randint(tokkey, (T, B), 0, OUTPUT_SIZE)

    h0 = init_hidden(params, latent, tense)          # (B, 40)
    c0 = init_cell(params, latent, tense)            # (B, 40)

    logits, h1, c1 = decode_sequence(packed, tokens, h0, c0)
    jax.block_until_ready((logits, h1, c1))

    assert logits.shape == (T, B, OUTPUT_SIZE)
    assert h1.shape == (B, LSTM_HIDDEN) and c1.shape == (B, LSTM_HIDDEN)

    # Numerical check against the pure-JAX f32 reference (bf16 weights in-kernel).
    ref_logits, ref_h, ref_c = reference_decode(params, tokens, h0, c0)
    assert jnp.allclose(logits, ref_logits, atol=2e-2, rtol=2e-2), "logits mismatch"
    assert jnp.allclose(h1, ref_h, atol=2e-2, rtol=2e-2), "hidden mismatch"
    assert jnp.allclose(c1, ref_c, atol=2e-2, rtol=2e-2), "cell mismatch"

    # Single-step API matching the original DecoderRNN.forward(input, hidden).
    h0_1 = init_hidden(params, latent[:1], tense[:1]).reshape(1, 1, LSTM_HIDDEN)
    c0_1 = init_cell(params, latent[:1], tense[:1]).reshape(1, 1, LSTM_HIDDEN)
    step_logits, (h1_1, c1_1) = decoder_forward(packed, jnp.int32(0), (h0_1, c0_1))
    jax.block_until_ready((step_logits, h1_1, c1_1))
    assert step_logits.shape == (1, OUTPUT_SIZE)
    assert h1_1.shape == (1, 1, LSTM_HIDDEN) and c1_1.shape == (1, 1, LSTM_HIDDEN)

    # Check the single-step path too.
    ref_sl, ref_sh, ref_sc = reference_decode(
        params, jnp.zeros((1, 1), jnp.int32),
        h0_1.reshape(1, LSTM_HIDDEN), c0_1.reshape(1, LSTM_HIDDEN))
    assert jnp.allclose(step_logits, ref_sl[0], atol=2e-2, rtol=2e-2), "step mismatch"

    print("KERNEL_OK")
</pallas_src>

<mosaic_0001>
module attributes {stable_mosaic.version = 11 : i64} {
  func.func @decoder_seq_kernel(%arg0: i32, %arg1: memref<8x8x128xbf16, #tpu.memory_space<vmem>>, %arg2: memref<128x512xbf16, #tpu.memory_space<vmem>>, %arg3: memref<128x512xbf16, #tpu.memory_space<vmem>>, %arg4: memref<1x512xf32, #tpu.memory_space<vmem>>, %arg5: memref<128x128xbf16, #tpu.memory_space<vmem>>, %arg6: memref<1x128xf32, #tpu.memory_space<vmem>>, %arg7: memref<8x128xf32, #tpu.memory_space<vmem>>, %arg8: memref<8x128xf32, #tpu.memory_space<vmem>>, %arg9: memref<8x8x128xf32, #tpu.memory_space<vmem>>, %arg10: memref<8x128xf32, #tpu.memory_space<vmem>>, %arg11: memref<8x128xf32, #tpu.memory_space<vmem>>, %arg12: memref<8x8x512xf32, #tpu.memory_space<vmem>>, %arg13: memref<8x8x128xf32, #tpu.memory_space<vmem>>) attributes {dimension_semantics = [#tpu.dimension_semantics<arbitrary>], iteration_bounds = array<i64: 1>, scalar_prefetch = 0 : i64, scratch_operands = 2 : i64, tpu.core_type = #tpu.core_type<tc>, window_params = [{pipeline_mode = #tpu.pipeline_mode<synchronous>, transform_indices = @transform_0, window_bounds = array<i64: 8, 8, 128>}, {pipeline_mode = #tpu.pipeline_mode<synchronous>, transform_indices = @transform_1, window_bounds = array<i64: 128, 512>}, {pipeline_mode = #tpu.pipeline_mode<synchronous>, transform_indices = @transform_2, window_bounds = array<i64: 128, 512>}, {pipeline_mode = #tpu.pipeline_mode<synchronous>, transform_indices = @transform_3, window_bounds = array<i64: 1, 512>}, {pipeline_mode = #tpu.pipeline_mode<synchronous>, transform_indices = @transform_4, window_bounds = array<i64: 128, 128>}, {pipeline_mode = #tpu.pipeline_mode<synchronous>, transform_indices = @transform_5, window_bounds = array<i64: 1, 128>}, {pipeline_mode = #tpu.pipeline_mode<synchronous>, transform_indices = @transform_6, window_bounds = array<i64: 8, 128>}, {pipeline_mode = #tpu.pipeline_mode<synchronous>, transform_indices = @transform_7, window_bounds = array<i64: 8, 128>}, {pipeline_mode = #tpu.pipeline_mode<synchronous>, transform_indices = @transform_8, window_bounds = array<i64: 8, 8, 128>}, {pipeline_mode = #tpu.pipeline_mode<synchronous>, transform_indices = @transform_9, window_bounds = array<i64: 8, 128>}, {pipeline_mode = #tpu.pipeline_mode<synchronous>, transform_indices = @transform_10, window_bounds = array<i64: 8, 128>}]} {
    %c0 = arith.constant 0 : index
    %c0_0 = arith.constant 0 : index
    %c0_1 = arith.constant 0 : index
    %0 = vector.load %arg1[%c0, %c0_0, %c0_1] : memref<8x8x128xbf16, #tpu.memory_space<vmem>>, vector<8x8x128xbf16>
    %1 = vector.shape_cast %0 : vector<8x8x128xbf16> to vector<64x128xbf16>
    %c0_2 = arith.constant 0 : index
    %c0_3 = arith.constant 0 : index
    %2 = vector.load %arg2[%c0_2, %c0_3] : memref<128x512xbf16, #tpu.memory_space<vmem>>, vector<128x512xbf16>
    %cst = arith.constant dense<0.000000e+00> : vector<64x512xf32>
    %3 = tpu.matmul %1, %2, %cst {dimension_numbers = #tpu.dot_dimension_numbers<[1], [0], [0], [1], [0, 0, 1, 1], [], []>} : vector<64x128xbf16>, vector<128x512xbf16>, vector<64x512xf32> -> vector<64x512xf32>
    %c0_4 = arith.constant 0 : index
    %c0_5 = arith.constant 0 : index
    %4 = vector.load %arg4[%c0_4, %c0_5] : memref<1x512xf32, #tpu.memory_space<vmem>>, vector<1x512xf32>
    %5 = vector.broadcast %4 : vector<1x512xf32> to vector<64x512xf32>
    %6 = arith.addf %3, %5 : vector<64x512xf32>
    %7 = vector.shape_cast %6 : vector<64x512xf32> to vector<8x8x512xf32>
    %c0_6 = arith.constant 0 : index
    %c0_7 = arith.constant 0 : index
    %c0_8 = arith.constant 0 : index
    %8 = vector.load %arg12[%c0_6, %c0_7, %c0_8] : memref<8x8x512xf32, #tpu.memory_space<vmem>>, vector<8x8x512xf32>
    tpu.vector_store %arg12[%c0_6, %c0_7, %c0_8], %7 {strides = array<i32>} : memref<8x8x512xf32, #tpu.memory_space<vmem>>, vector<8x8x512xf32>,
    %c0_9 = arith.constant 0 : index
    %c0_10 = arith.constant 0 : index
    %9 = vector.load %arg7[%c0_9, %c0_10] : memref<8x128xf32, #tpu.memory_space<vmem>>, vector<8x128xf32>
    %c0_11 = arith.constant 0 : index
    %c0_12 = arith.constant 0 : index
    %10 = vector.load %arg8[%c0_11, %c0_12] : memref<8x128xf32, #tpu.memory_space<vmem>>, vector<8x128xf32>
    %c0_i32 = arith.constant 0 : i32
    %11 = arith.index_cast %c0_i32 : i32 to index
    %c0_13 = arith.constant 0 : index
    %c0_14 = arith.constant 0 : index
    %12 = vector.load %arg12[%11, %c0_13, %c0_14] : memref<8x8x512xf32, #tpu.memory_space<vmem>>, vector<1x8x512xf32>
    %13 = vector.shape_cast %12 : vector<1x8x512xf32> to vector<8x512xf32>
    %14 = arith.truncf %9 : vector<8x128xf32> to vector<8x128xbf16>
    %c0_15 = arith.constant 0 : index
    %c0_16 = arith.constant 0 : index
    %15 = vector.load %arg3[%c0_15, %c0_16] : memref<128x512xbf16, #tpu.memory_space<vmem>>, vector<128x512xbf16>
    %cst_17 = arith.constant dense<0.000000e+00> : vector<8x512xf32>
    %16 = tpu.matmul %14, %15, %cst_17 {dimension_numbers = #tpu.dot_dimension_numbers<[1], [0], [0], [1], [0, 0, 1, 1], [], []>} : vector<8x128xbf16>, vector<128x512xbf16>, vector<8x512xf32> -> vector<8x512xf32>
    %17 = arith.addf %13, %16 : vector<8x512xf32>
    %18 = vector.extract_strided_slice %17 {offsets = [0, 0], sizes = [8, 128], strides = [1, 1]} : vector<8x512xf32> to vector<8x128xf32>
    %19 = arith.negf %18 : vector<8x128xf32>
    %20 = math.exp %19 : vector<8x128xf32>
    %cst_18 = arith.constant 1.000000e+00 : f32
    %21 = vector.broadcast %cst_18 : f32 to vector<8x128xf32>
    %22 = arith.addf %21, %20 : vector<8x128xf32>
    %23 = arith.divf %21, %22 : vector<8x128xf32>
    %24 = vector.extract_strided_slice %17 {offsets = [0, 128], sizes = [8, 128], strides = [1, 1]} : vector<8x512xf32> to vector<8x128xf32>
    %25 = arith.negf %24 : vector<8x128xf32>
    %26 = math.exp %25 : vector<8x128xf32>
    %cst_19 = arith.constant 1.000000e+00 : f32
    %27 = vector.broadcast %cst_19 : f32 to vector<8x128xf32>
    %28 = arith.addf %27, %26 : vector<8x128xf32>
    %29 = arith.divf %27, %28 : vector<8x128xf32>
    %30 = vector.extract_strided_slice %17 {offsets = [0, 256], sizes = [8, 128], strides = [1, 1]} : vector<8x512xf32> to vector<8x128xf32>
    %31 = math.tanh %30 : vector<8x128xf32>
    %32 = vector.extract_strided_slice %17 {offsets = [0, 384], sizes = [8, 128], strides = [1, 1]} : vector<8x512xf32> to vector<8x128xf32>
    %33 = arith.negf %32 : vector<8x128xf32>
    %34 = math.exp %33 : vector<8x128xf32>
    %cst_20 = arith.constant 1.000000e+00 : f32
    %35 = vector.broadcast %cst_20 : f32 to vector<8x128xf32>
    %36 = arith.addf %35, %34 : vector<8x128xf32>
    %37 = arith.divf %35, %36 : vector<8x128xf32>
    %38 = arith.mulf %29, %10 : vector<8x128xf32>
    %39 = arith.mulf %23, %31 : vector<8x128xf32>
    %40 = arith.addf %38, %39 : vector<8x128xf32>
    %41 = math.tanh %40 : vector<8x128xf32>
    %42 = arith.mulf %37, %41 : vector<8x128xf32>
    %43 = arith.index_cast %c0_i32 : i32 to index
    %c0_21 = arith.constant 0 : index
    %c0_22 = arith.constant 0 : index
    %44 = vector.load %arg13[%43, %c0_21, %c0_22] : memref<8x8x128xf32, #tpu.memory_space<vmem>>, vector<1x8x128xf32>
    %45 = vector.shape_cast %44 : vector<1x8x128xf32> to vector<8x128xf32>
    %46 = vector.shape_cast %42 : vector<8x128xf32> to vector<1x8x128xf32>
    tpu.vector_store %arg13[%43, %c0_21, %c0_22], %46 {strides = array<i32>} : memref<8x8x128xf32, #tpu.memory_space<vmem>>, vector<1x8x128xf32>,
    %c1_i32 = arith.constant 1 : i32
    %47 = arith.index_cast %c1_i32 : i32 to index
    %c0_23 = arith.constant 0 : index
    %c0_24 = arith.constant 0 : index
    %48 = vector.load %arg12[%47, %c0_23, %c0_24] : memref<8x8x512xf32, #tpu.memory_space<vmem>>, vector<1x8x512xf32>
    %49 = vector.shape_cast %48 : vector<1x8x512xf32> to vector<8x512xf32>
    %50 = arith.truncf %42 : vector<8x128xf32> to vector<8x128xbf16>
    %c0_25 = arith.constant 0 : index
    %c0_26 = arith.constant 0 : index
    %51 = vector.load %arg3[%c0_25, %c0_26] : memref<128x512xbf16, #tpu.memory_space<vmem>>, vector<128x512xbf16>
    %cst_27 = arith.constant dense<0.000000e+00> : vector<8x512xf32>
    %52 = tpu.matmul %50, %51, %cst_27 {dimension_numbers = #tpu.dot_dimension_numbers<[1], [0], [0], [1], [0, 0, 1, 1], [], []>} : vector<8x128xbf16>, vector<128x512xbf16>, vector<8x512xf32> -> vector<8x512xf32>
    %53 = arith.addf %49, %52 : vector<8x512xf32>
    %54 = vector.extract_strided_slice %53 {offsets = [0, 0], sizes = [8, 128], strides = [1, 1]} : vector<8x512xf32> to vector<8x128xf32>
    %55 = arith.negf %54 : vector<8x128xf32>
    %56 = math.exp %55 : vector<8x128xf32>
    %cst_28 = arith.constant 1.000000e+00 : f32
    %57 = vector.broadcast %cst_28 : f32 to vector<8x128xf32>
    %58 = arith.addf %57, %56 : vector<8x128xf32>
    %59 = arith.divf %57, %58 : vector<8x128xf32>
    %60 = vector.extract_strided_slice %53 {offsets = [0, 128], sizes = [8, 128], strides = [1, 1]} : vector<8x512xf32> to vector<8x128xf32>
    %61 = arith.negf %60 : vector<8x128xf32>
    %62 = math.exp %61 : vector<8x128xf32>
    %cst_29 = arith.constant 1.000000e+00 : f32
    %63 = vector.broadcast %cst_29 : f32 to vector<8x128xf32>
    %64 = arith.addf %63, %62 : vector<8x128xf32>
    %65 = arith.divf %63, %64 : vector<8x128xf32>
    %66 = vector.extract_strided_slice %53 {offsets = [0, 256], sizes = [8, 128], strides = [1, 1]} : vector<8x512xf32> to vector<8x128xf32>
    %67 = math.tanh %66 : vector<8x128xf32>
    %68 = vector.extract_strided_slice %53 {offsets = [0, 384], sizes = [8, 128], strides = [1, 1]} : vector<8x512xf32> to vector<8x128xf32>
    %69 = arith.negf %68 : vector<8x128xf32>
    %70 = math.exp %69 : vector<8x128xf32>
    %cst_30 = arith.constant 1.000000e+00 : f32
    %71 = vector.broadcast %cst_30 : f32 to vector<8x128xf32>
    %72 = arith.addf %71, %70 : vector<8x128xf32>
    %73 = arith.divf %71, %72 : vector<8x128xf32>
    %74 = arith.mulf %65, %40 : vector<8x128xf32>
    %75 = arith.mulf %59, %67 : vector<8x128xf32>
    %76 = arith.addf %74, %75 : vector<8x128xf32>
    %77 = math.tanh %76 : vector<8x128xf32>
    %78 = arith.mulf %73, %77 : vector<8x128xf32>
    %79 = arith.index_cast %c1_i32 : i32 to index
    %c0_31 = arith.constant 0 : index
    %c0_32 = arith.constant 0 : index
    %80 = vector.load %arg13[%79, %c0_31, %c0_32] : memref<8x8x128xf32, #tpu.memory_space<vmem>>, vector<1x8x128xf32>
    %81 = vector.shape_cast %80 : vector<1x8x128xf32> to vector<8x128xf32>
    %82 = vector.shape_cast %78 : vector<8x128xf32> to vector<1x8x128xf32>
    tpu.vector_store %arg13[%79, %c0_31, %c0_32], %82 {strides = array<i32>} : memref<8x8x128xf32, #tpu.memory_space<vmem>>, vector<1x8x128xf32>,
    %c2_i32 = arith.constant 2 : i32
    %83 = arith.index_cast %c2_i32 : i32 to index
    %c0_33 = arith.constant 0 : index
    %c0_34 = arith.constant 0 : index
    %84 = vector.load %arg12[%83, %c0_33, %c0_34] : memref<8x8x512xf32, #tpu.memory_space<vmem>>, vector<1x8x512xf32>
    %85 = vector.shape_cast %84 : vector<1x8x512xf32> to vector<8x512xf32>
    %86 = arith.truncf %78 : vector<8x128xf32> to vector<8x128xbf16>
    %c0_35 = arith.constant 0 : index
    %c0_36 = arith.constant 0 : index
    %87 = vector.load %arg3[%c0_35, %c0_36] : memref<128x512xbf16, #tpu.memory_space<vmem>>, vector<128x512xbf16>
    %cst_37 = arith.constant dense<0.000000e+00> : vector<8x512xf32>
    %88 = tpu.matmul %86, %87, %cst_37 {dimension_numbers = #tpu.dot_dimension_numbers<[1], [0], [0], [1], [0, 0, 1, 1], [], []>} : vector<8x128xbf16>, vector<128x512xbf16>, vector<8x512xf32> -> vector<8x512xf32>
    %89 = arith.addf %85, %88 : vector<8x512xf32>
    %90 = vector.extract_strided_slice %89 {offsets = [0, 0], sizes = [8, 128], strides = [1, 1]} : vector<8x512xf32> to vector<8x128xf32>
    %91 = arith.negf %90 : vector<8x128xf32>
    %92 = math.exp %91 : vector<8x128xf32>
    %cst_38 = arith.constant 1.000000e+00 : f32
    %93 = vector.broadcast %cst_38 : f32 to vector<8x128xf32>
    %94 = arith.addf %93, %92 : vector<8x128xf32>
    %95 = arith.divf %93, %94 : vector<8x128xf32>
    %96 = vector.extract_strided_slice %89 {offsets = [0, 128], sizes = [8, 128], strides = [1, 1]} : vector<8x512xf32> to vector<8x128xf32>
    %97 = arith.negf %96 : vector<8x128xf32>
    %98 = math.exp %97 : vector<8x128xf32>
    %cst_39 = arith.constant 1.000000e+00 : f32
    %99 = vector.broadcast %cst_39 : f32 to vector<8x128xf32>
    %100 = arith.addf %99, %98 : vector<8x128xf32>
    %101 = arith.divf %99, %100 : vector<8x128xf32>
    %102 = vector.extract_strided_slice %89 {offsets = [0, 256], sizes = [8, 128], strides = [1, 1]} : vector<8x512xf32> to vector<8x128xf32>
    %103 = math.tanh %102 : vector<8x128xf32>
    %104 = vector.extract_strided_slice %89 {offsets = [0, 384], sizes = [8, 128], strides = [1, 1]} : vector<8x512xf32> to vector<8x128xf32>
    %105 = arith.negf %104 : vector<8x128xf32>
    %106 = math.exp %105 : vector<8x128xf32>
    %cst_40 = arith.constant 1.000000e+00 : f32
    %107 = vector.broadcast %cst_40 : f32 to vector<8x128xf32>
    %108 = arith.addf %107, %106 : vector<8x128xf32>
    %109 = arith.divf %107, %108 : vector<8x128xf32>
    %110 = arith.mulf %101, %76 : vector<8x128xf32>
    %111 = arith.mulf %95, %103 : vector<8x128xf32>
    %112 = arith.addf %110, %111 : vector<8x128xf32>
    %113 = math.tanh %112 : vector<8x128xf32>
    %114 = arith.mulf %109, %113 : vector<8x128xf32>
    %115 = arith.index_cast %c2_i32 : i32 to index
    %c0_41 = arith.constant 0 : index
    %c0_42 = arith.constant 0 : index
    %116 = vector.load %arg13[%115, %c0_41, %c0_42] : memref<8x8x128xf32, #tpu.memory_space<vmem>>, vector<1x8x128xf32>
    %117 = vector.shape_cast %116 : vector<1x8x128xf32> to vector<8x128xf32>
    %118 = vector.shape_cast %114 : vector<8x128xf32> to vector<1x8x128xf32>
    tpu.vector_store %arg13[%115, %c0_41, %c0_42], %118 {strides = array<i32>} : memref<8x8x128xf32, #tpu.memory_space<vmem>>, vector<1x8x128xf32>,
    %c3_i32 = arith.constant 3 : i32
    %119 = arith.index_cast %c3_i32 : i32 to index
    %c0_43 = arith.constant 0 : index
    %c0_44 = arith.constant 0 : index
    %120 = vector.load %arg12[%119, %c0_43, %c0_44] : memref<8x8x512xf32, #tpu.memory_space<vmem>>, vector<1x8x512xf32>
    %121 = vector.shape_cast %120 : vector<1x8x512xf32> to vector<8x512xf32>
    %122 = arith.truncf %114 : vector<8x128xf32> to vector<8x128xbf16>
    %c0_45 = arith.constant 0 : index
    %c0_46 = arith.constant 0 : index
    %123 = vector.load %arg3[%c0_45, %c0_46] : memref<128x512xbf16, #tpu.memory_space<vmem>>, vector<128x512xbf16>
    %cst_47 = arith.constant dense<0.000000e+00> : vector<8x512xf32>
    %124 = tpu.matmul %122, %123, %cst_47 {dimension_numbers = #tpu.dot_dimension_numbers<[1], [0], [0], [1], [0, 0, 1, 1], [], []>} : vector<8x128xbf16>, vector<128x512xbf16>, vector<8x512xf32> -> vector<8x512xf32>
    %125 = arith.addf %121, %124 : vector<8x512xf32>
    %126 = vector.extract_strided_slice %125 {offsets = [0, 0], sizes = [8, 128], strides = [1, 1]} : vector<8x512xf32> to vector<8x128xf32>
    %127 = arith.negf %126 : vector<8x128xf32>
    %128 = math.exp %127 : vector<8x128xf32>
    %cst_48 = arith.constant 1.000000e+00 : f32
    %129 = vector.broadcast %cst_48 : f32 to vector<8x128xf32>
    %130 = arith.addf %129, %128 : vector<8x128xf32>
    %131 = arith.divf %129, %130 : vector<8x128xf32>
    %132 = vector.extract_strided_slice %125 {offsets = [0, 128], sizes = [8, 128], strides = [1, 1]} : vector<8x512xf32> to vector<8x128xf32>
    %133 = arith.negf %132 : vector<8x128xf32>
    %134 = math.exp %133 : vector<8x128xf32>
    %cst_49 = arith.constant 1.000000e+00 : f32
    %135 = vector.broadcast %cst_49 : f32 to vector<8x128xf32>
    %136 = arith.addf %135, %134 : vector<8x128xf32>
    %137 = arith.divf %135, %136 : vector<8x128xf32>
    %138 = vector.extract_strided_slice %125 {offsets = [0, 256], sizes = [8, 128], strides = [1, 1]} : vector<8x512xf32> to vector<8x128xf32>
    %139 = math.tanh %138 : vector<8x128xf32>
    %140 = vector.extract_strided_slice %125 {offsets = [0, 384], sizes = [8, 128], strides = [1, 1]} : vector<8x512xf32> to vector<8x128xf32>
    %141 = arith.negf %140 : vector<8x128xf32>
    %142 = math.exp %141 : vector<8x128xf32>
    %cst_50 = arith.constant 1.000000e+00 : f32
    %143 = vector.broadcast %cst_50 : f32 to vector<8x128xf32>
    %144 = arith.addf %143, %142 : vector<8x128xf32>
    %145 = arith.divf %143, %144 : vector<8x128xf32>
    %146 = arith.mulf %137, %112 : vector<8x128xf32>
    %147 = arith.mulf %131, %139 : vector<8x128xf32>
    %148 = arith.addf %146, %147 : vector<8x128xf32>
    %149 = math.tanh %148 : vector<8x128xf32>
    %150 = arith.mulf %145, %149 : vector<8x128xf32>
    %151 = arith.index_cast %c3_i32 : i32 to index
    %c0_51 = arith.constant 0 : index
    %c0_52 = arith.constant 0 : index
    %152 = vector.load %arg13[%151, %c0_51, %c0_52] : memref<8x8x128xf32, #tpu.memory_space<vmem>>, vector<1x8x128xf32>
    %153 = vector.shape_cast %152 : vector<1x8x128xf32> to vector<8x128xf32>
    %154 = vector.shape_cast %150 : vector<8x128xf32> to vector<1x8x128xf32>
    tpu.vector_store %arg13[%151, %c0_51, %c0_52], %154 {strides = array<i32>} : memref<8x8x128xf32, #tpu.memory_space<vmem>>, vector<1x8x128xf32>,
    %c4_i32 = arith.constant 4 : i32
    %155 = arith.index_cast %c4_i32 : i32 to index
    %c0_53 = arith.constant 0 : index
    %c0_54 = arith.constant 0 : index
    %156 = vector.load %arg12[%155, %c0_53, %c0_54] : memref<8x8x512xf32, #tpu.memory_space<vmem>>, vector<1x8x512xf32>
    %157 = vector.shape_cast %156 : vector<1x8x512xf32> to vector<8x512xf32>
    %158 = arith.truncf %150 : vector<8x128xf32> to vector<8x128xbf16>
    %c0_55 = arith.constant 0 : index
    %c0_56 = arith.constant 0 : index
    %159 = vector.load %arg3[%c0_55, %c0_56] : memref<128x512xbf16, #tpu.memory_space<vmem>>, vector<128x512xbf16>
    %cst_57 = arith.constant dense<0.000000e+00> : vector<8x512xf32>
    %160 = tpu.matmul %158, %159, %cst_57 {dimension_numbers = #tpu.dot_dimension_numbers<[1], [0], [0], [1], [0, 0, 1, 1], [], []>} : vector<8x128xbf16>, vector<128x512xbf16>, vector<8x512xf32> -> vector<8x512xf32>
    %161 = arith.addf %157, %160 : vector<8x512xf32>
    %162 = vector.extract_strided_slice %161 {offsets = [0, 0], sizes = [8, 128], strides = [1, 1]} : vector<8x512xf32> to vector<8x128xf32>
    %163 = arith.negf %162 : vector<8x128xf32>
    %164 = math.exp %163 : vector<8x128xf32>
    %cst_58 = arith.constant 1.000000e+00 : f32
    %165 = vector.broadcast %cst_58 : f32 to vector<8x128xf32>
    %166 = arith.addf %165, %164 : vector<8x128xf32>
    %167 = arith.divf %165, %166 : vector<8x128xf32>
    %168 = vector.extract_strided_slice %161 {offsets = [0, 128], sizes = [8, 128], strides = [1, 1]} : vector<8x512xf32> to vector<8x128xf32>
    %169 = arith.negf %168 : vector<8x128xf32>
    %170 = math.exp %169 : vector<8x128xf32>
    %cst_59 = arith.constant 1.000000e+00 : f32
    %171 = vector.broadcast %cst_59 : f32 to vector<8x128xf32>
    %172 = arith.addf %171, %170 : vector<8x128xf32>
    %173 = arith.divf %171, %172 : vector<8x128xf32>
    %174 = vector.extract_strided_slice %161 {offsets = [0, 256], sizes = [8, 128], strides = [1, 1]} : vector<8x512xf32> to vector<8x128xf32>
    %175 = math.tanh %174 : vector<8x128xf32>
    %176 = vector.extract_strided_slice %161 {offsets = [0, 384], sizes = [8, 128], strides = [1, 1]} : vector<8x512xf32> to vector<8x128xf32>
    %177 = arith.negf %176 : vector<8x128xf32>
    %178 = math.exp %177 : vector<8x128xf32>
    %cst_60 = arith.constant 1.000000e+00 : f32
    %179 = vector.broadcast %cst_60 : f32 to vector<8x128xf32>
    %180 = arith.addf %179, %178 : vector<8x128xf32>
    %181 = arith.divf %179, %180 : vector<8x128xf32>
    %182 = arith.mulf %173, %148 : vector<8x128xf32>
    %183 = arith.mulf %167, %175 : vector<8x128xf32>
    %184 = arith.addf %182, %183 : vector<8x128xf32>
    %185 = math.tanh %184 : vector<8x128xf32>
    %186 = arith.mulf %181, %185 : vector<8x128xf32>
    %187 = arith.index_cast %c4_i32 : i32 to index
    %c0_61 = arith.constant 0 : index
    %c0_62 = arith.constant 0 : index
    %188 = vector.load %arg13[%187, %c0_61, %c0_62] : memref<8x8x128xf32, #tpu.memory_space<vmem>>, vector<1x8x128xf32>
    %189 = vector.shape_cast %188 : vector<1x8x128xf32> to vector<8x128xf32>
    %190 = vector.shape_cast %186 : vector<8x128xf32> to vector<1x8x128xf32>
    tpu.vector_store %arg13[%187, %c0_61, %c0_62], %190 {strides = array<i32>} : memref<8x8x128xf32, #tpu.memory_space<vmem>>, vector<1x8x128xf32>,
    %c5_i32 = arith.constant 5 : i32
    %191 = arith.index_cast %c5_i32 : i32 to index
    %c0_63 = arith.constant 0 : index
    %c0_64 = arith.constant 0 : index
    %192 = vector.load %arg12[%191, %c0_63, %c0_64] : memref<8x8x512xf32, #tpu.memory_space<vmem>>, vector<1x8x512xf32>
    %193 = vector.shape_cast %192 : vector<1x8x512xf32> to vector<8x512xf32>
    %194 = arith.truncf %186 : vector<8x128xf32> to vector<8x128xbf16>
    %c0_65 = arith.constant 0 : index
    %c0_66 = arith.constant 0 : index
    %195 = vector.load %arg3[%c0_65, %c0_66] : memref<128x512xbf16, #tpu.memory_space<vmem>>, vector<128x512xbf16>
    %cst_67 = arith.constant dense<0.000000e+00> : vector<8x512xf32>
    %196 = tpu.matmul %194, %195, %cst_67 {dimension_numbers = #tpu.dot_dimension_numbers<[1], [0], [0], [1], [0, 0, 1, 1], [], []>} : vector<8x128xbf16>, vector<128x512xbf16>, vector<8x512xf32> -> vector<8x512xf32>
    %197 = arith.addf %193, %196 : vector<8x512xf32>
    %198 = vector.extract_strided_slice %197 {offsets = [0, 0], sizes = [8, 128], strides = [1, 1]} : vector<8x512xf32> to vector<8x128xf32>
    %199 = arith.negf %198 : vector<8x128xf32>
    %200 = math.exp %199 : vector<8x128xf32>
    %cst_68 = arith.constant 1.000000e+00 : f32
    %201 = vector.broadcast %cst_68 : f32 to vector<8x128xf32>
    %202 = arith.addf %201, %200 : vector<8x128xf32>
    %203 = arith.divf %201, %202 : vector<8x128xf32>
    %204 = vector.extract_strided_slice %197 {offsets = [0, 128], sizes = [8, 128], strides = [1, 1]} : vector<8x512xf32> to vector<8x128xf32>
    %205 = arith.negf %204 : vector<8x128xf32>
    %206 = math.exp %205 : vector<8x128xf32>
    %cst_69 = arith.constant 1.000000e+00 : f32
    %207 = vector.broadcast %cst_69 : f32 to vector<8x128xf32>
    %208 = arith.addf %207, %206 : vector<8x128xf32>
    %209 = arith.divf %207, %208 : vector<8x128xf32>
    %210 = vector.extract_strided_slice %197 {offsets = [0, 256], sizes = [8, 128], strides = [1, 1]} : vector<8x512xf32> to vector<8x128xf32>
    %211 = math.tanh %210 : vector<8x128xf32>
    %212 = vector.extract_strided_slice %197 {offsets = [0, 384], sizes = [8, 128], strides = [1, 1]} : vector<8x512xf32> to vector<8x128xf32>
    %213 = arith.negf %212 : vector<8x128xf32>
    %214 = math.exp %213 : vector<8x128xf32>
    %cst_70 = arith.constant 1.000000e+00 : f32
    %215 = vector.broadcast %cst_70 : f32 to vector<8x128xf32>
    %216 = arith.addf %215, %214 : vector<8x128xf32>
    %217 = arith.divf %215, %216 : vector<8x128xf32>
    %218 = arith.mulf %209, %184 : vector<8x128xf32>
    %219 = arith.mulf %203, %211 : vector<8x128xf32>
    %220 = arith.addf %218, %219 : vector<8x128xf32>
    %221 = math.tanh %220 : vector<8x128xf32>
    %222 = arith.mulf %217, %221 : vector<8x128xf32>
    %223 = arith.index_cast %c5_i32 : i32 to index
    %c0_71 = arith.constant 0 : index
    %c0_72 = arith.constant 0 : index
    %224 = vector.load %arg13[%223, %c0_71, %c0_72] : memref<8x8x128xf32, #tpu.memory_space<vmem>>, vector<1x8x128xf32>
    %225 = vector.shape_cast %224 : vector<1x8x128xf32> to vector<8x128xf32>
    %226 = vector.shape_cast %222 : vector<8x128xf32> to vector<1x8x128xf32>
    tpu.vector_store %arg13[%223, %c0_71, %c0_72], %226 {strides = array<i32>} : memref<8x8x128xf32, #tpu.memory_space<vmem>>, vector<1x8x128xf32>,
    %c6_i32 = arith.constant 6 : i32
    %227 = arith.index_cast %c6_i32 : i32 to index
    %c0_73 = arith.constant 0 : index
    %c0_74 = arith.constant 0 : index
    %228 = vector.load %arg12[%227, %c0_73, %c0_74] : memref<8x8x512xf32, #tpu.memory_space<vmem>>, vector<1x8x512xf32>
    %229 = vector.shape_cast %228 : vector<1x8x512xf32> to vector<8x512xf32>
    %230 = arith.truncf %222 : vector<8x128xf32> to vector<8x128xbf16>
    %c0_75 = arith.constant 0 : index
    %c0_76 = arith.constant 0 : index
    %231 = vector.load %arg3[%c0_75, %c0_76] : memref<128x512xbf16, #tpu.memory_space<vmem>>, vector<128x512xbf16>
    %cst_77 = arith.constant dense<0.000000e+00> : vector<8x512xf32>
    %232 = tpu.matmul %230, %231, %cst_77 {dimension_numbers = #tpu.dot_dimension_numbers<[1], [0], [0], [1], [0, 0, 1, 1], [], []>} : vector<8x128xbf16>, vector<128x512xbf16>, vector<8x512xf32> -> vector<8x512xf32>
    %233 = arith.addf %229, %232 : vector<8x512xf32>
    %234 = vector.extract_strided_slice %233 {offsets = [0, 0], sizes = [8, 128], strides = [1, 1]} : vector<8x512xf32> to vector<8x128xf32>
    %235 = arith.negf %234 : vector<8x128xf32>
    %236 = math.exp %235 : vector<8x128xf32>
    %cst_78 = arith.constant 1.000000e+00 : f32
    %237 = vector.broadcast %cst_78 : f32 to vector<8x128xf32>
    %238 = arith.addf %237, %236 : vector<8x128xf32>
    %239 = arith.divf %237, %238 : vector<8x128xf32>
    %240 = vector.extract_strided_slice %233 {offsets = [0, 128], sizes = [8, 128], strides = [1, 1]} : vector<8x512xf32> to vector<8x128xf32>
    %241 = arith.negf %240 : vector<8x128xf32>
    %242 = math.exp %241 : vector<8x128xf32>
    %cst_79 = arith.constant 1.000000e+00 : f32
    %243 = vector.broadcast %cst_79 : f32 to vector<8x128xf32>
    %244 = arith.addf %243, %242 : vector<8x128xf32>
    %245 = arith.divf %243, %244 : vector<8x128xf32>
    %246 = vector.extract_strided_slice %233 {offsets = [0, 256], sizes = [8, 128], strides = [1, 1]} : vector<8x512xf32> to vector<8x128xf32>
    %247 = math.tanh %246 : vector<8x128xf32>
    %248 = vector.extract_strided_slice %233 {offsets = [0, 384], sizes = [8, 128], strides = [1, 1]} : vector<8x512xf32> to vector<8x128xf32>
    %249 = arith.negf %248 : vector<8x128xf32>
    %250 = math.exp %249 : vector<8x128xf32>
    %cst_80 = arith.constant 1.000000e+00 : f32
    %251 = vector.broadcast %cst_80 : f32 to vector<8x128xf32>
    %252 = arith.addf %251, %250 : vector<8x128xf32>
    %253 = arith.divf %251, %252 : vector<8x128xf32>
    %254 = arith.mulf %245, %220 : vector<8x128xf32>
    %255 = arith.mulf %239, %247 : vector<8x128xf32>
    %256 = arith.addf %254, %255 : vector<8x128xf32>
    %257 = math.tanh %256 : vector<8x128xf32>
    %258 = arith.mulf %253, %257 : vector<8x128xf32>
    %259 = arith.index_cast %c6_i32 : i32 to index
    %c0_81 = arith.constant 0 : index
    %c0_82 = arith.constant 0 : index
    %260 = vector.load %arg13[%259, %c0_81, %c0_82] : memref<8x8x128xf32, #tpu.memory_space<vmem>>, vector<1x8x128xf32>
    %261 = vector.shape_cast %260 : vector<1x8x128xf32> to vector<8x128xf32>
    %262 = vector.shape_cast %258 : vector<8x128xf32> to vector<1x8x128xf32>
    tpu.vector_store %arg13[%259, %c0_81, %c0_82], %262 {strides = array<i32>} : memref<8x8x128xf32, #tpu.memory_space<vmem>>, vector<1x8x128xf32>,
    %c7_i32 = arith.constant 7 : i32
    %263 = arith.index_cast %c7_i32 : i32 to index
    %c0_83 = arith.constant 0 : index
    %c0_84 = arith.constant 0 : index
    %264 = vector.load %arg12[%263, %c0_83, %c0_84] : memref<8x8x512xf32, #tpu.memory_space<vmem>>, vector<1x8x512xf32>
    %265 = vector.shape_cast %264 : vector<1x8x512xf32> to vector<8x512xf32>
    %266 = arith.truncf %258 : vector<8x128xf32> to vector<8x128xbf16>
    %c0_85 = arith.constant 0 : index
    %c0_86 = arith.constant 0 : index
    %267 = vector.load %arg3[%c0_85, %c0_86] : memref<128x512xbf16, #tpu.memory_space<vmem>>, vector<128x512xbf16>
    %cst_87 = arith.constant dense<0.000000e+00> : vector<8x512xf32>
    %268 = tpu.matmul %266, %267, %cst_87 {dimension_numbers = #tpu.dot_dimension_numbers<[1], [0], [0], [1], [0, 0, 1, 1], [], []>} : vector<8x128xbf16>, vector<128x512xbf16>, vector<8x512xf32> -> vector<8x512xf32>
    %269 = arith.addf %265, %268 : vector<8x512xf32>
    %270 = vector.extract_strided_slice %269 {offsets = [0, 0], sizes = [8, 128], strides = [1, 1]} : vector<8x512xf32> to vector<8x128xf32>
    %271 = arith.negf %270 : vector<8x128xf32>
    %272 = math.exp %271 : vector<8x128xf32>
    %cst_88 = arith.constant 1.000000e+00 : f32
    %273 = vector.broadcast %cst_88 : f32 to vector<8x128xf32>
    %274 = arith.addf %273, %272 : vector<8x128xf32>
    %275 = arith.divf %273, %274 : vector<8x128xf32>
    %276 = vector.extract_strided_slice %269 {offsets = [0, 128], sizes = [8, 128], strides = [1, 1]} : vector<8x512xf32> to vector<8x128xf32>
    %277 = arith.negf %276 : vector<8x128xf32>
    %278 = math.exp %277 : vector<8x128xf32>
    %cst_89 = arith.constant 1.000000e+00 : f32
    %279 = vector.broadcast %cst_89 : f32 to vector<8x128xf32>
    %280 = arith.addf %279, %278 : vector<8x128xf32>
    %281 = arith.divf %279, %280 : vector<8x128xf32>
    %282 = vector.extract_strided_slice %269 {offsets = [0, 256], sizes = [8, 128], strides = [1, 1]} : vector<8x512xf32> to vector<8x128xf32>
    %283 = math.tanh %282 : vector<8x128xf32>
    %284 = vector.extract_strided_slice %269 {offsets = [0, 384], sizes = [8, 128], strides = [1, 1]} : vector<8x512xf32> to vector<8x128xf32>
    %285 = arith.negf %284 : vector<8x128xf32>
    %286 = math.exp %285 : vector<8x128xf32>
    %cst_90 = arith.constant 1.000000e+00 : f32
    %287 = vector.broadcast %cst_90 : f32 to vector<8x128xf32>
    %288 = arith.addf %287, %286 : vector<8x128xf32>
    %289 = arith.divf %287, %288 : vector<8x128xf32>
    %290 = arith.mulf %281, %256 : vector<8x128xf32>
    %291 = arith.mulf %275, %283 : vector<8x128xf32>
    %292 = arith.addf %290, %291 : vector<8x128xf32>
    %293 = math.tanh %292 : vector<8x128xf32>
    %294 = arith.mulf %289, %293 : vector<8x128xf32>
    %295 = arith.index_cast %c7_i32 : i32 to index
    %c0_91 = arith.constant 0 : index
    %c0_92 = arith.constant 0 : index
    %296 = vector.load %arg13[%295, %c0_91, %c0_92] : memref<8x8x128xf32, #tpu.memory_space<vmem>>, vector<1x8x128xf32>
    %297 = vector.shape_cast %296 : vector<1x8x128xf32> to vector<8x128xf32>
    %298 = vector.shape_cast %294 : vector<8x128xf32> to vector<1x8x128xf32>
    tpu.vector_store %arg13[%295, %c0_91, %c0_92], %298 {strides = array<i32>} : memref<8x8x128xf32, #tpu.memory_space<vmem>>, vector<1x8x128xf32>,
    %c8_i32 = arith.constant 8 : i32
    %c0_93 = arith.constant 0 : index
    %c0_94 = arith.constant 0 : index
    %299 = vector.load %arg10[%c0_93, %c0_94] : memref<8x128xf32, #tpu.memory_space<vmem>>, vector<8x128xf32>
    tpu.vector_store %arg10[%c0_93, %c0_94], %294 {strides = array<i32>} : memref<8x128xf32, #tpu.memory_space<vmem>>, vector<8x128xf32>,
    %c0_95 = arith.constant 0 : index
    %c0_96 = arith.constant 0 : index
    %300 = vector.load %arg11[%c0_95, %c0_96] : memref<8x128xf32, #tpu.memory_space<vmem>>, vector<8x128xf32>
    tpu.vector_store %arg11[%c0_95, %c0_96], %292 {strides = array<i32>} : memref<8x128xf32, #tpu.memory_space<vmem>>, vector<8x128xf32>,
    %c0_97 = arith.constant 0 : index
    %c0_98 = arith.constant 0 : index
    %c0_99 = arith.constant 0 : index
    %301 = vector.load %arg13[%c0_97, %c0_98, %c0_99] : memref<8x8x128xf32, #tpu.memory_space<vmem>>, vector<8x8x128xf32>
    %302 = vector.shape_cast %301 : vector<8x8x128xf32> to vector<64x128xf32>
    %303 = arith.truncf %302 : vector<64x128xf32> to vector<64x128xbf16>
    %c0_100 = arith.constant 0 : index
    %c0_101 = arith.constant 0 : index
    %304 = vector.load %arg5[%c0_100, %c0_101] : memref<128x128xbf16, #tpu.memory_space<vmem>>, vector<128x128xbf16>
    %cst_102 = arith.constant dense<0.000000e+00> : vector<64x128xf32>
    %305 = tpu.matmul %303, %304, %cst_102 {dimension_numbers = #tpu.dot_dimension_numbers<[1], [0], [0], [1], [0, 0, 1, 1], [], []>} : vector<64x128xbf16>, vector<128x128xbf16>, vector<64x128xf32> -> vector<64x128xf32>
    %c0_103 = arith.constant 0 : index
    %c0_104 = arith.constant 0 : index
    %306 = vector.load %arg6[%c0_103, %c0_104] : memref<1x128xf32, #tpu.memory_space<vmem>>, vector<1x128xf32>
    %307 = vector.broadcast %306 : vector<1x128xf32> to vector<64x128xf32>
    %308 = arith.addf %305, %307 : vector<64x128xf32>
    %309 = vector.shape_cast %308 : vector<64x128xf32> to vector<8x8x128xf32>
    %c0_105 = arith.constant 0 : index
    %c0_106 = arith.constant 0 : index
    %c0_107 = arith.constant 0 : index
    %310 = vector.load %arg9[%c0_105, %c0_106, %c0_107] : memref<8x8x128xf32, #tpu.memory_space<vmem>>, vector<8x8x128xf32>
    tpu.vector_store %arg9[%c0_105, %c0_106, %c0_107], %309 {strides = array<i32>} : memref<8x8x128xf32, #tpu.memory_space<vmem>>, vector<8x8x128xf32>,
    return
  }
  func.func @transform_0(%arg0: i32) -> (i32, i32, i32) {
    %c0_i32 = arith.constant 0 : i32
    %c0_i32_0 = arith.constant 0 : i32
    %c0_i32_1 = arith.constant 0 : i32
    %c0_i32_2 = arith.constant 0 : i32
    return %c0_i32, %c0_i32_0, %c0_i32_1 : i32, i32, i32
  }
  func.func @transform_1(%arg0: i32) -> (i32, i32) {
    %c0_i32 = arith.constant 0 : i32
    %c0_i32_0 = arith.constant 0 : i32
    %c0_i32_1 = arith.constant 0 : i32
    return %c0_i32, %c0_i32_0 : i32, i32
  }
  func.func @transform_2(%arg0: i32) -> (i32, i32) {
    %c0_i32 = arith.constant 0 : i32
    %c0_i32_0 = arith.constant 0 : i32
    %c0_i32_1 = arith.constant 0 : i32
    return %c0_i32, %c0_i32_0 : i32, i32
  }
  func.func @transform_3(%arg0: i32) -> (i32, i32) {
    %c0_i32 = arith.constant 0 : i32
    %c0_i32_0 = arith.constant 0 : i32
    %c0_i32_1 = arith.constant 0 : i32
    return %c0_i32, %c0_i32_0 : i32, i32
  }
  func.func @transform_4(%arg0: i32) -> (i32, i32) {
    %c0_i32 = arith.constant 0 : i32
    %c0_i32_0 = arith.constant 0 : i32
    %c0_i32_1 = arith.constant 0 : i32
    return %c0_i32, %c0_i32_0 : i32, i32
  }
  func.func @transform_5(%arg0: i32) -> (i32, i32) {
    %c0_i32 = arith.constant 0 : i32
    %c0_i32_0 = arith.constant 0 : i32
    %c0_i32_1 = arith.constant 0 : i32
    return %c0_i32, %c0_i32_0 : i32, i32
  }
  func.func @transform_6(%arg0: i32) -> (i32, i32) {
    %c0_i32 = arith.constant 0 : i32
    %c0_i32_0 = arith.constant 0 : i32
    %c0_i32_1 = arith.constant 0 : i32
    return %c0_i32, %c0_i32_0 : i32, i32
  }
  func.func @transform_7(%arg0: i32) -> (i32, i32) {
    %c0_i32 = arith.constant 0 : i32
    %c0_i32_0 = arith.constant 0 : i32
    %c0_i32_1 = arith.constant 0 : i32
    return %c0_i32, %c0_i32_0 : i32, i32
  }
  func.func @transform_8(%arg0: i32) -> (i32, i32, i32) {
    %c0_i32 = arith.constant 0 : i32
    %c0_i32_0 = arith.constant 0 : i32
    %c0_i32_1 = arith.constant 0 : i32
    %c0_i32_2 = arith.constant 0 : i32
    return %c0_i32, %c0_i32_0, %c0_i32_1 : i32, i32, i32
  }
  func.func @transform_9(%arg0: i32) -> (i32, i32) {
    %c0_i32 = arith.constant 0 : i32
    %c0_i32_0 = arith.constant 0 : i32
    %c0_i32_1 = arith.constant 0 : i32
    return %c0_i32, %c0_i32_0 : i32, i32
  }
  func.func @transform_10(%arg0: i32) -> (i32, i32) {
    %c0_i32 = arith.constant 0 : i32
    %c0_i32_0 = arith.constant 0 : i32
    %c0_i32_1 = arith.constant 0 : i32
    return %c0_i32, %c0_i32_0 : i32, i32
  }
}

</mosaic_0001>

<llo_original>
// kernel: decode_sequence.1
$region0: #{decode_sequence.1}
  #allocation0 [shape = 'u32[]', space=smem, size = 0x4, offset = 0x4, fixed_abs, tag = 'smem constant byte address 0x4 - core index']
  #allocation1 [shape = 'u32[144,128]{1,0:T(1,128)}', space=vmem, size = 0x12000, scoped, tag = 'internal scratch']
  #allocation2 [shape = 'f32[8,8,512]{2,1,0:T(8,128)}', space=vmem, size = 0x20000, scoped, tag = 'scratch operand']
  #allocation3 [shape = 'f32[8,8,128]{2,1,0:T(8,128)}', space=vmem, size = 0x8000, scoped, tag = 'scratch operand']
  %s0 = inlined_call_operand.vmem [shape: bf16[8,8,128], index: 0, kind: input, shape index: {}]
  %s1 = inlined_call_operand.vmem [shape: bf16[128,512], index: 1, kind: input, shape index: {}]
  %s2 = inlined_call_operand.hbm [shape: bf16[128,512], index: 2, kind: input, shape index: {}]
  %s3 = inlined_call_operand.vmem [shape: f32[1,512], index: 3, kind: input, shape index: {}]
  %s4 = inlined_call_operand.vmem [shape: bf16[128,128], index: 4, kind: input, shape index: {}]
  %s5 = inlined_call_operand.vmem [shape: f32[1,128], index: 5, kind: input, shape index: {}]
  %s6 = inlined_call_operand.vmem [shape: f32[8,128], index: 6, kind: input, shape index: {}]
  %s7 = inlined_call_operand.vmem [shape: f32[8,128], index: 7, kind: input, shape index: {}]
  %s8 = inlined_call_operand.hbm [shape: f32[8,8,128], index: 8, kind: output, shape index: {0}]
  %s9 = inlined_call_operand.hbm [shape: f32[8,128], index: 9, kind: output, shape index: {1}]
  %s10 = inlined_call_operand.hbm [shape: f32[8,128], index: 10, kind: output, shape index: {2}]
  %11 = xla_tuple %s8, %s9, %s10
  %s12 = sld [smem:[#allocation0]]
  $region62: #{decode_sequence.1} parent=0
    _
  %s14 = ssub.s32 1, %s12
  %s15 = scalar_select 0, %s14, %s12
  $region1: #{decode_sequence.1} parent=0
    #allocation4 [shape = 'u8[131072]{0}', space=vmem, size = 0x20000, scoped, tag = 'input window, operand 2, single buffered']
    #allocation5 [shape = 's32[1]{0}', space=sflag, size = 0x4, scoped, tag = 'scoped memory for decode_sequence.1']
    #allocation6 [shape = 's32[1]{0}', space=sflag, size = 0x4, scoped, tag = 'scoped memory for decode_sequence.1']
    #allocation7 [shape = 'u8[32768]{0}', space=vmem, size = 0x8000, scoped, tag = 'output window, operand 0, single buffered']
    #allocation8 [shape = 'u8[4096]{0}', space=vmem, size = 0x1000, scoped, tag = 'output window, operand 1, single buffered']
    #allocation9 [shape = 's32[1]{0}', space=sflag, size = 0x4, scoped, tag = 'scoped memory for decode_sequence.1']
    #allocation10 [shape = 'u8[4096]{0}', space=vmem, size = 0x1000, scoped, tag = 'output window, operand 2, single buffered']
    %16 = vsyncpa [#allocation5], 0
    %17 = vsyncpa [#allocation6], 0
    %18 = vsyncpa [#allocation9], 0
    // Predicated region
    $region2: #{decode_sequence.1} parent=1 // pred_check
      _
    $region3: #{decode_sequence.1} parent=1 // pred_check_branch
      %20 = sbr.rel (0) target = $region5
    $region4: #{decode_sequence.1} parent=1 // pred_region
      _
    $region5: #{decode_sequence.1} parent=1 // pred_fallthru
      _
    // Predicated region
    $region6: #{decode_sequence.1} parent=1 // pred_check
      _
    $region7: #{decode_sequence.1} parent=1 // pred_check_branch
      %22 = sbr.rel (0) target = $region9
    $region8: #{decode_sequence.1} parent=1 // pred_region
      _
    $region9: #{decode_sequence.1} parent=1 // pred_fallthru
      _
    // Predicated region
    $region10: #{decode_sequence.1} parent=1 // pred_check
      _
    $region11: #{decode_sequence.1} parent=1 // pred_check_branch
      %24 = sbr.rel (0) target = $region13
    $region12: #{decode_sequence.1} parent=1 // pred_region
      %s26 = ssub.s32 4096, 4096
      %27 = vsyncadd [#allocation5], %s26
      %s28 = sshll.u32 [#allocation4], 4
      %s29 = int_to_ptr.vmem [resolvable:$true] %s28
      %34 = dma.hbm_to_vmem [thread:$0]  %s2, 4096, %s29, [#allocation5], 256, 256, 16
    $region13: #{decode_sequence.1} parent=1 // pred_fallthru
      _
    // Predicated region
    $region14: #{decode_sequence.1} parent=1 // pred_check
      _
    $region15: #{decode_sequence.1} parent=1 // pred_check_branch
      %36 = sbr.rel (0) target = $region17
    $region16: #{decode_sequence.1} parent=1 // pred_region
      _
    $region17: #{decode_sequence.1} parent=1 // pred_fallthru
      _
    // Predicated region
    $region18: #{decode_sequence.1} parent=1 // pred_check
      _
    $region19: #{decode_sequence.1} parent=1 // pred_check_branch
      %38 = sbr.rel (0) target = $region21
    $region20: #{decode_sequence.1} parent=1 // pred_region
      _
    $region21: #{decode_sequence.1} parent=1 // pred_fallthru
      _
    // Predicated region
    $region22: #{decode_sequence.1} parent=1 // pred_check
      _
    $region23: #{decode_sequence.1} parent=1 // pred_check_branch
      %40 = sbr.rel (0) target = $region25
    $region24: #{decode_sequence.1} parent=1 // pred_region
      _
    $region25: #{decode_sequence.1} parent=1 // pred_fallthru
      _
    // Predicated region
    $region26: #{decode_sequence.1} parent=1 // pred_check
      _
    $region27: #{decode_sequence.1} parent=1 // pred_check_branch
      %42 = sbr.rel (0) target = $region29
    $region28: #{decode_sequence.1} parent=1 // pred_region
      _
    $region29: #{decode_sequence.1} parent=1 // pred_fallthru
      _
    // Predicated region
    $region30: #{decode_sequence.1} parent=1 // pred_check
      _
    $region31: #{decode_sequence.1} parent=1 // pred_check_branch
      %44 = sbr.rel (0) target = $region33
    $region32: #{decode_sequence.1} parent=1 // pred_region
      _
    $region33: #{decode_sequence.1} parent=1 // pred_fallthru
      _
    // Predicated region
    $region34: #{decode_sequence.1} parent=1 // pred_check
      _
    $region35: #{decode_sequence.1} parent=1 // pred_check_branch
      %46 = sbr.rel (0) target = $region37
    $region36: #{decode_sequence.1} parent=1 // pred_region
      %47 = dma.done [#allocation5], 4096
    $region37: #{decode_sequence.1} parent=1 // pred_fallthru
      _
    %v49 = vld [vmem:[%s0] sm:$0xf]
    %v50 = vld [vmem:[%s0 + $0x4] sm:$0xf]
    %v51 = vld [vmem:[%s0 + $0x8] sm:$0xf]
    %v52 = vld [vmem:[%s0 + $0xc] sm:$0xf]
    %v53 = vld [vmem:[%s0 + $0x10] sm:$0xf]
    %v54 = vld [vmem:[%s0 + $0x14] sm:$0xf]
    %v55 = vld [vmem:[%s0 + $0x18] sm:$0xf]
    %v56 = vld [vmem:[%s0 + $0x1c] sm:$0xf]
    %v57 = vld [vmem:[%s1] sm:$0xff]
    %v58 = vld [vmem:[%s1 + $0x8] sm:$0xff]
    %v59 = vld [vmem:[%s1 + $0x10] sm:$0xff]
    %v60 = vld [vmem:[%s1 + $0x18] sm:$0xff]
    %v61 = vld [vmem:[%s1 + $0x20] sm:$0xff]
    %v62 = vld [vmem:[%s1 + $0x28] sm:$0xff]
    %v63 = vld [vmem:[%s1 + $0x30] sm:$0xff]
    %v64 = vld [vmem:[%s1 + $0x38] sm:$0xff]
    %v65 = vld [vmem:[%s1 + $0x40] sm:$0xff]
    %v66 = vld [vmem:[%s1 + $0x48] sm:$0xff]
    %v67 = vld [vmem:[%s1 + $0x50] sm:$0xff]
    %v68 = vld [vmem:[%s1 + $0x58] sm:$0xff]
    %v69 = vld [vmem:[%s1 + $0x60] sm:$0xff]
    %v70 = vld [vmem:[%s1 + $0x68] sm:$0xff]
    %v71 = vld [vmem:[%s1 + $0x70] sm:$0xff]
    %v72 = vld [vmem:[%s1 + $0x78] sm:$0xff]
    %v73 = vld [vmem:[%s1 + $0x80] sm:$0xff]
    %v74 = vld [vmem:[%s1 + $0x88] sm:$0xff]
    %v75 = vld [vmem:[%s1 + $0x90] sm:$0xff]
    %v76 = vld [vmem:[%s1 + $0x98] sm:$0xff]
    %v77 = vld [vmem:[%s1 + $0xa0] sm:$0xff]
    %v78 = vld [vmem:[%s1 + $0xa8] sm:$0xff]
    %v79 = vld [vmem:[%s1 + $0xb0] sm:$0xff]
    %v80 = vld [vmem:[%s1 + $0xb8] sm:$0xff]
    %v81 = vld [vmem:[%s1 + $0xc0] sm:$0xff]
    %v82 = vld [vmem:[%s1 + $0xc8] sm:$0xff]
    %v83 = vld [vmem:[%s1 + $0xd0] sm:$0xff]
    %v84 = vld [vmem:[%s1 + $0xd8] sm:$0xff]
    %v85 = vld [vmem:[%s1 + $0xe0] sm:$0xff]
    %v86 = vld [vmem:[%s1 + $0xe8] sm:$0xff]
    %v87 = vld [vmem:[%s1 + $0xf0] sm:$0xff]
    %v88 = vld [vmem:[%s1 + $0xf8] sm:$0xff]
    %v89 = vld [vmem:[%s3] sm:$0xf]
    %v91 = vlaneseq
    %v92 = vshrl.u32 %v91, 7
    %v93 = vsub.s32 0, %v92
    %v94 = vrot.slane %v89, %v93
    %v95 = vlaneseq
    %v96 = vshrl.u32 %v95, 7
    %v97 = vsub.s32 1, %v96
    %v98 = vrot.slane %v89, %v97
    %v99 = vlaneseq
    %v100 = vshrl.u32 %v99, 7
    %v101 = vsub.s32 2, %v100
    %v102 = vrot.slane %v89, %v101
    %v103 = vlaneseq
    %v104 = vshrl.u32 %v103, 7
    %v105 = vsub.s32 3, %v104
    %v106 = vrot.slane %v89, %v105
    %v119 = vunpack.c.l.b16 %v49
    %v120 = vunpack.c.l.b16 %v50
    %v121 = vunpack.c.l.b16 %v51
    %v122 = vunpack.c.l.b16 %v52
    %v123 = vunpack.c.l.b16 %v53
    %v124 = vunpack.c.l.b16 %v54
    %v125 = vunpack.c.l.b16 %v55
    %v126 = vunpack.c.l.b16 %v56
    %v127 = vpack.c.b16 %v120, %v119
    %v128 = vpack.c.b16 %v122, %v121
    %v129 = vpack.c.b16 %v124, %v123
    %v130 = vpack.c.b16 %v126, %v125
    %v167 = vunpack.c.l.b16 %v57
    %v168 = vunpack.c.h.b16 %v57
    %v169 = vunpack.c.l.b16 %v58
    %v170 = vunpack.c.h.b16 %v58
    %v171 = vunpack.c.l.b16 %v59
    %v172 = vunpack.c.h.b16 %v59
    %v173 = vunpack.c.l.b16 %v60
    %v174 = vunpack.c.h.b16 %v60
    %v175 = vunpack.c.l.b16 %v61
    %v176 = vunpack.c.h.b16 %v61
    %v177 = vunpack.c.l.b16 %v62
    %v178 = vunpack.c.h.b16 %v62
    %v179 = vunpack.c.l.b16 %v63
    %v180 = vunpack.c.h.b16 %v63
    %v181 = vunpack.c.l.b16 %v64
    %v182 = vunpack.c.h.b16 %v64
    %v183 = vunpack.c.l.b16 %v65
    %v184 = vunpack.c.h.b16 %v65
    %v185 = vunpack.c.l.b16 %v66
    %v186 = vunpack.c.h.b16 %v66
    %v187 = vunpack.c.l.b16 %v67
    %v188 = vunpack.c.h.b16 %v67
    %v189 = vunpack.c.l.b16 %v68
    %v190 = vunpack.c.h.b16 %v68
    %v191 = vunpack.c.l.b16 %v69
    %v192 = vunpack.c.h.b16 %v69
    %v193 = vunpack.c.l.b16 %v70
    %v194 = vunpack.c.h.b16 %v70
    %v195 = vunpack.c.l.b16 %v71
    %v196 = vunpack.c.h.b16 %v71
    %v197 = vunpack.c.l.b16 %v72
    %v198 = vunpack.c.h.b16 %v72
    %v199 = vunpack.c.l.b16 %v73
    %v200 = vunpack.c.h.b16 %v73
    %v201 = vunpack.c.l.b16 %v74
    %v202 = vunpack.c.h.b16 %v74
    %v203 = vunpack.c.l.b16 %v75
    %v204 = vunpack.c.h.b16 %v75
    %v205 = vunpack.c.l.b16 %v76
    %v206 = vunpack.c.h.b16 %v76
    %v207 = vunpack.c.l.b16 %v77
    %v208 = vunpack.c.h.b16 %v77
    %v209 = vunpack.c.l.b16 %v78
    %v210 = vunpack.c.h.b16 %v78
    %v211 = vunpack.c.l.b16 %v79
    %v212 = vunpack.c.h.b16 %v79
    %v213 = vunpack.c.l.b16 %v80
    %v214 = vunpack.c.h.b16 %v80
    %v215 = vunpack.c.l.b16 %v81
    %v216 = vunpack.c.h.b16 %v81
    %v217 = vunpack.c.l.b16 %v82
    %v218 = vunpack.c.h.b16 %v82
    %v219 = vunpack.c.l.b16 %v83
    %v220 = vunpack.c.h.b16 %v83
    %v221 = vunpack.c.l.b16 %v84
    %v222 = vunpack.c.h.b16 %v84
    %v223 = vunpack.c.l.b16 %v85
    %v224 = vunpack.c.h.b16 %v85
    %v225 = vunpack.c.l.b16 %v86
    %v226 = vunpack.c.h.b16 %v86
    %v227 = vunpack.c.l.b16 %v87
    %v228 = vunpack.c.h.b16 %v87
    %v229 = vunpack.c.l.b16 %v88
    %v230 = vunpack.c.h.b16 %v88
    %v231 = vpack.c.b16 %v171, %v167
    %v232 = vpack.c.b16 %v172, %v168
    %v233 = vpack.c.b16 %v173, %v169
    %v234 = vpack.c.b16 %v174, %v170
    %v235 = vpack.c.b16 %v179, %v175
    %v236 = vpack.c.b16 %v180, %v176
    %v237 = vpack.c.b16 %v181, %v177
    %v238 = vpack.c.b16 %v182, %v178
    %v239 = vpack.c.b16 %v187, %v183
    %v240 = vpack.c.b16 %v188, %v184
    %v241 = vpack.c.b16 %v189, %v185
    %v242 = vpack.c.b16 %v190, %v186
    %v243 = vpack.c.b16 %v195, %v191
    %v244 = vpack.c.b16 %v196, %v192
    %v245 = vpack.c.b16 %v197, %v193
    %v246 = vpack.c.b16 %v198, %v194
    %v247 = vpack.c.b16 %v203, %v199
    %v248 = vpack.c.b16 %v204, %v200
    %v249 = vpack.c.b16 %v205, %v201
    %v250 = vpack.c.b16 %v206, %v202
    %v251 = vpack.c.b16 %v211, %v207
    %v252 = vpack.c.b16 %v212, %v208
    %v253 = vpack.c.b16 %v213, %v209
    %v254 = vpack.c.b16 %v214, %v210
    %v255 = vpack.c.b16 %v219, %v215
    %v256 = vpack.c.b16 %v220, %v216
    %v257 = vpack.c.b16 %v221, %v217
    %v258 = vpack.c.b16 %v222, %v218
    %v259 = vpack.c.b16 %v227, %v223
    %v260 = vpack.c.b16 %v228, %v224
    %v261 = vpack.c.b16 %v229, %v225
    %v262 = vpack.c.b16 %v230, %v226
    %295 = vmatprep.subr.bf16.mxu0 %v260
    %296 = vmatpush1.bf16.msra.mxu0 %v259
    %297 = vmatprep.subr.bf16.mxu0 %v256
    %298 = vmatpush1.bf16.msra.mxu0 %v255
    %299 = vmatprep.subr.bf16.mxu0 %v252
    %300 = vmatpush1.bf16.msra.mxu0 %v251
    %301 = vmatprep.subr.bf16.mxu0 %v248
    %302 = vmatpush1.bf16.msra.mxu0 %v247
    %303 = vmatprep.subr.bf16.mxu0 %v244
    %304 = vmatpush1.bf16.msra.mxu0 %v243
    %305 = vmatprep.subr.bf16.mxu0 %v240
    %306 = vmatpush1.bf16.msra.mxu0 %v239
    %307 = vmatprep.subr.bf16.mxu0 %v236
    %308 = vmatpush1.bf16.msra.mxu0 %v235
    %309 = vmatprep.subr.bf16.mxu0 %v232
    %310 = vmatpush1.bf16.msra.mxu0 %v231
    %311 = vmatprep.subr.bf16.mxu0 0
    %312 = vmatpush2.bf16.msra.mxu0 0
    %313 = vmatprep.subr.bf16.mxu0 0
    %314 = vmatpush2.bf16.msra.mxu0 0
    %315 = vmatprep.subr.bf16.mxu0 0
    %316 = vmatpush2.bf16.msra.mxu0 0
    %317 = vmatprep.subr.bf16.mxu0 0
    %318 = vmatpush2.bf16.msra.mxu0 0
    %319 = vmatprep.subr.bf16.mxu0 0
    %320 = vmatpush2.bf16.msra.mxu0 0
    %321 = vmatprep.subr.bf16.mxu0 0
    %322 = vmatpush2.bf16.msra.mxu0 0
    %323 = vmatprep.subr.bf16.mxu0 0
    %324 = vmatpush2.bf16.msra.mxu0 0
    %325 = vmatprep.subr.bf16.mxu0 0
    %326 = vmatpush2.bf16.msra.mxu0 0
    %327 = vmatprep.mubr.bf16.mxu0 0
    %328 = vmatmul.mubr.bf16.gmra.mxu0 %v127
    %v329 = vpop.f32.mrf.mxu0
    %v330 = vadd.f32 %v94, %v329
    %v331 = vpop.f32.mrf.mxu0
    %v332 = vadd.f32 %v98, %v331
    %v333 = vpop.f32.mrf.mxu0
    %v334 = vadd.f32 %v94, %v333
    %v335 = vpop.f32.mrf.mxu0
    %v336 = vadd.f32 %v98, %v335
    %337 = vmatprep.mubr.bf16.mxu0 0
    %338 = vmatmul.mubr.bf16.gmra.mxu0 %v128
    %v339 = vpop.f32.mrf.mxu0
    %v340 = vadd.f32 %v94, %v339
    %v341 = vpop.f32.mrf.mxu0
    %v342 = vadd.f32 %v98, %v341
    %v343 = vpop.f32.mrf.mxu0
    %v344 = vadd.f32 %v94, %v343
    %v345 = vpop.f32.mrf.mxu0
    %v346 = vadd.f32 %v98, %v345
    %347 = vmatprep.mubr.bf16.mxu0 0
    %348 = vmatmul.mubr.bf16.gmra.mxu0 %v129
    %v349 = vpop.f32.mrf.mxu0
    %v350 = vadd.f32 %v94, %v349
    %v351 = vpop.f32.mrf.mxu0
    %v352 = vadd.f32 %v98, %v351
    %v353 = vpop.f32.mrf.mxu0
    %v354 = vadd.f32 %v94, %v353
    %v355 = vpop.f32.mrf.mxu0
    %v356 = vadd.f32 %v98, %v355
    %357 = vmatprep.mubr.bf16.mxu0 0
    %358 = vmatmul.mubr.bf16.gmra.mxu0 %v130
    %v359 = vpop.f32.mrf.mxu0
    %v360 = vadd.f32 %v94, %v359
    %v361 = vpop.f32.mrf.mxu0
    %v362 = vadd.f32 %v98, %v361
    %v363 = vpop.f32.mrf.mxu0
    %v364 = vadd.f32 %v94, %v363
    %v365 = vpop.f32.mrf.mxu0
    %v366 = vadd.f32 %v98, %v365
    %367 = vdwg.mxu0
    %368 = vmatprep.subr.bf16.mxu0 %v262
    %369 = vmatpush1.bf16.msra.mxu0 %v261
    %370 = vmatprep.subr.bf16.mxu0 %v258
    %371 = vmatpush1.bf16.msra.mxu0 %v257
    %372 = vmatprep.subr.bf16.mxu0 %v254
    %373 = vmatpush1.bf16.msra.mxu0 %v253
    %374 = vmatprep.subr.bf16.mxu0 %v250
    %375 = vmatpush1.bf16.msra.mxu0 %v249
    %376 = vmatprep.subr.bf16.mxu0 %v246
    %377 = vmatpush1.bf16.msra.mxu0 %v245
    %378 = vmatprep.subr.bf16.mxu0 %v242
    %379 = vmatpush1.bf16.msra.mxu0 %v241
    %380 = vmatprep.subr.bf16.mxu0 %v238
    %381 = vmatpush1.bf16.msra.mxu0 %v237
    %382 = vmatprep.subr.bf16.mxu0 %v234
    %383 = vmatpush1.bf16.msra.mxu0 %v233
    %384 = vmatprep.subr.bf16.mxu0 0
    %385 = vmatpush2.bf16.msra.mxu0 0
    %386 = vmatprep.subr.bf16.mxu0 0
    %387 = vmatpush2.bf16.msra.mxu0 0
    %388 = vmatprep.subr.bf16.mxu0 0
    %389 = vmatpush2.bf16.msra.mxu0 0
    %390 = vmatprep.subr.bf16.mxu0 0
    %391 = vmatpush2.bf16.msra.mxu0 0
    %392 = vmatprep.subr.bf16.mxu0 0
    %393 = vmatpush2.bf16.msra.mxu0 0
    %394 = vmatprep.subr.bf16.mxu0 0
    %395 = vmatpush2.bf16.msra.mxu0 0
    %396 = vmatprep.subr.bf16.mxu0 0
    %397 = vmatpush2.bf16.msra.mxu0 0
    %398 = vmatprep.subr.bf16.mxu0 0
    %399 = vmatpush2.bf16.msra.mxu0 0
    %400 = vmatprep.mubr.bf16.mxu0 0
    %401 = vmatmul.mubr.bf16.gmra.mxu0 %v127
    %v402 = vpop.f32.mrf.mxu0
    %v403 = vadd.f32 %v102, %v402
    %v404 = vpop.f32.mrf.mxu0
    %v405 = vadd.f32 %v106, %v404
    %v406 = vpop.f32.mrf.mxu0
    %v407 = vadd.f32 %v102, %v406
    %v408 = vpop.f32.mrf.mxu0
    %v409 = vadd.f32 %v106, %v408
    %410 = vmatprep.mubr.bf16.mxu0 0
    %411 = vmatmul.mubr.bf16.gmra.mxu0 %v128
    %v412 = vpop.f32.mrf.mxu0
    %v413 = vadd.f32 %v102, %v412
    %v414 = vpop.f32.mrf.mxu0
    %v415 = vadd.f32 %v106, %v414
    %v416 = vpop.f32.mrf.mxu0
    %v417 = vadd.f32 %v102, %v416
    %v418 = vpop.f32.mrf.mxu0
    %v419 = vadd.f32 %v106, %v418
    %420 = vmatprep.mubr.bf16.mxu0 0
    %421 = vmatmul.mubr.bf16.gmra.mxu0 %v129
    %v422 = vpop.f32.mrf.mxu0
    %v423 = vadd.f32 %v102, %v422
    %v424 = vpop.f32.mrf.mxu0
    %v425 = vadd.f32 %v106, %v424
    %v426 = vpop.f32.mrf.mxu0
    %v427 = vadd.f32 %v102, %v426
    %v428 = vpop.f32.mrf.mxu0
    %v429 = vadd.f32 %v106, %v428
    %430 = vmatprep.mubr.bf16.mxu0 0
    %431 = vmatmul.mubr.bf16.gmra.mxu0 %v130
    %v432 = vpop.f32.mrf.mxu0
    %v433 = vadd.f32 %v102, %v432
    %v434 = vpop.f32.mrf.mxu0
    %v435 = vadd.f32 %v106, %v434
    %v436 = vpop.f32.mrf.mxu0
    %v437 = vadd.f32 %v102, %v436
    %v438 = vpop.f32.mrf.mxu0
    %v439 = vadd.f32 %v106, %v438
    %440 = vdwg.mxu0
    %441 = vst [vmem:[#allocation2] sm:$0xff] %v330
    %442 = vst [vmem:[#allocation2 + $0x8] sm:$0xff] %v332
    %443 = vst [vmem:[#allocation2 + $0x10] sm:$0xff] %v403
    %444 = vst [vmem:[#allocation2 + $0x18] sm:$0xff] %v405
    %445 = vst [vmem:[#allocation2 + $0x20] sm:$0xff] %v334
    %446 = vst [vmem:[#allocation2 + $0x28] sm:$0xff] %v336
    %447 = vst [vmem:[#allocation2 + $0x30] sm:$0xff] %v407
    %448 = vst [vmem:[#allocation2 + $0x38] sm:$0xff] %v409
    %449 = vst [vmem:[#allocation2 + $0x40] sm:$0xff] %v340
    %450 = vst [vmem:[#allocation2 + $0x48] sm:$0xff] %v342
    %451 = vst [vmem:[#allocation2 + $0x50] sm:$0xff] %v413
    %452 = vst [vmem:[#allocation2 + $0x58] sm:$0xff] %v415
    %453 = vst [vmem:[#allocation2 + $0x60] sm:$0xff] %v344
    %454 = vst [vmem:[#allocation2 + $0x68] sm:$0xff] %v346
    %455 = vst [vmem:[#allocation2 + $0x70] sm:$0xff] %v417
    %456 = vst [vmem:[#allocation2 + $0x78] sm:$0xff] %v419
    %457 = vst [vmem:[#allocation2 + $0x80] sm:$0xff] %v350
    %458 = vst [vmem:[#allocation2 + $0x88] sm:$0xff] %v352
    %459 = vst [vmem:[#allocation2 + $0x90] sm:$0xff] %v423
    %460 = vst [vmem:[#allocation2 + $0x98] sm:$0xff] %v425
    %461 = vst [vmem:[#allocation2 + $0xa0] sm:$0xff] %v354
    %462 = vst [vmem:[#allocation2 + $0xa8] sm:$0xff] %v356
    %463 = vst [vmem:[#allocation2 + $0xb0] sm:$0xff] %v427
    %464 = vst [vmem:[#allocation2 + $0xb8] sm:$0xff] %v429
    %465 = vst [vmem:[#allocation2 + $0xc0] sm:$0xff] %v360
    %466 = vst [vmem:[#allocation2 + $0xc8] sm:$0xff] %v362
    %467 = vst [vmem:[#allocation2 + $0xd0] sm:$0xff] %v433
    %468 = vst [vmem:[#allocation2 + $0xd8] sm:$0xff] %v435
    %469 = vst [vmem:[#allocation2 + $0xe0] sm:$0xff] %v364
    %470 = vst [vmem:[#allocation2 + $0xe8] sm:$0xff] %v366
    %471 = vst [vmem:[#allocation2 + $0xf0] sm:$0xff] %v437
    %472 = vst [vmem:[#allocation2 + $0xf8] sm:$0xff] %v439
    %v473 = vld [vmem:[%s6] sm:$0xff]
    %v474 = vld [vmem:[%s7] sm:$0xff]
    %v475 = vld [vmem:[#allocation2] sm:$0xff]
    %v476 = vld [vmem:[#allocation2 + $0x8] sm:$0xff]
    %v477 = vld [vmem:[#allocation2 + $0x10] sm:$0xff]
    %v478 = vld [vmem:[#allocation2 + $0x18] sm:$0xff]
    %v479 = vpack.c.bf16 %v473, %v473
    %v480 = vld [vmem:[#allocation4] sm:$0xff]
    %v481 = vld [vmem:[#allocation4 + $0x8] sm:$0xff]
    %v482 = vld [vmem:[#allocation4 + $0x10] sm:$0xff]
    %v483 = vld [vmem:[#allocation4 + $0x18] sm:$0xff]
    %v484 = vld [vmem:[#allocation4 + $0x20] sm:$0xff]
    %v485 = vld [vmem:[#allocation4 + $0x28] sm:$0xff]
    %v486 = vld [vmem:[#allocation4 + $0x30] sm:$0xff]
    %v487 = vld [vmem:[#allocation4 + $0x38] sm:$0xff]
    %v488 = vld [vmem:[#allocation4 + $0x40] sm:$0xff]
    %v489 = vld [vmem:[#allocation4 + $0x48] sm:$0xff]
    %v490 = vld [vmem:[#allocation4 + $0x50] sm:$0xff]
    %v491 = vld [vmem:[#allocation4 + $0x58] sm:$0xff]
    %v492 = vld [vmem:[#allocation4 + $0x60] sm:$0xff]
    %v493 = vld [vmem:[#allocation4 + $0x68] sm:$0xff]
    %v494 = vld [vmem:[#allocation4 + $0x70] sm:$0xff]
    %v495 = vld [vmem:[#allocation4 + $0x78] sm:$0xff]
    %v496 = vld [vmem:[#allocation4 + $0x80] sm:$0xff]
    %v497 = vld [vmem:[#allocation4 + $0x88] sm:$0xff]
    %v498 = vld [vmem:[#allocation4 + $0x90] sm:$0xff]
    %v499 = vld [vmem:[#allocation4 + $0x98] sm:$0xff]
    %v500 = vld [vmem:[#allocation4 + $0xa0] sm:$0xff]
    %v501 = vld [vmem:[#allocation4 + $0xa8] sm:$0xff]
    %v502 = vld [vmem:[#allocation4 + $0xb0] sm:$0xff]
    %v503 = vld [vmem:[#allocation4 + $0xb8] sm:$0xff]
    %v504 = vld [vmem:[#allocation4 + $0xc0] sm:$0xff]
    %v505 = vld [vmem:[#allocation4 + $0xc8] sm:$0xff]
    %v506 = vld [vmem:[#allocation4 + $0xd0] sm:$0xff]
    %v507 = vld [vmem:[#allocation4 + $0xd8] sm:$0xff]
    %v508 = vld [vmem:[#allocation4 + $0xe0] sm:$0xff]
    %v509 = vld [vmem:[#allocation4 + $0xe8] sm:$0xff]
    %v510 = vld [vmem:[#allocation4 + $0xf0] sm:$0xff]
    %v511 = vld [vmem:[#allocation4 + $0xf8] sm:$0xff]
    %v544 = vunpack.c.l.b16 %v480
    %v545 = vunpack.c.h.b16 %v480
    %v546 = vunpack.c.l.b16 %v481
    %v547 = vunpack.c.h.b16 %v481
    %v548 = vunpack.c.l.b16 %v482
    %v549 = vunpack.c.h.b16 %v482
    %v550 = vunpack.c.l.b16 %v483
    %v551 = vunpack.c.h.b16 %v483
    %v552 = vunpack.c.l.b16 %v484
    %v553 = vunpack.c.h.b16 %v484
    %v554 = vunpack.c.l.b16 %v485
    %v555 = vunpack.c.h.b16 %v485
    %v556 = vunpack.c.l.b16 %v486
    %v557 = vunpack.c.h.b16 %v486
    %v558 = vunpack.c.l.b16 %v487
    %v559 = vunpack.c.h.b16 %v487
    %v560 = vunpack.c.l.b16 %v488
    %v561 = vunpack.c.h.b16 %v488
    %v562 = vunpack.c.l.b16 %v489
    %v563 = vunpack.c.h.b16 %v489
    %v564 = vunpack.c.l.b16 %v490
    %v565 = vunpack.c.h.b16 %v490
    %v566 = vunpack.c.l.b16 %v491
    %v567 = vunpack.c.h.b16 %v491
    %v568 = vunpack.c.l.b16 %v492
    %v569 = vunpack.c.h.b16 %v492
    %v570 = vunpack.c.l.b16 %v493
    %v571 = vunpack.c.h.b16 %v493
    %v572 = vunpack.c.l.b16 %v494
    %v573 = vunpack.c.h.b16 %v494
    %v574 = vunpack.c.l.b16 %v495
    %v575 = vunpack.c.h.b16 %v495
    %v576 = vunpack.c.l.b16 %v496
    %v577 = vunpack.c.h.b16 %v496
    %v578 = vunpack.c.l.b16 %v497
    %v579 = vunpack.c.h.b16 %v497
    %v580 = vunpack.c.l.b16 %v498
    %v581 = vunpack.c.h.b16 %v498
    %v582 = vunpack.c.l.b16 %v499
    %v583 = vunpack.c.h.b16 %v499
    %v584 = vunpack.c.l.b16 %v500
    %v585 = vunpack.c.h.b16 %v500
    %v586 = vunpack.c.l.b16 %v501
    %v587 = vunpack.c.h.b16 %v501
    %v588 = vunpack.c.l.b16 %v502
    %v589 = vunpack.c.h.b16 %v502
    %v590 = vunpack.c.l.b16 %v503
    %v591 = vunpack.c.h.b16 %v503
    %v592 = vunpack.c.l.b16 %v504
    %v593 = vunpack.c.h.b16 %v504
    %v594 = vunpack.c.l.b16 %v505
    %v595 = vunpack.c.h.b16 %v505
    %v596 = vunpack.c.l.b16 %v506
    %v597 = vunpack.c.h.b16 %v506
    %v598 = vunpack.c.l.b16 %v507
    %v599 = vunpack.c.h.b16 %v507
    %v600 = vunpack.c.l.b16 %v508
    %v601 = vunpack.c.h.b16 %v508
    %v602 = vunpack.c.l.b16 %v509
    %v603 = vunpack.c.h.b16 %v509
    %v604 = vunpack.c.l.b16 %v510
    %v605 = vunpack.c.h.b16 %v510
    %v606 = vunpack.c.l.b16 %v511
    %v607 = vunpack.c.h.b16 %v511
    %v608 = vpack.c.b16 %v548, %v544
    %v609 = vpack.c.b16 %v549, %v545
    %v610 = vpack.c.b16 %v550, %v546
    %v611 = vpack.c.b16 %v551, %v547
    %v612 = vpack.c.b16 %v556, %v552
    %v613 = vpack.c.b16 %v557, %v553
    %v614 = vpack.c.b16 %v558, %v554
    %v615 = vpack.c.b16 %v559, %v555
    %v616 = vpack.c.b16 %v564, %v560
    %v617 = vpack.c.b16 %v565, %v561
    %v618 = vpack.c.b16 %v566, %v562
    %v619 = vpack.c.b16 %v567, %v563
    %v620 = vpack.c.b16 %v572, %v568
    %v621 = vpack.c.b16 %v573, %v569
    %v622 = vpack.c.b16 %v574, %v570
    %v623 = vpack.c.b16 %v575, %v571
    %v624 = vpack.c.b16 %v580, %v576
    %v625 = vpack.c.b16 %v581, %v577
    %v626 = vpack.c.b16 %v582, %v578
    %v627 = vpack.c.b16 %v583, %v579
    %v628 = vpack.c.b16 %v588, %v584
    %v629 = vpack.c.b16 %v589, %v585
    %v630 = vpack.c.b16 %v590, %v586
    %v631 = vpack.c.b16 %v591, %v587
    %v632 = vpack.c.b16 %v596, %v592
    %v633 = vpack.c.b16 %v597, %v593
    %v634 = vpack.c.b16 %v598, %v594
    %v635 = vpack.c.b16 %v599, %v595
    %v636 = vpack.c.b16 %v604, %v600
    %v637 = vpack.c.b16 %v605, %v601
    %v638 = vpack.c.b16 %v606, %v602
    %v639 = vpack.c.b16 %v607, %v603
    %672 = vmatprep.subr.bf16.mxu0 %v637
    %673 = vmatpush1.bf16.msra.mxu0 %v636
    %674 = vmatprep.subr.bf16.mxu0 %v633
    %675 = vmatpush1.bf16.msra.mxu0 %v632
    %676 = vmatprep.subr.bf16.mxu0 %v629
    %677 = vmatpush1.bf16.msra.mxu0 %v628
    %678 = vmatprep.subr.bf16.mxu0 %v625
    %679 = vmatpush1.bf16.msra.mxu0 %v624
    %680 = vmatprep.subr.bf16.mxu0 %v621
    %681 = vmatpush1.bf16.msra.mxu0 %v620
    %682 = vmatprep.subr.bf16.mxu0 %v617
    %683 = vmatpush1.bf16.msra.mxu0 %v616
    %684 = vmatprep.subr.bf16.mxu0 %v613
    %685 = vmatpush1.bf16.msra.mxu0 %v612
    %686 = vmatprep.subr.bf16.mxu0 %v609
    %687 = vmatpush1.bf16.msra.mxu0 %v608
    %688 = vmatprep.subr.bf16.mxu0 0
    %689 = vmatpush2.bf16.msra.mxu0 0
    %690 = vmatprep.subr.bf16.mxu0 0
    %691 = vmatpush2.bf16.msra.mxu0 0
    %692 = vmatprep.subr.bf16.mxu0 0
    %693 = vmatpush2.bf16.msra.mxu0 0
    %694 = vmatprep.subr.bf16.mxu0 0
    %695 = vmatpush2.bf16.msra.mxu0 0
    %696 = vmatprep.subr.bf16.mxu0 0
    %697 = vmatpush2.bf16.msra.mxu0 0
    %698 = vmatprep.subr.bf16.mxu0 0
    %699 = vmatpush2.bf16.msra.mxu0 0
    %700 = vmatprep.subr.bf16.mxu0 0
    %701 = vmatpush2.bf16.msra.mxu0 0
    %702 = vmatprep.subr.bf16.mxu0 0
    %703 = vmatpush2.bf16.msra.mxu0 0
    %704 = vmatprep.mubr.bf16.mxu0 0
    %705 = vmatmul.mubr.bf16.gmra.mxu0 %v479
    %v706 = vpop.f32.mrf.mxu0
    %v707 = vadd.f32 0.0, %v706
    %v708 = vpop.f32.mrf.mxu0
    %v709 = vadd.f32 0.0, %v708
    %v710 = vpop.f32.mrf.mxu0
    %v711 = vpop.f32.mrf.mxu0
    %712 = vdwg.mxu0
    %713 = vmatprep.subr.bf16.mxu0 %v639
    %714 = vmatpush1.bf16.msra.mxu0 %v638
    %715 = vmatprep.subr.bf16.mxu0 %v635
    %716 = vmatpush1.bf16.msra.mxu0 %v634
    %717 = vmatprep.subr.bf16.mxu0 %v631
    %718 = vmatpush1.bf16.msra.mxu0 %v630
    %719 = vmatprep.subr.bf16.mxu0 %v627
    %720 = vmatpush1.bf16.msra.mxu0 %v626
    %721 = vmatprep.subr.bf16.mxu0 %v623
    %722 = vmatpush1.bf16.msra.mxu0 %v622
    %723 = vmatprep.subr.bf16.mxu0 %v619
    %724 = vmatpush1.bf16.msra.mxu0 %v618
    %725 = vmatprep.subr.bf16.mxu0 %v615
    %726 = vmatpush1.bf16.msra.mxu0 %v614
    %727 = vmatprep.subr.bf16.mxu0 %v611
    %728 = vmatpush1.bf16.msra.mxu0 %v610
    %729 = vmatprep.subr.bf16.mxu0 0
    %730 = vmatpush2.bf16.msra.mxu0 0
    %731 = vmatprep.subr.bf16.mxu0 0
    %732 = vmatpush2.bf16.msra.mxu0 0
    %733 = vmatprep.subr.bf16.mxu0 0
    %734 = vmatpush2.bf16.msra.mxu0 0
    %735 = vmatprep.subr.bf16.mxu0 0
    %736 = vmatpush2.bf16.msra.mxu0 0
    %737 = vmatprep.subr.bf16.mxu0 0
    %738 = vmatpush2.bf16.msra.mxu0 0
    %739 = vmatprep.subr.bf16.mxu0 0
    %740 = vmatpush2.bf16.msra.mxu0 0
    %741 = vmatprep.subr.bf16.mxu0 0
    %742 = vmatpush2.bf16.msra.mxu0 0
    %743 = vmatprep.subr.bf16.mxu0 0
    %744 = vmatpush2.bf16.msra.mxu0 0
    %745 = vmatprep.mubr.bf16.mxu0 0
    %746 = vmatmul.mubr.bf16.gmra.mxu0 %v479
    %v747 = vpop.f32.mrf.mxu0
    %v748 = vadd.f32 0.0, %v747
    %v749 = vpop.f32.mrf.mxu0
    %v750 = vadd.f32 0.0, %v749
    %v751 = vpop.f32.mrf.mxu0
    %v752 = vpop.f32.mrf.mxu0
    %753 = vdwg.mxu0
    %v754 = vadd.f32 %v475, %v707
    %v755 = vadd.f32 %v476, %v709
    %v756 = vadd.f32 %v477, %v748
    %v757 = vadd.f32 %v478, %v750
    %v758 = vxor.u32 %v754, 2147483648
    %v759 = vmul.f32 %v758, 1.442695
    %v760 = vpow.pop %v759
    %v761 = vadd.f32 %v760, 1.0
    %v762 = vrcp.pop %v761
    %v763 = vmul.f32 1.0, %v762
    %v764 = vxor.u32 %v755, 2147483648
    %v765 = vmul.f32 %v764, 1.442695
    %v766 = vpow.pop %v765
    %v767 = vadd.f32 %v766, 1.0
    %v768 = vrcp.pop %v767
    %v769 = vmul.f32 1.0, %v768
    %v770 = vtanh.pop %v756
    %v771 = vxor.u32 %v757, 2147483648
    %v772 = vmul.f32 %v771, 1.442695
    %v773 = vpow.pop %v772
    %v774 = vadd.f32 %v773, 1.0
    %v775 = vrcp.pop %v774
    %v776 = vmul.f32 1.0, %v775
    %v777 = vmul.f32 %v769, %v474
    %v778 = vmul.f32 %v763, %v770
    %v779 = vadd.f32 %v777, %v778
    %v780 = vtanh.pop %v779
    %v781 = vmul.f32 %v776, %v780
    %782 = vst [vmem:[#allocation3] sm:$0xff] %v781
    %s783 = scalar_lea.vmem [#allocation2], 32
    %v784 = vld [vmem:[%s783] sm:$0xff]
    %v785 = vld [vmem:[%s783 + $0x8] sm:$0xff]
    %v786 = vld [vmem:[%s783 + $0x10] sm:$0xff]
    %v787 = vld [vmem:[%s783 + $0x18] sm:$0xff]
    %v788 = vpack.c.bf16 %v781, %v781
    %v789 = vld [vmem:[#allocation4] sm:$0xff]
    %v790 = vld [vmem:[#allocation4 + $0x8] sm:$0xff]
    %v791 = vld [vmem:[#allocation4 + $0x10] sm:$0xff]
    %v792 = vld [vmem:[#allocation4 + $0x18] sm:$0xff]
    %v793 = vld [vmem:[#allocation4 + $0x20] sm:$0xff]
    %v794 = vld [vmem:[#allocation4 + $0x28] sm:$0xff]
    %v795 = vld [vmem:[#allocation4 + $0x30] sm:$0xff]
    %v796 = vld [vmem:[#allocation4 + $0x38] sm:$0xff]
    %v797 = vld [vmem:[#allocation4 + $0x40] sm:$0xff]
    %v798 = vld [vmem:[#allocation4 + $0x48] sm:$0xff]
    %v799 = vld [vmem:[#allocation4 + $0x50] sm:$0xff]
    %v800 = vld [vmem:[#allocation4 + $0x58] sm:$0xff]
    %v801 = vld [vmem:[#allocation4 + $0x60] sm:$0xff]
    %v802 = vld [vmem:[#allocation4 + $0x68] sm:$0xff]
    %v803 = vld [vmem:[#allocation4 + $0x70] sm:$0xff]
    %v804 = vld [vmem:[#allocation4 + $0x78] sm:$0xff]
    %v805 = vld [vmem:[#allocation4 + $0x80] sm:$0xff]
    %v806 = vld [vmem:[#allocation4 + $0x88] sm:$0xff]
    %v807 = vld [vmem:[#allocation4 + $0x90] sm:$0xff]
    %v808 = vld [vmem:[#allocation4 + $0x98] sm:$0xff]
    %v809 = vld [vmem:[#allocation4 + $0xa0] sm:$0xff]
    %v810 = vld [vmem:[#allocation4 + $0xa8] sm:$0xff]
    %v811 = vld [vmem:[#allocation4 + $0xb0] sm:$0xff]
    %v812 = vld [vmem:[#allocation4 + $0xb8] sm:$0xff]
    %v813 = vld [vmem:[#allocation4 + $0xc0] sm:$0xff]
    %v814 = vld [vmem:[#allocation4 + $0xc8] sm:$0xff]
    %v815 = vld [vmem:[#allocation4 + $0xd0] sm:$0xff]
    %v816 = vld [vmem:[#allocation4 + $0xd8] sm:$0xff]
    %v817 = vld [vmem:[#allocation4 + $0xe0] sm:$0xff]
    %v818 = vld [vmem:[#allocation4 + $0xe8] sm:$0xff]
    %v819 = vld [vmem:[#allocation4 + $0xf0] sm:$0xff]
    %v820 = vld [vmem:[#allocation4 + $0xf8] sm:$0xff]
    %v853 = vunpack.c.l.b16 %v789
    %v854 = vunpack.c.h.b16 %v789
    %v855 = vunpack.c.l.b16 %v790
    %v856 = vunpack.c.h.b16 %v790
    %v857 = vunpack.c.l.b16 %v791
    %v858 = vunpack.c.h.b16 %v791
    %v859 = vunpack.c.l.b16 %v792
    %v860 = vunpack.c.h.b16 %v792
    %v861 = vunpack.c.l.b16 %v793
    %v862 = vunpack.c.h.b16 %v793
    %v863 = vunpack.c.l.b16 %v794
    %v864 = vunpack.c.h.b16 %v794
    %v865 = vunpack.c.l.b16 %v795
    %v866 = vunpack.c.h.b16 %v795
    %v867 = vunpack.c.l.b16 %v796
    %v868 = vunpack.c.h.b16 %v796
    %v869 = vunpack.c.l.b16 %v797
    %v870 = vunpack.c.h.b16 %v797
    %v871 = vunpack.c.l.b16 %v798
    %v872 = vunpack.c.h.b16 %v798
    %v873 = vunpack.c.l.b16 %v799
    %v874 = vunpack.c.h.b16 %v799
    %v875 = vunpack.c.l.b16 %v800
    %v876 = vunpack.c.h.b16 %v800
    %v877 = vunpack.c.l.b16 %v801
    %v878 = vunpack.c.h.b16 %v801
    %v879 = vunpack.c.l.b16 %v802
    %v880 = vunpack.c.h.b16 %v802
    %v881 = vunpack.c.l.b16 %v803
    %v882 = vunpack.c.h.b16 %v803
    %v883 = vunpack.c.l.b16 %v804
    %v884 = vunpack.c.h.b16 %v804
    %v885 = vunpack.c.l.b16 %v805
    %v886 = vunpack.c.h.b16 %v805
    %v887 = vunpack.c.l.b16 %v806
    %v888 = vunpack.c.h.b16 %v806
    %v889 = vunpack.c.l.b16 %v807
    %v890 = vunpack.c.h.b16 %v807
    %v891 = vunpack.c.l.b16 %v808
    %v892 = vunpack.c.h.b16 %v808
    %v893 = vunpack.c.l.b16 %v809
    %v894 = vunpack.c.h.b16 %v809
    %v895 = vunpack.c.l.b16 %v810
    %v896 = vunpack.c.h.b16 %v810
    %v897 = vunpack.c.l.b16 %v811
    %v898 = vunpack.c.h.b16 %v811
    %v899 = vunpack.c.l.b16 %v812
    %v900 = vunpack.c.h.b16 %v812
    %v901 = vunpack.c.l.b16 %v813
    %v902 = vunpack.c.h.b16 %v813
    %v903 = vunpack.c.l.b16 %v814
    %v904 = vunpack.c.h.b16 %v814
    %v905 = vunpack.c.l.b16 %v815
    %v906 = vunpack.c.h.b16 %v815
    %v907 = vunpack.c.l.b16 %v816
    %v908 = vunpack.c.h.b16 %v816
    %v909 = vunpack.c.l.b16 %v817
    %v910 = vunpack.c.h.b16 %v817
    %v911 = vunpack.c.l.b16 %v818
    %v912 = vunpack.c.h.b16 %v818
    %v913 = vunpack.c.l.b16 %v819
    %v914 = vunpack.c.h.b16 %v819
    %v915 = vunpack.c.l.b16 %v820
    %v916 = vunpack.c.h.b16 %v820
    %v917 = vpack.c.b16 %v857, %v853
    %v918 = vpack.c.b16 %v858, %v854
    %v919 = vpack.c.b16 %v859, %v855
    %v920 = vpack.c.b16 %v860, %v856
    %v921 = vpack.c.b16 %v865, %v861
    %v922 = vpack.c.b16 %v866, %v862
    %v923 = vpack.c.b16 %v867, %v863
    %v924 = vpack.c.b16 %v868, %v864
    %v925 = vpack.c.b16 %v873, %v869
    %v926 = vpack.c.b16 %v874, %v870
    %v927 = vpack.c.b16 %v875, %v871
    %v928 = vpack.c.b16 %v876, %v872
    %v929 = vpack.c.b16 %v881, %v877
    %v930 = vpack.c.b16 %v882, %v878
    %v931 = vpack.c.b16 %v883, %v879
    %v932 = vpack.c.b16 %v884, %v880
    %v933 = vpack.c.b16 %v889, %v885
    %v934 = vpack.c.b16 %v890, %v886
    %v935 = vpack.c.b16 %v891, %v887
    %v936 = vpack.c.b16 %v892, %v888
    %v937 = vpack.c.b16 %v897, %v893
    %v938 = vpack.c.b16 %v898, %v894
    %v939 = vpack.c.b16 %v899, %v895
    %v940 = vpack.c.b16 %v900, %v896
    %v941 = vpack.c.b16 %v905, %v901
    %v942 = vpack.c.b16 %v906, %v902
    %v943 = vpack.c.b16 %v907, %v903
    %v944 = vpack.c.b16 %v908, %v904
    %v945 = vpack.c.b16 %v913, %v909
    %v946 = vpack.c.b16 %v914, %v910
    %v947 = vpack.c.b16 %v915, %v911
    %v948 = vpack.c.b16 %v916, %v912
    %981 = vmatprep.subr.bf16.mxu0 %v946
    %982 = vmatpush1.bf16.msra.mxu0 %v945
    %983 = vmatprep.subr.bf16.mxu0 %v942
    %984 = vmatpush1.bf16.msra.mxu0 %v941
    %985 = vmatprep.subr.bf16.mxu0 %v938
    %986 = vmatpush1.bf16.msra.mxu0 %v937
    %987 = vmatprep.subr.bf16.mxu0 %v934
    %988 = vmatpush1.bf16.msra.mxu0 %v933
    %989 = vmatprep.subr.bf16.mxu0 %v930
    %990 = vmatpush1.bf16.msra.mxu0 %v929
    %991 = vmatprep.subr.bf16.mxu0 %v926
    %992 = vmatpush1.bf16.msra.mxu0 %v925
    %993 = vmatprep.subr.bf16.mxu0 %v922
    %994 = vmatpush1.bf16.msra.mxu0 %v921
    %995 = vmatprep.subr.bf16.mxu0 %v918
    %996 = vmatpush1.bf16.msra.mxu0 %v917
    %997 = vmatprep.subr.bf16.mxu0 0
    %998 = vmatpush2.bf16.msra.mxu0 0
    %999 = vmatprep.subr.bf16.mxu0 0
    %1000 = vmatpush2.bf16.msra.mxu0 0
    %1001 = vmatprep.subr.bf16.mxu0 0
    %1002 = vmatpush2.bf16.msra.mxu0 0
    %1003 = vmatprep.subr.bf16.mxu0 0
    %1004 = vmatpush2.bf16.msra.mxu0 0
    %1005 = vmatprep.subr.bf16.mxu0 0
    %1006 = vmatpush2.bf16.msra.mxu0 0
    %1007 = vmatprep.subr.bf16.mxu0 0
    %1008 = vmatpush2.bf16.msra.mxu0 0
    %1009 = vmatprep.subr.bf16.mxu0 0
    %1010 = vmatpush2.bf16.msra.mxu0 0
    %1011 = vmatprep.subr.bf16.mxu0 0
    %1012 = vmatpush2.bf16.msra.mxu0 0
    %1013 = vmatprep.mubr.bf16.mxu0 0
    %1014 = vmatmul.mubr.bf16.gmra.mxu0 %v788
    %v1015 = vpop.f32.mrf.mxu0
    %v1016 = vadd.f32 0.0, %v1015
    %v1017 = vpop.f32.mrf.mxu0
    %v1018 = vadd.f32 0.0, %v1017
    %v1019 = vpop.f32.mrf.mxu0
    %v1020 = vpop.f32.mrf.mxu0
    %1021 = vdwg.mxu0
    %1022 = vmatprep.subr.bf16.mxu0 %v948
    %1023 = vmatpush1.bf16.msra.mxu0 %v947
    %1024 = vmatprep.subr.bf16.mxu0 %v944
    %1025 = vmatpush1.bf16.msra.mxu0 %v943
    %1026 = vmatprep.subr.bf16.mxu0 %v940
    %1027 = vmatpush1.bf16.msra.mxu0 %v939
    %1028 = vmatprep.subr.bf16.mxu0 %v936
    %1029 = vmatpush1.bf16.msra.mxu0 %v935
    %1030 = vmatprep.subr.bf16.mxu0 %v932
    %1031 = vmatpush1.bf16.msra.mxu0 %v931
    %1032 = vmatprep.subr.bf16.mxu0 %v928
    %1033 = vmatpush1.bf16.msra.mxu0 %v927
    %1034 = vmatprep.subr.bf16.mxu0 %v924
    %1035 = vmatpush1.bf16.msra.mxu0 %v923
    %1036 = vmatprep.subr.bf16.mxu0 %v920
    %1037 = vmatpush1.bf16.msra.mxu0 %v919
    %1038 = vmatprep.subr.bf16.mxu0 0
    %1039 = vmatpush2.bf16.msra.mxu0 0
    %1040 = vmatprep.subr.bf16.mxu0 0
    %1041 = vmatpush2.bf16.msra.mxu0 0
    %1042 = vmatprep.subr.bf16.mxu0 0
    %1043 = vmatpush2.bf16.msra.mxu0 0
    %1044 = vmatprep.subr.bf16.mxu0 0
    %1045 = vmatpush2.bf16.msra.mxu0 0
    %1046 = vmatprep.subr.bf16.mxu0 0
    %1047 = vmatpush2.bf16.msra.mxu0 0
    %1048 = vmatprep.subr.bf16.mxu0 0
    %1049 = vmatpush2.bf16.msra.mxu0 0
    %1050 = vmatprep.subr.bf16.mxu0 0
    %1051 = vmatpush2.bf16.msra.mxu0 0
    %1052 = vmatprep.subr.bf16.mxu0 0
    %1053 = vmatpush2.bf16.msra.mxu0 0
    %1054 = vmatprep.mubr.bf16.mxu0 0
    %1055 = vmatmul.mubr.bf16.gmra.mxu0 %v788
    %v1056 = vpop.f32.mrf.mxu0
    %v1057 = vadd.f32 0.0, %v1056
    %v1058 = vpop.f32.mrf.mxu0
    %v1059 = vadd.f32 0.0, %v1058
    %v1060 = vpop.f32.mrf.mxu0
    %v1061 = vpop.f32.mrf.mxu0
    %1062 = vdwg.mxu0
    %v1063 = vadd.f32 %v784, %v1016
    %v1064 = vadd.f32 %v785, %v1018
    %v1065 = vadd.f32 %v786, %v1057
    %v1066 = vadd.f32 %v787, %v1059
    %v1067 = vxor.u32 %v1063, 2147483648
    %v1068 = vmul.f32 %v1067, 1.442695
    %v1069 = vpow.pop %v1068
    %v1070 = vadd.f32 %v1069, 1.0
    %v1071 = vrcp.pop %v1070
    %v1072 = vmul.f32 1.0, %v1071
    %v1073 = vxor.u32 %v1064, 2147483648
    %v1074 = vmul.f32 %v1073, 1.442695
    %v1075 = vpow.pop %v1074
    %v1076 = vadd.f32 %v1075, 1.0
    %v1077 = vrcp.pop %v1076
    %v1078 = vmul.f32 1.0, %v1077
    %v1079 = vtanh.pop %v1065
    %v1080 = vxor.u32 %v1066, 2147483648
    %v1081 = vmul.f32 %v1080, 1.442695
    %v1082 = vpow.pop %v1081
    %v1083 = vadd.f32 %v1082, 1.0
    %v1084 = vrcp.pop %v1083
    %v1085 = vmul.f32 1.0, %v1084
    %v1086 = vmul.f32 %v1078, %v779
    %v1087 = vmul.f32 %v1072, %v1079
    %v1088 = vadd.f32 %v1086, %v1087
    %v1089 = vtanh.pop %v1088
    %v1090 = vmul.f32 %v1085, %v1089
    %s1091 = scalar_lea.vmem [#allocation3], 8
    %1092 = vst [vmem:[%s1091] sm:$0xff] %v1090
    %s1093 = scalar_lea.vmem [#allocation2], 64
    %v1094 = vld [vmem:[%s1093] sm:$0xff]
    %v1095 = vld [vmem:[%s1093 + $0x8] sm:$0xff]
    %v1096 = vld [vmem:[%s1093 + $0x10] sm:$0xff]
    %v1097 = vld [vmem:[%s1093 + $0x18] sm:$0xff]
    %v1098 = vpack.c.bf16 %v1090, %v1090
    %v1099 = vld [vmem:[#allocation4] sm:$0xff]
    %v1100 = vld [vmem:[#allocation4 + $0x8] sm:$0xff]
    %v1101 = vld [vmem:[#allocation4 + $0x10] sm:$0xff]
    %v1102 = vld [vmem:[#allocation4 + $0x18] sm:$0xff]
    %v1103 = vld [vmem:[#allocation4 + $0x20] sm:$0xff]
    %v1104 = vld [vmem:[#allocation4 + $0x28] sm:$0xff]
    %v1105 = vld [vmem:[#allocation4 + $0x30] sm:$0xff]
    %v1106 = vld [vmem:[#allocation4 + $0x38] sm:$0xff]
    %v1107 = vld [vmem:[#allocation4 + $0x40] sm:$0xff]
    %v1108 = vld [vmem:[#allocation4 + $0x48] sm:$0xff]
    %v1109 = vld [vmem:[#allocation4 + $0x50] sm:$0xff]
    %v1110 = vld [vmem:[#allocation4 + $0x58] sm:$0xff]
    %v1111 = vld [vmem:[#allocation4 + $0x60] sm:$0xff]
    %v1112 = vld [vmem:[#allocation4 + $0x68] sm:$0xff]
    %v1113 = vld [vmem:[#allocation4 + $0x70] sm:$0xff]
    %v1114 = vld [vmem:[#allocation4 + $0x78] sm:$0xff]
    %v1115 = vld [vmem:[#allocation4 + $0x80] sm:$0xff]
    %v1116 = vld [vmem:[#allocation4 + $0x88] sm:$0xff]
    %v1117 = vld [vmem:[#allocation4 + $0x90] sm:$0xff]
    %v1118 = vld [vmem:[#allocation4 + $0x98] sm:$0xff]
    %v1119 = vld [vmem:[#allocation4 + $0xa0] sm:$0xff]
    %v1120 = vld [vmem:[#allocation4 + $0xa8] sm:$0xff]
    %v1121 = vld [vmem:[#allocation4 + $0xb0] sm:$0xff]
    %v1122 = vld [vmem:[#allocation4 + $0xb8] sm:$0xff]
    %v1123 = vld [vmem:[#allocation4 + $0xc0] sm:$0xff]
    %v1124 = vld [vmem:[#allocation4 + $0xc8] sm:$0xff]
    %v1125 = vld [vmem:[#allocation4 + $0xd0] sm:$0xff]
    %v1126 = vld [vmem:[#allocation4 + $0xd8] sm:$0xff]
    %v1127 = vld [vmem:[#allocation4 + $0xe0] sm:$0xff]
    %v1128 = vld [vmem:[#allocation4 + $0xe8] sm:$0xff]
    %v1129 = vld [vmem:[#allocation4 + $0xf0] sm:$0xff]
    %v1130 = vld [vmem:[#allocation4 + $0xf8] sm:$0xff]
    %v1163 = vunpack.c.l.b16 %v1099
    %v1164 = vunpack.c.h.b16 %v1099
    %v1165 = vunpack.c.l.b16 %v1100
    %v1166 = vunpack.c.h.b16 %v1100
    %v1167 = vunpack.c.l.b16 %v1101
    %v1168 = vunpack.c.h.b16 %v1101
    %v1169 = vunpack.c.l.b16 %v1102
    %v1170 = vunpack.c.h.b16 %v1102
    %v1171 = vunpack.c.l.b16 %v1103
    %v1172 = vunpack.c.h.b16 %v1103
    %v1173 = vunpack.c.l.b16 %v1104
    %v1174 = vunpack.c.h.b16 %v1104
    %v1175 = vunpack.c.l.b16 %v1105
    %v1176 = vunpack.c.h.b16 %v1105
    %v1177 = vunpack.c.l.b16 %v1106
    %v1178 = vunpack.c.h.b16 %v1106
    %v1179 = vunpack.c.l.b16 %v1107
    %v1180 = vunpack.c.h.b16 %v1107
    %v1181 = vunpack.c.l.b16 %v1108
    %v1182 = vunpack.c.h.b16 %v1108
    %v1183 = vunpack.c.l.b16 %v1109
    %v1184 = vunpack.c.h.b16 %v1109
    %v1185 = vunpack.c.l.b16 %v1110
    %v1186 = vunpack.c.h.b16 %v1110
    %v1187 = vunpack.c.l.b16 %v1111
    %v1188 = vunpack.c.h.b16 %v1111
    %v1189 = vunpack.c.l.b16 %v1112
    %v1190 = vunpack.c.h.b16 %v1112
    %v1191 = vunpack.c.l.b16 %v1113
    %v1192 = vunpack.c.h.b16 %v1113
    %v1193 = vunpack.c.l.b16 %v1114
    %v1194 = vunpack.c.h.b16 %v1114
    %v1195 = vunpack.c.l.b16 %v1115
    %v1196 = vunpack.c.h.b16 %v1115
    %v1197 = vunpack.c.l.b16 %v1116
    %v1198 = vunpack.c.h.b16 %v1116
    %v1199 = vunpack.c.l.b16 %v1117
    %v1200 = vunpack.c.h.b16 %v1117
    %v1201 = vunpack.c.l.b16 %v1118
    %v1202 = vunpack.c.h.b16 %v1118
    %v1203 = vunpack.c.l.b16 %v1119
    %v1204 = vunpack.c.h.b16 %v1119
    %v1205 = vunpack.c.l.b16 %v1120
    %v1206 = vunpack.c.h.b16 %v1120
    %v1207 = vunpack.c.l.b16 %v1121
    %v1208 = vunpack.c.h.b16 %v1121
    %v1209 = vunpack.c.l.b16 %v1122
    %v1210 = vunpack.c.h.b16 %v1122
    %v1211 = vunpack.c.l.b16 %v1123
    %v1212 = vunpack.c.h.b16 %v1123
    %v1213 = vunpack.c.l.b16 %v1124
    %v1214 = vunpack.c.h.b16 %v1124
    %v1215 = vunpack.c.l.b16 %v1125
    %v1216 = vunpack.c.h.b16 %v1125
    %v1217 = vunpack.c.l.b16 %v1126
    %v1218 = vunpack.c.h.b16 %v1126
    %v1219 = vunpack.c.l.b16 %v1127
    %v1220 = vunpack.c.h.b16 %v1127
    %v1221 = vunpack.c.l.b16 %v1128
    %v1222 = vunpack.c.h.b16 %v1128
    %v1223 = vunpack.c.l.b16 %v1129
    %v1224 = vunpack.c.h.b16 %v1129
    %v1225 = vunpack.c.l.b16 %v1130
    %v1226 = vunpack.c.h.b16 %v1130
    %v1227 = vpack.c.b16 %v1167, %v1163
    %v1228 = vpack.c.b16 %v1168, %v1164
    %v1229 = vpack.c.b16 %v1169, %v1165
    %v1230 = vpack.c.b16 %v1170, %v1166
    %v1231 = vpack.c.b16 %v1175, %v1171
    %v1232 = vpack.c.b16 %v1176, %v1172
    %v1233 = vpack.c.b16 %v1177, %v1173
    %v1234 = vpack.c.b16 %v1178, %v1174
    %v1235 = vpack.c.b16 %v1183, %v1179
    %v1236 = vpack.c.b16 %v1184, %v1180
    %v1237 = vpack.c.b16 %v1185, %v1181
    %v1238 = vpack.c.b16 %v1186, %v1182
    %v1239 = vpack.c.b16 %v1191, %v1187
    %v1240 = vpack.c.b16 %v1192, %v1188
    %v1241 = vpack.c.b16 %v1193, %v1189
    %v1242 = vpack.c.b16 %v1194, %v1190
    %v1243 = vpack.c.b16 %v1199, %v1195
    %v1244 = vpack.c.b16 %v1200, %v1196
    %v1245 = vpack.c.b16 %v1201, %v1197
    %v1246 = vpack.c.b16 %v1202, %v1198
    %v1247 = vpack.c.b16 %v1207, %v1203
    %v1248 = vpack.c.b16 %v1208, %v1204
    %v1249 = vpack.c.b16 %v1209, %v1205
    %v1250 = vpack.c.b16 %v1210, %v1206
    %v1251 = vpack.c.b16 %v1215, %v1211
    %v1252 = vpack.c.b16 %v1216, %v1212
    %v1253 = vpack.c.b16 %v1217, %v1213
    %v1254 = vpack.c.b16 %v1218, %v1214
    %v1255 = vpack.c.b16 %v1223, %v1219
    %v1256 = vpack.c.b16 %v1224, %v1220
    %v1257 = vpack.c.b16 %v1225, %v1221
    %v1258 = vpack.c.b16 %v1226, %v1222
    %1291 = vmatprep.subr.bf16.mxu0 %v1256
    %1292 = vmatpush1.bf16.msra.mxu0 %v1255
    %1293 = vmatprep.subr.bf16.mxu0 %v1252
    %1294 = vmatpush1.bf16.msra.mxu0 %v1251
    %1295 = vmatprep.subr.bf16.mxu0 %v1248
    %1296 = vmatpush1.bf16.msra.mxu0 %v1247
    %1297 = vmatprep.subr.bf16.mxu0 %v1244
    %1298 = vmatpush1.bf16.msra.mxu0 %v1243
    %1299 = vmatprep.subr.bf16.mxu0 %v1240
    %1300 = vmatpush1.bf16.msra.mxu0 %v1239
    %1301 = vmatprep.subr.bf16.mxu0 %v1236
    %1302 = vmatpush1.bf16.msra.mxu0 %v1235
    %1303 = vmatprep.subr.bf16.mxu0 %v1232
    %1304 = vmatpush1.bf16.msra.mxu0 %v1231
    %1305 = vmatprep.subr.bf16.mxu0 %v1228
    %1306 = vmatpush1.bf16.msra.mxu0 %v1227
    %1307 = vmatprep.subr.bf16.mxu0 0
    %1308 = vmatpush2.bf16.msra.mxu0 0
    %1309 = vmatprep.subr.bf16.mxu0 0
    %1310 = vmatpush2.bf16.msra.mxu0 0
    %1311 = vmatprep.subr.bf16.mxu0 0
    %1312 = vmatpush2.bf16.msra.mxu0 0
    %1313 = vmatprep.subr.bf16.mxu0 0
    %1314 = vmatpush2.bf16.msra.mxu0 0
    %1315 = vmatprep.subr.bf16.mxu0 0
    %1316 = vmatpush2.bf16.msra.mxu0 0
    %1317 = vmatprep.subr.bf16.mxu0 0
    %1318 = vmatpush2.bf16.msra.mxu0 0
    %1319 = vmatprep.subr.bf16.mxu0 0
    %1320 = vmatpush2.bf16.msra.mxu0 0
    %1321 = vmatprep.subr.bf16.mxu0 0
    %1322 = vmatpush2.bf16.msra.mxu0 0
    %1323 = vmatprep.mubr.bf16.mxu0 0
    %1324 = vmatmul.mubr.bf16.gmra.mxu0 %v1098
    %v1325 = vpop.f32.mrf.mxu0
    %v1326 = vadd.f32 0.0, %v1325
    %v1327 = vpop.f32.mrf.mxu0
    %v1328 = vadd.f32 0.0, %v1327
    %v1329 = vpop.f32.mrf.mxu0
    %v1330 = vpop.f32.mrf.mxu0
    %1331 = vdwg.mxu0
    %1332 = vmatprep.subr.bf16.mxu0 %v1258
    %1333 = vmatpush1.bf16.msra.mxu0 %v1257
    %1334 = vmatprep.subr.bf16.mxu0 %v1254
    %1335 = vmatpush1.bf16.msra.mxu0 %v1253
    %1336 = vmatprep.subr.bf16.mxu0 %v1250
    %1337 = vmatpush1.bf16.msra.mxu0 %v1249
    %1338 = vmatprep.subr.bf16.mxu0 %v1246
    %1339 = vmatpush1.bf16.msra.mxu0 %v1245
    %1340 = vmatprep.subr.bf16.mxu0 %v1242
    %1341 = vmatpush1.bf16.msra.mxu0 %v1241
    %1342 = vmatprep.subr.bf16.mxu0 %v1238
    %1343 = vmatpush1.bf16.msra.mxu0 %v1237
    %1344 = vmatprep.subr.bf16.mxu0 %v1234
    %1345 = vmatpush1.bf16.msra.mxu0 %v1233
    %1346 = vmatprep.subr.bf16.mxu0 %v1230
    %1347 = vmatpush1.bf16.msra.mxu0 %v1229
    %1348 = vmatprep.subr.bf16.mxu0 0
    %1349 = vmatpush2.bf16.msra.mxu0 0
    %1350 = vmatprep.subr.bf16.mxu0 0
    %1351 = vmatpush2.bf16.msra.mxu0 0
    %1352 = vmatprep.subr.bf16.mxu0 0
    %1353 = vmatpush2.bf16.msra.mxu0 0
    %1354 = vmatprep.subr.bf16.mxu0 0
    %1355 = vmatpush2.bf16.msra.mxu0 0
    %1356 = vmatprep.subr.bf16.mxu0 0
    %1357 = vmatpush2.bf16.msra.mxu0 0
    %1358 = vmatprep.subr.bf16.mxu0 0
    %1359 = vmatpush2.bf16.msra.mxu0 0
    %1360 = vmatprep.subr.bf16.mxu0 0
    %1361 = vmatpush2.bf16.msra.mxu0 0
    %1362 = vmatprep.subr.bf16.mxu0 0
    %1363 = vmatpush2.bf16.msra.mxu0 0
    %1364 = vmatprep.mubr.bf16.mxu0 0
    %1365 = vmatmul.mubr.bf16.gmra.mxu0 %v1098
    %v1366 = vpop.f32.mrf.mxu0
    %v1367 = vadd.f32 0.0, %v1366
    %v1368 = vpop.f32.mrf.mxu0
    %v1369 = vadd.f32 0.0, %v1368
    %v1370 = vpop.f32.mrf.mxu0
    %v1371 = vpop.f32.mrf.mxu0
    %1372 = vdwg.mxu0
    %v1373 = vadd.f32 %v1094, %v1326
    %v1374 = vadd.f32 %v1095, %v1328
    %v1375 = vadd.f32 %v1096, %v1367
    %v1376 = vadd.f32 %v1097, %v1369
    %v1377 = vxor.u32 %v1373, 2147483648
    %v1378 = vmul.f32 %v1377, 1.442695
    %v1379 = vpow.pop %v1378
    %v1380 = vadd.f32 %v1379, 1.0
    %v1381 = vrcp.pop %v1380
    %v1382 = vmul.f32 1.0, %v1381
    %v1383 = vxor.u32 %v1374, 2147483648
    %v1384 = vmul.f32 %v1383, 1.442695
    %v1385 = vpow.pop %v1384
    %v1386 = vadd.f32 %v1385, 1.0
    %v1387 = vrcp.pop %v1386
    %v1388 = vmul.f32 1.0, %v1387
    %v1389 = vtanh.pop %v1375
    %v1390 = vxor.u32 %v1376, 2147483648
    %v1391 = vmul.f32 %v1390, 1.442695
    %v1392 = vpow.pop %v1391
    %v1393 = vadd.f32 %v1392, 1.0
    %v1394 = vrcp.pop %v1393
    %v1395 = vmul.f32 1.0, %v1394
    %v1396 = vmul.f32 %v1388, %v1088
    %v1397 = vmul.f32 %v1382, %v1389
    %v1398 = vadd.f32 %v1396, %v1397
    %v1399 = vtanh.pop %v1398
    %v1400 = vmul.f32 %v1395, %v1399
    %s1401 = scalar_lea.vmem [#allocation3], 16
    %1402 = vst [vmem:[%s1401] sm:$0xff] %v1400
    %s1403 = scalar_lea.vmem [#allocation2], 96
    %v1404 = vld [vmem:[%s1403] sm:$0xff]
    %v1405 = vld [vmem:[%s1403 + $0x8] sm:$0xff]
    %v1406 = vld [vmem:[%s1403 + $0x10] sm:$0xff]
    %v1407 = vld [vmem:[%s1403 + $0x18] sm:$0xff]
    %v1408 = vpack.c.bf16 %v1400, %v1400
    %v1409 = vld [vmem:[#allocation4] sm:$0xff]
    %v1410 = vld [vmem:[#allocation4 + $0x8] sm:$0xff]
    %v1411 = vld [vmem:[#allocation4 + $0x10] sm:$0xff]
    %v1412 = vld [vmem:[#allocation4 + $0x18] sm:$0xff]
    %v1413 = vld [vmem:[#allocation4 + $0x20] sm:$0xff]
    %v1414 = vld [vmem:[#allocation4 + $0x28] sm:$0xff]
    %v1415 = vld [vmem:[#allocation4 + $0x30] sm:$0xff]
    %v1416 = vld [vmem:[#allocation4 + $0x38] sm:$0xff]
    %v1417 = vld [vmem:[#allocation4 + $0x40] sm:$0xff]
    %v1418 = vld [vmem:[#allocation4 + $0x48] sm:$0xff]
    %v1419 = vld [vmem:[#allocation4 + $0x50] sm:$0xff]
    %v1420 = vld [vmem:[#allocation4 + $0x58] sm:$0xff]
    %v1421 = vld [vmem:[#allocation4 + $0x60] sm:$0xff]
    %v1422 = vld [vmem:[#allocation4 + $0x68] sm:$0xff]
    %v1423 = vld [vmem:[#allocation4 + $0x70] sm:$0xff]
    %v1424 = vld [vmem:[#allocation4 + $0x78] sm:$0xff]
    %v1425 = vld [vmem:[#allocation4 + $0x80] sm:$0xff]
    %v1426 = vld [vmem:[#allocation4 + $0x88] sm:$0xff]
    %v1427 = vld [vmem:[#allocation4 + $0x90] sm:$0xff]
    %v1428 = vld [vmem:[#allocation4 + $0x98] sm:$0xff]
    %v1429 = vld [vmem:[#allocation4 + $0xa0] sm:$0xff]
    %v1430 = vld [vmem:[#allocation4 + $0xa8] sm:$0xff]
    %v1431 = vld [vmem:[#allocation4 + $0xb0] sm:$0xff]
    %v1432 = vld [vmem:[#allocation4 + $0xb8] sm:$0xff]
    %v1433 = vld [vmem:[#allocation4 + $0xc0] sm:$0xff]
    %v1434 = vld [vmem:[#allocation4 + $0xc8] sm:$0xff]
    %v1435 = vld [vmem:[#allocation4 + $0xd0] sm:$0xff]
    %v1436 = vld [vmem:[#allocation4 + $0xd8] sm:$0xff]
    %v1437 = vld [vmem:[#allocation4 + $0xe0] sm:$0xff]
    %v1438 = vld [vmem:[#allocation4 + $0xe8] sm:$0xff]
    %v1439 = vld [vmem:[#allocation4 + $0xf0] sm:$0xff]
    %v1440 = vld [vmem:[#allocation4 + $0xf8] sm:$0xff]
    %v1473 = vunpack.c.l.b16 %v1409
    %v1474 = vunpack.c.h.b16 %v1409
    %v1475 = vunpack.c.l.b16 %v1410
    %v1476 = vunpack.c.h.b16 %v1410
    %v1477 = vunpack.c.l.b16 %v1411
    %v1478 = vunpack.c.h.b16 %v1411
    %v1479 = vunpack.c.l.b16 %v1412
    %v1480 = vunpack.c.h.b16 %v1412
    %v1481 = vunpack.c.l.b16 %v1413
    %v1482 = vunpack.c.h.b16 %v1413
    %v1483 = vunpack.c.l.b16 %v1414
    %v1484 = vunpack.c.h.b16 %v1414
    %v1485 = vunpack.c.l.b16 %v1415
    %v1486 = vunpack.c.h.b16 %v1415
    %v1487 = vunpack.c.l.b16 %v1416
    %v1488 = vunpack.c.h.b16 %v1416
    %v1489 = vunpack.c.l.b16 %v1417
    %v1490 = vunpack.c.h.b16 %v1417
    %v1491 = vunpack.c.l.b16 %v1418
    %v1492 = vunpack.c.h.b16 %v1418
    %v1493 = vunpack.c.l.b16 %v1419
    %v1494 = vunpack.c.h.b16 %v1419
    %v1495 = vunpack.c.l.b16 %v1420
    %v1496 = vunpack.c.h.b16 %v1420
    %v1497 = vunpack.c.l.b16 %v1421
    %v1498 = vunpack.c.h.b16 %v1421
    %v1499 = vunpack.c.l.b16 %v1422
    %v1500 = vunpack.c.h.b16 %v1422
    %v1501 = vunpack.c.l.b16 %v1423
    %v1502 = vunpack.c.h.b16 %v1423
    %v1503 = vunpack.c.l.b16 %v1424
    %v1504 = vunpack.c.h.b16 %v1424
    %v1505 = vunpack.c.l.b16 %v1425
    %v1506 = vunpack.c.h.b16 %v1425
    %v1507 = vunpack.c.l.b16 %v1426
    %v1508 = vunpack.c.h.b16 %v1426
    %v1509 = vunpack.c.l.b16 %v1427
    %v1510 = vunpack.c.h.b16 %v1427
    %v1511 = vunpack.c.l.b16 %v1428
    %v1512 = vunpack.c.h.b16 %v1428
    %v1513 = vunpack.c.l.b16 %v1429
    %v1514 = vunpack.c.h.b16 %v1429
    %v1515 = vunpack.c.l.b16 %v1430
    %v1516 = vunpack.c.h.b16 %v1430
    %v1517 = vunpack.c.l.b16 %v1431
    %v1518 = vunpack.c.h.b16 %v1431
    %v1519 = vunpack.c.l.b16 %v1432
    %v1520 = vunpack.c.h.b16 %v1432
    %v1521 = vunpack.c.l.b16 %v1433
    %v1522 = vunpack.c.h.b16 %v1433
    %v1523 = vunpack.c.l.b16 %v1434
    %v1524 = vunpack.c.h.b16 %v1434
    %v1525 = vunpack.c.l.b16 %v1435
    %v1526 = vunpack.c.h.b16 %v1435
    %v1527 = vunpack.c.l.b16 %v1436
    %v1528 = vunpack.c.h.b16 %v1436
    %v1529 = vunpack.c.l.b16 %v1437
    %v1530 = vunpack.c.h.b16 %v1437
    %v1531 = vunpack.c.l.b16 %v1438
    %v1532 = vunpack.c.h.b16 %v1438
    %v1533 = vunpack.c.l.b16 %v1439
    %v1534 = vunpack.c.h.b16 %v1439
    %v1535 = vunpack.c.l.b16 %v1440
    %v1536 = vunpack.c.h.b16 %v1440
    %v1537 = vpack.c.b16 %v1477, %v1473
    %v1538 = vpack.c.b16 %v1478, %v1474
    %v1539 = vpack.c.b16 %v1479, %v1475
    %v1540 = vpack.c.b16 %v1480, %v1476
    %v1541 = vpack.c.b16 %v1485, %v1481
    %v1542 = vpack.c.b16 %v1486, %v1482
    %v1543 = vpack.c.b16 %v1487, %v1483
    %v1544 = vpack.c.b16 %v1488, %v1484
    %v1545 = vpack.c.b16 %v1493, %v1489
    %v1546 = vpack.c.b16 %v1494, %v1490
    %v1547 = vpack.c.b16 %v1495, %v1491
    %v1548 = vpack.c.b16 %v1496, %v1492
    %v1549 = vpack.c.b16 %v1501, %v1497
    %v1550 = vpack.c.b16 %v1502, %v1498
    %v1551 = vpack.c.b16 %v1503, %v1499
    %v1552 = vpack.c.b16 %v1504, %v1500
    %v1553 = vpack.c.b16 %v1509, %v1505
    %v1554 = vpack.c.b16 %v1510, %v1506
    %v1555 = vpack.c.b16 %v1511, %v1507
    %v1556 = vpack.c.b16 %v1512, %v1508
    %v1557 = vpack.c.b16 %v1517, %v1513
    %v1558 = vpack.c.b16 %v1518, %v1514
    %v1559 = vpack.c.b16 %v1519, %v1515
    %v1560 = vpack.c.b16 %v1520, %v1516
    %v1561 = vpack.c.b16 %v1525, %v1521
    %v1562 = vpack.c.b16 %v1526, %v1522
    %v1563 = vpack.c.b16 %v1527, %v1523
    %v1564 = vpack.c.b16 %v1528, %v1524
    %v1565 = vpack.c.b16 %v1533, %v1529
    %v1566 = vpack.c.b16 %v1534, %v1530
    %v1567 = vpack.c.b16 %v1535, %v1531
    %v1568 = vpack.c.b16 %v1536, %v1532
    %1601 = vmatprep.subr.bf16.mxu0 %v1566
    %1602 = vmatpush1.bf16.msra.mxu0 %v1565
    %1603 = vmatprep.subr.bf16.mxu0 %v1562
    %1604 = vmatpush1.bf16.msra.mxu0 %v1561
    %1605 = vmatprep.subr.bf16.mxu0 %v1558
    %1606 = vmatpush1.bf16.msra.mxu0 %v1557
    %1607 = vmatprep.subr.bf16.mxu0 %v1554
    %1608 = vmatpush1.bf16.msra.mxu0 %v1553
    %1609 = vmatprep.subr.bf16.mxu0 %v1550
    %1610 = vmatpush1.bf16.msra.mxu0 %v1549
    %1611 = vmatprep.subr.bf16.mxu0 %v1546
    %1612 = vmatpush1.bf16.msra.mxu0 %v1545
    %1613 = vmatprep.subr.bf16.mxu0 %v1542
    %1614 = vmatpush1.bf16.msra.mxu0 %v1541
    %1615 = vmatprep.subr.bf16.mxu0 %v1538
    %1616 = vmatpush1.bf16.msra.mxu0 %v1537
    %1617 = vmatprep.subr.bf16.mxu0 0
    %1618 = vmatpush2.bf16.msra.mxu0 0
    %1619 = vmatprep.subr.bf16.mxu0 0
    %1620 = vmatpush2.bf16.msra.mxu0 0
    %1621 = vmatprep.subr.bf16.mxu0 0
    %1622 = vmatpush2.bf16.msra.mxu0 0
    %1623 = vmatprep.subr.bf16.mxu0 0
    %1624 = vmatpush2.bf16.msra.mxu0 0
    %1625 = vmatprep.subr.bf16.mxu0 0
    %1626 = vmatpush2.bf16.msra.mxu0 0
    %1627 = vmatprep.subr.bf16.mxu0 0
    %1628 = vmatpush2.bf16.msra.mxu0 0
    %1629 = vmatprep.subr.bf16.mxu0 0
    %1630 = vmatpush2.bf16.msra.mxu0 0
    %1631 = vmatprep.subr.bf16.mxu0 0
    %1632 = vmatpush2.bf16.msra.mxu0 0
    %1633 = vmatprep.mubr.bf16.mxu0 0
    %1634 = vmatmul.mubr.bf16.gmra.mxu0 %v1408
    %v1635 = vpop.f32.mrf.mxu0
    %v1636 = vadd.f32 0.0, %v1635
    %v1637 = vpop.f32.mrf.mxu0
    %v1638 = vadd.f32 0.0, %v1637
    %v1639 = vpop.f32.mrf.mxu0
    %v1640 = vpop.f32.mrf.mxu0
    %1641 = vdwg.mxu0
    %1642 = vmatprep.subr.bf16.mxu0 %v1568
    %1643 = vmatpush1.bf16.msra.mxu0 %v1567
    %1644 = vmatprep.subr.bf16.mxu0 %v1564
    %1645 = vmatpush1.bf16.msra.mxu0 %v1563
    %1646 = vmatprep.subr.bf16.mxu0 %v1560
    %1647 = vmatpush1.bf16.msra.mxu0 %v1559
    %1648 = vmatprep.subr.bf16.mxu0 %v1556
    %1649 = vmatpush1.bf16.msra.mxu0 %v1555
    %1650 = vmatprep.subr.bf16.mxu0 %v1552
    %1651 = vmatpush1.bf16.msra.mxu0 %v1551
    %1652 = vmatprep.subr.bf16.mxu0 %v1548
    %1653 = vmatpush1.bf16.msra.mxu0 %v1547
    %1654 = vmatprep.subr.bf16.mxu0 %v1544
    %1655 = vmatpush1.bf16.msra.mxu0 %v1543
    %1656 = vmatprep.subr.bf16.mxu0 %v1540
    %1657 = vmatpush1.bf16.msra.mxu0 %v1539
    %1658 = vmatprep.subr.bf16.mxu0 0
    %1659 = vmatpush2.bf16.msra.mxu0 0
    %1660 = vmatprep.subr.bf16.mxu0 0
    %1661 = vmatpush2.bf16.msra.mxu0 0
    %1662 = vmatprep.subr.bf16.mxu0 0
    %1663 = vmatpush2.bf16.msra.mxu0 0
    %1664 = vmatprep.subr.bf16.mxu0 0
    %1665 = vmatpush2.bf16.msra.mxu0 0
    %1666 = vmatprep.subr.bf16.mxu0 0
    %1667 = vmatpush2.bf16.msra.mxu0 0
    %1668 = vmatprep.subr.bf16.mxu0 0
    %1669 = vmatpush2.bf16.msra.mxu0 0
    %1670 = vmatprep.subr.bf16.mxu0 0
    %1671 = vmatpush2.bf16.msra.mxu0 0
    %1672 = vmatprep.subr.bf16.mxu0 0
    %1673 = vmatpush2.bf16.msra.mxu0 0
    %1674 = vmatprep.mubr.bf16.mxu0 0
    %1675 = vmatmul.mubr.bf16.gmra.mxu0 %v1408
    %v1676 = vpop.f32.mrf.mxu0
    %v1677 = vadd.f32 0.0, %v1676
    %v1678 = vpop.f32.mrf.mxu0
    %v1679 = vadd.f32 0.0, %v1678
    %v1680 = vpop.f32.mrf.mxu0
    %v1681 = vpop.f32.mrf.mxu0
    %1682 = vdwg.mxu0
    %v1683 = vadd.f32 %v1404, %v1636
    %v1684 = vadd.f32 %v1405, %v1638
    %v1685 = vadd.f32 %v1406, %v1677
    %v1686 = vadd.f32 %v1407, %v1679
    %v1687 = vxor.u32 %v1683, 2147483648
    %v1688 = vmul.f32 %v1687, 1.442695
    %v1689 = vpow.pop %v1688
    %v1690 = vadd.f32 %v1689, 1.0
    %v1691 = vrcp.pop %v1690
    %v1692 = vmul.f32 1.0, %v1691
    %v1693 = vxor.u32 %v1684, 2147483648
    %v1694 = vmul.f32 %v1693, 1.442695
    %v1695 = vpow.pop %v1694
    %v1696 = vadd.f32 %v1695, 1.0
    %v1697 = vrcp.pop %v1696
    %v1698 = vmul.f32 1.0, %v1697
    %v1699 = vtanh.pop %v1685
    %v1700 = vxor.u32 %v1686, 2147483648
    %v1701 = vmul.f32 %v1700, 1.442695
    %v1702 = vpow.pop %v1701
    %v1703 = vadd.f32 %v1702, 1.0
    %v1704 = vrcp.pop %v1703
    %v1705 = vmul.f32 1.0, %v1704
    %v1706 = vmul.f32 %v1698, %v1398
    %v1707 = vmul.f32 %v1692, %v1699
    %v1708 = vadd.f32 %v1706, %v1707
    %v1709 = vtanh.pop %v1708
    %v1710 = vmul.f32 %v1705, %v1709
    %s1711 = scalar_lea.vmem [#allocation3], 24
    %1712 = vst [vmem:[%s1711] sm:$0xff] %v1710
    %s1713 = scalar_lea.vmem [#allocation2], 128
    %v1714 = vld [vmem:[%s1713] sm:$0xff]
    %v1715 = vld [vmem:[%s1713 + $0x8] sm:$0xff]
    %v1716 = vld [vmem:[%s1713 + $0x10] sm:$0xff]
    %v1717 = vld [vmem:[%s1713 + $0x18] sm:$0xff]
    %v1718 = vpack.c.bf16 %v1710, %v1710
    %v1719 = vld [vmem:[#allocation4] sm:$0xff]
    %v1720 = vld [vmem:[#allocation4 + $0x8] sm:$0xff]
    %v1721 = vld [vmem:[#allocation4 + $0x10] sm:$0xff]
    %v1722 = vld [vmem:[#allocation4 + $0x18] sm:$0xff]
    %v1723 = vld [vmem:[#allocation4 + $0x20] sm:$0xff]
    %v1724 = vld [vmem:[#allocation4 + $0x28] sm:$0xff]
    %v1725 = vld [vmem:[#allocation4 + $0x30] sm:$0xff]
    %v1726 = vld [vmem:[#allocation4 + $0x38] sm:$0xff]
    %v1727 = vld [vmem:[#allocation4 + $0x40] sm:$0xff]
    %v1728 = vld [vmem:[#allocation4 + $0x48] sm:$0xff]
    %v1729 = vld [vmem:[#allocation4 + $0x50] sm:$0xff]
    %v1730 = vld [vmem:[#allocation4 + $0x58] sm:$0xff]
    %v1731 = vld [vmem:[#allocation4 + $0x60] sm:$0xff]
    %v1732 = vld [vmem:[#allocation4 + $0x68] sm:$0xff]
    %v1733 = vld [vmem:[#allocation4 + $0x70] sm:$0xff]
    %v1734 = vld [vmem:[#allocation4 + $0x78] sm:$0xff]
    %v1735 = vld [vmem:[#allocation4 + $0x80] sm:$0xff]
    %v1736 = vld [vmem:[#allocation4 + $0x88] sm:$0xff]
    %v1737 = vld [vmem:[#allocation4 + $0x90] sm:$0xff]
    %v1738 = vld [vmem:[#allocation4 + $0x98] sm:$0xff]
    %v1739 = vld [vmem:[#allocation4 + $0xa0] sm:$0xff]
    %v1740 = vld [vmem:[#allocation4 + $0xa8] sm:$0xff]
    %v1741 = vld [vmem:[#allocation4 + $0xb0] sm:$0xff]
    %v1742 = vld [vmem:[#allocation4 + $0xb8] sm:$0xff]
    %v1743 = vld [vmem:[#allocation4 + $0xc0] sm:$0xff]
    %v1744 = vld [vmem:[#allocation4 + $0xc8] sm:$0xff]
    %v1745 = vld [vmem:[#allocation4 + $0xd0] sm:$0xff]
    %v1746 = vld [vmem:[#allocation4 + $0xd8] sm:$0xff]
    %v1747 = vld [vmem:[#allocation4 + $0xe0] sm:$0xff]
    %v1748 = vld [vmem:[#allocation4 + $0xe8] sm:$0xff]
    %v1749 = vld [vmem:[#allocation4 + $0xf0] sm:$0xff]
    %v1750 = vld [vmem:[#allocation4 + $0xf8] sm:$0xff]
    %v1783 = vunpack.c.l.b16 %v1719
    %v1784 = vunpack.c.h.b16 %v1719
    %v1785 = vunpack.c.l.b16 %v1720
    %v1786 = vunpack.c.h.b16 %v1720
    %v1787 = vunpack.c.l.b16 %v1721
    %v1788 = vunpack.c.h.b16 %v1721
    %v1789 = vunpack.c.l.b16 %v1722
    %v1790 = vunpack.c.h.b16 %v1722
    %v1791 = vunpack.c.l.b16 %v1723
    %v1792 = vunpack.c.h.b16 %v1723
    %v1793 = vunpack.c.l.b16 %v1724
    %v1794 = vunpack.c.h.b16 %v1724
    %v1795 = vunpack.c.l.b16 %v1725
    %v1796 = vunpack.c.h.b16 %v1725
    %v1797 = vunpack.c.l.b16 %v1726
    %v1798 = vunpack.c.h.b16 %v1726
    %v1799 = vunpack.c.l.b16 %v1727
    %v1800 = vunpack.c.h.b16 %v1727
    %v1801 = vunpack.c.l.b16 %v1728
    %v1802 = vunpack.c.h.b16 %v1728
    %v1803 = vunpack.c.l.b16 %v1729
    %v1804 = vunpack.c.h.b16 %v1729
    %v1805 = vunpack.c.l.b16 %v1730
    %v1806 = vunpack.c.h.b16 %v1730
    %v1807 = vunpack.c.l.b16 %v1731
    %v1808 = vunpack.c.h.b16 %v1731
    %v1809 = vunpack.c.l.b16 %v1732
    %v1810 = vunpack.c.h.b16 %v1732
    %v1811 = vunpack.c.l.b16 %v1733
    %v1812 = vunpack.c.h.b16 %v1733
    %v1813 = vunpack.c.l.b16 %v1734
    %v1814 = vunpack.c.h.b16 %v1734
    %v1815 = vunpack.c.l.b16 %v1735
    %v1816 = vunpack.c.h.b16 %v1735
    %v1817 = vunpack.c.l.b16 %v1736
    %v1818 = vunpack.c.h.b16 %v1736
    %v1819 = vunpack.c.l.b16 %v1737
    %v1820 = vunpack.c.h.b16 %v1737
    %v1821 = vunpack.c.l.b16 %v1738
    %v1822 = vunpack.c.h.b16 %v1738
    %v1823 = vunpack.c.l.b16 %v1739
    %v1824 = vunpack.c.h.b16 %v1739
    %v1825 = vunpack.c.l.b16 %v1740
    %v1826 = vunpack.c.h.b16 %v1740
    %v1827 = vunpack.c.l.b16 %v1741
    %v1828 = vunpack.c.h.b16 %v1741
    %v1829 = vunpack.c.l.b16 %v1742
    %v1830 = vunpack.c.h.b16 %v1742
    %v1831 = vunpack.c.l.b16 %v1743
    %v1832 = vunpack.c.h.b16 %v1743
    %v1833 = vunpack.c.l.b16 %v1744
    %v1834 = vunpack.c.h.b16 %v1744
    %v1835 = vunpack.c.l.b16 %v1745
    %v1836 = vunpack.c.h.b16 %v1745
    %v1837 = vunpack.c.l.b16 %v1746
    %v1838 = vunpack.c.h.b16 %v1746
    %v1839 = vunpack.c.l.b16 %v1747
    %v1840 = vunpack.c.h.b16 %v1747
    %v1841 = vunpack.c.l.b16 %v1748
    %v1842 = vunpack.c.h.b16 %v1748
    %v1843 = vunpack.c.l.b16 %v1749
    %v1844 = vunpack.c.h.b16 %v1749
    %v1845 = vunpack.c.l.b16 %v1750
    %v1846 = vunpack.c.h.b16 %v1750
    %v1847 = vpack.c.b16 %v1787, %v1783
    %v1848 = vpack.c.b16 %v1788, %v1784
    %v1849 = vpack.c.b16 %v1789, %v1785
    %v1850 = vpack.c.b16 %v1790, %v1786
    %v1851 = vpack.c.b16 %v1795, %v1791
    %v1852 = vpack.c.b16 %v1796, %v1792
    %v1853 = vpack.c.b16 %v1797, %v1793
    %v1854 = vpack.c.b16 %v1798, %v1794
    %v1855 = vpack.c.b16 %v1803, %v1799
    %v1856 = vpack.c.b16 %v1804, %v1800
    %v1857 = vpack.c.b16 %v1805, %v1801
    %v1858 = vpack.c.b16 %v1806, %v1802
    %v1859 = vpack.c.b16 %v1811, %v1807
    %v1860 = vpack.c.b16 %v1812, %v1808
    %v1861 = vpack.c.b16 %v1813, %v1809
    %v1862 = vpack.c.b16 %v1814, %v1810
    %v1863 = vpack.c.b16 %v1819, %v1815
    %v1864 = vpack.c.b16 %v1820, %v1816
    %v1865 = vpack.c.b16 %v1821, %v1817
    %v1866 = vpack.c.b16 %v1822, %v1818
    %v1867 = vpack.c.b16 %v1827, %v1823
    %v1868 = vpack.c.b16 %v1828, %v1824
    %v1869 = vpack.c.b16 %v1829, %v1825
    %v1870 = vpack.c.b16 %v1830, %v1826
    %v1871 = vpack.c.b16 %v1835, %v1831
    %v1872 = vpack.c.b16 %v1836, %v1832
    %v1873 = vpack.c.b16 %v1837, %v1833
    %v1874 = vpack.c.b16 %v1838, %v1834
    %v1875 = vpack.c.b16 %v1843, %v1839
    %v1876 = vpack.c.b16 %v1844, %v1840
    %v1877 = vpack.c.b16 %v1845, %v1841
    %v1878 = vpack.c.b16 %v1846, %v1842
    %1911 = vmatprep.subr.bf16.mxu0 %v1876
    %1912 = vmatpush1.bf16.msra.mxu0 %v1875
    %1913 = vmatprep.subr.bf16.mxu0 %v1872
    %1914 = vmatpush1.bf16.msra.mxu0 %v1871
    %1915 = vmatprep.subr.bf16.mxu0 %v1868
    %1916 = vmatpush1.bf16.msra.mxu0 %v1867
    %1917 = vmatprep.subr.bf16.mxu0 %v1864
    %1918 = vmatpush1.bf16.msra.mxu0 %v1863
    %1919 = vmatprep.subr.bf16.mxu0 %v1860
    %1920 = vmatpush1.bf16.msra.mxu0 %v1859
    %1921 = vmatprep.subr.bf16.mxu0 %v1856
    %1922 = vmatpush1.bf16.msra.mxu0 %v1855
    %1923 = vmatprep.subr.bf16.mxu0 %v1852
    %1924 = vmatpush1.bf16.msra.mxu0 %v1851
    %1925 = vmatprep.subr.bf16.mxu0 %v1848
    %1926 = vmatpush1.bf16.msra.mxu0 %v1847
    %1927 = vmatprep.subr.bf16.mxu0 0
    %1928 = vmatpush2.bf16.msra.mxu0 0
    %1929 = vmatprep.subr.bf16.mxu0 0
    %1930 = vmatpush2.bf16.msra.mxu0 0
    %1931 = vmatprep.subr.bf16.mxu0 0
    %1932 = vmatpush2.bf16.msra.mxu0 0
    %1933 = vmatprep.subr.bf16.mxu0 0
    %1934 = vmatpush2.bf16.msra.mxu0 0
    %1935 = vmatprep.subr.bf16.mxu0 0
    %1936 = vmatpush2.bf16.msra.mxu0 0
    %1937 = vmatprep.subr.bf16.mxu0 0
    %1938 = vmatpush2.bf16.msra.mxu0 0
    %1939 = vmatprep.subr.bf16.mxu0 0
    %1940 = vmatpush2.bf16.msra.mxu0 0
    %1941 = vmatprep.subr.bf16.mxu0 0
    %1942 = vmatpush2.bf16.msra.mxu0 0
    %1943 = vmatprep.mubr.bf16.mxu0 0
    %1944 = vmatmul.mubr.bf16.gmra.mxu0 %v1718
    %v1945 = vpop.f32.mrf.mxu0
    %v1946 = vadd.f32 0.0, %v1945
    %v1947 = vpop.f32.mrf.mxu0
    %v1948 = vadd.f32 0.0, %v1947
    %v1949 = vpop.f32.mrf.mxu0
    %v1950 = vpop.f32.mrf.mxu0
    %1951 = vdwg.mxu0
    %1952 = vmatprep.subr.bf16.mxu0 %v1878
    %1953 = vmatpush1.bf16.msra.mxu0 %v1877
    %1954 = vmatprep.subr.bf16.mxu0 %v1874
    %1955 = vmatpush1.bf16.msra.mxu0 %v1873
    %1956 = vmatprep.subr.bf16.mxu0 %v1870
    %1957 = vmatpush1.bf16.msra.mxu0 %v1869
    %1958 = vmatprep.subr.bf16.mxu0 %v1866
    %1959 = vmatpush1.bf16.msra.mxu0 %v1865
    %1960 = vmatprep.subr.bf16.mxu0 %v1862
    %1961 = vmatpush1.bf16.msra.mxu0 %v1861
    %1962 = vmatprep.subr.bf16.mxu0 %v1858
    %1963 = vmatpush1.bf16.msra.mxu0 %v1857
    %1964 = vmatprep.subr.bf16.mxu0 %v1854
    %1965 = vmatpush1.bf16.msra.mxu0 %v1853
    %1966 = vmatprep.subr.bf16.mxu0 %v1850
    %1967 = vmatpush1.bf16.msra.mxu0 %v1849
    %1968 = vmatprep.subr.bf16.mxu0 0
    %1969 = vmatpush2.bf16.msra.mxu0 0
    %1970 = vmatprep.subr.bf16.mxu0 0
    %1971 = vmatpush2.bf16.msra.mxu0 0
    %1972 = vmatprep.subr.bf16.mxu0 0
    %1973 = vmatpush2.bf16.msra.mxu0 0
    %1974 = vmatprep.subr.bf16.mxu0 0
    %1975 = vmatpush2.bf16.msra.mxu0 0
    %1976 = vmatprep.subr.bf16.mxu0 0
    %1977 = vmatpush2.bf16.msra.mxu0 0
    %1978 = vmatprep.subr.bf16.mxu0 0
    %1979 = vmatpush2.bf16.msra.mxu0 0
    %1980 = vmatprep.subr.bf16.mxu0 0
    %1981 = vmatpush2.bf16.msra.mxu0 0
    %1982 = vmatprep.subr.bf16.mxu0 0
    %1983 = vmatpush2.bf16.msra.mxu0 0
    %1984 = vmatprep.mubr.bf16.mxu0 0
    %1985 = vmatmul.mubr.bf16.gmra.mxu0 %v1718
    %v1986 = vpop.f32.mrf.mxu0
    %v1987 = vadd.f32 0.0, %v1986
    %v1988 = vpop.f32.mrf.mxu0
    %v1989 = vadd.f32 0.0, %v1988
    %v1990 = vpop.f32.mrf.mxu0
    %v1991 = vpop.f32.mrf.mxu0
    %1992 = vdwg.mxu0
    %v1993 = vadd.f32 %v1714, %v1946
    %v1994 = vadd.f32 %v1715, %v1948
    %v1995 = vadd.f32 %v1716, %v1987
    %v1996 = vadd.f32 %v1717, %v1989
    %v1997 = vxor.u32 %v1993, 2147483648
    %v1998 = vmul.f32 %v1997, 1.442695
    %v1999 = vpow.pop %v1998
    %v2000 = vadd.f32 %v1999, 1.0
    %v2001 = vrcp.pop %v2000
    %v2002 = vmul.f32 1.0, %v2001
    %v2003 = vxor.u32 %v1994, 2147483648
    %v2004 = vmul.f32 %v2003, 1.442695
    %v2005 = vpow.pop %v2004
    %v2006 = vadd.f32 %v2005, 1.0
    %v2007 = vrcp.pop %v2006
    %v2008 = vmul.f32 1.0, %v2007
    %v2009 = vtanh.pop %v1995
    %v2010 = vxor.u32 %v1996, 2147483648
    %v2011 = vmul.f32 %v2010, 1.442695
    %v2012 = vpow.pop %v2011
    %v2013 = vadd.f32 %v2012, 1.0
    %v2014 = vrcp.pop %v2013
    %v2015 = vmul.f32 1.0, %v2014
    %v2016 = vmul.f32 %v2008, %v1708
    %v2017 = vmul.f32 %v2002, %v2009
    %v2018 = vadd.f32 %v2016, %v2017
    %v2019 = vtanh.pop %v2018
    %v2020 = vmul.f32 %v2015, %v2019
    %s2021 = scalar_lea.vmem [#allocation3], 32
    %2022 = vst [vmem:[%s2021] sm:$0xff] %v2020
    %s2023 = scalar_lea.vmem [#allocation2], 160
    %v2024 = vld [vmem:[%s2023] sm:$0xff]
    %v2025 = vld [vmem:[%s2023 + $0x8] sm:$0xff]
    %v2026 = vld [vmem:[%s2023 + $0x10] sm:$0xff]
    %v2027 = vld [vmem:[%s2023 + $0x18] sm:$0xff]
    %v2028 = vpack.c.bf16 %v2020, %v2020
    %v2029 = vld [vmem:[#allocation4] sm:$0xff]
    %v2030 = vld [vmem:[#allocation4 + $0x8] sm:$0xff]
    %v2031 = vld [vmem:[#allocation4 + $0x10] sm:$0xff]
    %v2032 = vld [vmem:[#allocation4 + $0x18] sm:$0xff]
    %v2033 = vld [vmem:[#allocation4 + $0x20] sm:$0xff]
    %v2034 = vld [vmem:[#allocation4 + $0x28] sm:$0xff]
    %v2035 = vld [vmem:[#allocation4 + $0x30] sm:$0xff]
    %v2036 = vld [vmem:[#allocation4 + $0x38] sm:$0xff]
    %v2037 = vld [vmem:[#allocation4 + $0x40] sm:$0xff]
    %v2038 = vld [vmem:[#allocation4 + $0x48] sm:$0xff]
    %v2039 = vld [vmem:[#allocation4 + $0x50] sm:$0xff]
    %v2040 = vld [vmem:[#allocation4 + $0x58] sm:$0xff]
    %v2041 = vld [vmem:[#allocation4 + $0x60] sm:$0xff]
    %v2042 = vld [vmem:[#allocation4 + $0x68] sm:$0xff]
    %v2043 = vld [vmem:[#allocation4 + $0x70] sm:$0xff]
    %v2044 = vld [vmem:[#allocation4 + $0x78] sm:$0xff]
    %v2045 = vld [vmem:[#allocation4 + $0x80] sm:$0xff]
    %v2046 = vld [vmem:[#allocation4 + $0x88] sm:$0xff]
    %v2047 = vld [vmem:[#allocation4 + $0x90] sm:$0xff]
    %v2048 = vld [vmem:[#allocation4 + $0x98] sm:$0xff]
    %v2049 = vld [vmem:[#allocation4 + $0xa0] sm:$0xff]
    %v2050 = vld [vmem:[#allocation4 + $0xa8] sm:$0xff]
    %v2051 = vld [vmem:[#allocation4 + $0xb0] sm:$0xff]
    %v2052 = vld [vmem:[#allocation4 + $0xb8] sm:$0xff]
    %v2053 = vld [vmem:[#allocation4 + $0xc0] sm:$0xff]
    %v2054 = vld [vmem:[#allocation4 + $0xc8] sm:$0xff]
    %v2055 = vld [vmem:[#allocation4 + $0xd0] sm:$0xff]
    %v2056 = vld [vmem:[#allocation4 + $0xd8] sm:$0xff]
    %v2057 = vld [vmem:[#allocation4 + $0xe0] sm:$0xff]
    %v2058 = vld [vmem:[#allocation4 + $0xe8] sm:$0xff]
    %v2059 = vld [vmem:[#allocation4 + $0xf0] sm:$0xff]
    %v2060 = vld [vmem:[#allocation4 + $0xf8] sm:$0xff]
    %v2093 = vunpack.c.l.b16 %v2029
    %v2094 = vunpack.c.h.b16 %v2029
    %v2095 = vunpack.c.l.b16 %v2030
    %v2096 = vunpack.c.h.b16 %v2030
    %v2097 = vunpack.c.l.b16 %v2031
    %v2098 = vunpack.c.h.b16 %v2031
    %v2099 = vunpack.c.l.b16 %v2032
    %v2100 = vunpack.c.h.b16 %v2032
    %v2101 = vunpack.c.l.b16 %v2033
    %v2102 = vunpack.c.h.b16 %v2033
    %v2103 = vunpack.c.l.b16 %v2034
    %v2104 = vunpack.c.h.b16 %v2034
    %v2105 = vunpack.c.l.b16 %v2035
    %v2106 = vunpack.c.h.b16 %v2035
    %v2107 = vunpack.c.l.b16 %v2036
    %v2108 = vunpack.c.h.b16 %v2036
    %v2109 = vunpack.c.l.b16 %v2037
    %v2110 = vunpack.c.h.b16 %v2037
    %v2111 = vunpack.c.l.b16 %v2038
    %v2112 = vunpack.c.h.b16 %v2038
    %v2113 = vunpack.c.l.b16 %v2039
    %v2114 = vunpack.c.h.b16 %v2039
    %v2115 = vunpack.c.l.b16 %v2040
    %v2116 = vunpack.c.h.b16 %v2040
    %v2117 = vunpack.c.l.b16 %v2041
    %v2118 = vunpack.c.h.b16 %v2041
    %v2119 = vunpack.c.l.b16 %v2042
    %v2120 = vunpack.c.h.b16 %v2042
    %v2121 = vunpack.c.l.b16 %v2043
    %v2122 = vunpack.c.h.b16 %v2043
    %v2123 = vunpack.c.l.b16 %v2044
    %v2124 = vunpack.c.h.b16 %v2044
    %v2125 = vunpack.c.l.b16 %v2045
    %v2126 = vunpack.c.h.b16 %v2045
    %v2127 = vunpack.c.l.b16 %v2046
    %v2128 = vunpack.c.h.b16 %v2046
    %v2129 = vunpack.c.l.b16 %v2047
    %v2130 = vunpack.c.h.b16 %v2047
    %v2131 = vunpack.c.l.b16 %v2048
    %v2132 = vunpack.c.h.b16 %v2048
    %v2133 = vunpack.c.l.b16 %v2049
    %v2134 = vunpack.c.h.b16 %v2049
    %v2135 = vunpack.c.l.b16 %v2050
    %v2136 = vunpack.c.h.b16 %v2050
    %v2137 = vunpack.c.l.b16 %v2051
    %v2138 = vunpack.c.h.b16 %v2051
    %v2139 = vunpack.c.l.b16 %v2052
    %v2140 = vunpack.c.h.b16 %v2052
    %v2141 = vunpack.c.l.b16 %v2053
    %v2142 = vunpack.c.h.b16 %v2053
    %v2143 = vunpack.c.l.b16 %v2054
    %v2144 = vunpack.c.h.b16 %v2054
    %v2145 = vunpack.c.l.b16 %v2055
    %v2146 = vunpack.c.h.b16 %v2055
    %v2147 = vunpack.c.l.b16 %v2056
    %v2148 = vunpack.c.h.b16 %v2056
    %v2149 = vunpack.c.l.b16 %v2057
    %v2150 = vunpack.c.h.b16 %v2057
    %v2151 = vunpack.c.l.b16 %v2058
    %v2152 = vunpack.c.h.b16 %v2058
    %v2153 = vunpack.c.l.b16 %v2059
    %v2154 = vunpack.c.h.b16 %v2059
    %v2155 = vunpack.c.l.b16 %v2060
    %v2156 = vunpack.c.h.b16 %v2060
    %v2157 = vpack.c.b16 %v2097, %v2093
    %v2158 = vpack.c.b16 %v2098, %v2094
    %v2159 = vpack.c.b16 %v2099, %v2095
    %v2160 = vpack.c.b16 %v2100, %v2096
    %v2161 = vpack.c.b16 %v2105, %v2101
    %v2162 = vpack.c.b16 %v2106, %v2102
    %v2163 = vpack.c.b16 %v2107, %v2103
    %v2164 = vpack.c.b16 %v2108, %v2104
    %v2165 = vpack.c.b16 %v2113, %v2109
    %v2166 = vpack.c.b16 %v2114, %v2110
    %v2167 = vpack.c.b16 %v2115, %v2111
    %v2168 = vpack.c.b16 %v2116, %v2112
    %v2169 = vpack.c.b16 %v2121, %v2117
    %v2170 = vpack.c.b16 %v2122, %v2118
    %v2171 = vpack.c.b16 %v2123, %v2119
    %v2172 = vpack.c.b16 %v2124, %v2120
    %v2173 = vpack.c.b16 %v2129, %v2125
    %v2174 = vpack.c.b16 %v2130, %v2126
    %v2175 = vpack.c.b16 %v2131, %v2127
    %v2176 = vpack.c.b16 %v2132, %v2128
    %v2177 = vpack.c.b16 %v2137, %v2133
    %v2178 = vpack.c.b16 %v2138, %v2134
    %v2179 = vpack.c.b16 %v2139, %v2135
    %v2180 = vpack.c.b16 %v2140, %v2136
    %v2181 = vpack.c.b16 %v2145, %v2141
    %v2182 = vpack.c.b16 %v2146, %v2142
    %v2183 = vpack.c.b16 %v2147, %v2143
    %v2184 = vpack.c.b16 %v2148, %v2144
    %v2185 = vpack.c.b16 %v2153, %v2149
    %v2186 = vpack.c.b16 %v2154, %v2150
    %v2187 = vpack.c.b16 %v2155, %v2151
    %v2188 = vpack.c.b16 %v2156, %v2152
    %2221 = vmatprep.subr.bf16.mxu0 %v2186
    %2222 = vmatpush1.bf16.msra.mxu0 %v2185
    %2223 = vmatprep.subr.bf16.mxu0 %v2182
    %2224 = vmatpush1.bf16.msra.mxu0 %v2181
    %2225 = vmatprep.subr.bf16.mxu0 %v2178
    %2226 = vmatpush1.bf16.msra.mxu0 %v2177
    %2227 = vmatprep.subr.bf16.mxu0 %v2174
    %2228 = vmatpush1.bf16.msra.mxu0 %v2173
    %2229 = vmatprep.subr.bf16.mxu0 %v2170
    %2230 = vmatpush1.bf16.msra.mxu0 %v2169
    %2231 = vmatprep.subr.bf16.mxu0 %v2166
    %2232 = vmatpush1.bf16.msra.mxu0 %v2165
    %2233 = vmatprep.subr.bf16.mxu0 %v2162
    %2234 = vmatpush1.bf16.msra.mxu0 %v2161
    %2235 = vmatprep.subr.bf16.mxu0 %v2158
    %2236 = vmatpush1.bf16.msra.mxu0 %v2157
    %2237 = vmatprep.subr.bf16.mxu0 0
    %2238 = vmatpush2.bf16.msra.mxu0 0
    %2239 = vmatprep.subr.bf16.mxu0 0
    %2240 = vmatpush2.bf16.msra.mxu0 0
    %2241 = vmatprep.subr.bf16.mxu0 0
    %2242 = vmatpush2.bf16.msra.mxu0 0
    %2243 = vmatprep.subr.bf16.mxu0 0
    %2244 = vmatpush2.bf16.msra.mxu0 0
    %2245 = vmatprep.subr.bf16.mxu0 0
    %2246 = vmatpush2.bf16.msra.mxu0 0
    %2247 = vmatprep.subr.bf16.mxu0 0
    %2248 = vmatpush2.bf16.msra.mxu0 0
    %2249 = vmatprep.subr.bf16.mxu0 0
    %2250 = vmatpush2.bf16.msra.mxu0 0
    %2251 = vmatprep.subr.bf16.mxu0 0
    %2252 = vmatpush2.bf16.msra.mxu0 0
    %2253 = vmatprep.mubr.bf16.mxu0 0
    %2254 = vmatmul.mubr.bf16.gmra.mxu0 %v2028
    %v2255 = vpop.f32.mrf.mxu0
    %v2256 = vadd.f32 0.0, %v2255
    %v2257 = vpop.f32.mrf.mxu0
    %v2258 = vadd.f32 0.0, %v2257
    %v2259 = vpop.f32.mrf.mxu0
    %v2260 = vpop.f32.mrf.mxu0
    %2261 = vdwg.mxu0
    %2262 = vmatprep.subr.bf16.mxu0 %v2188
    %2263 = vmatpush1.bf16.msra.mxu0 %v2187
    %2264 = vmatprep.subr.bf16.mxu0 %v2184
    %2265 = vmatpush1.bf16.msra.mxu0 %v2183
    %2266 = vmatprep.subr.bf16.mxu0 %v2180
    %2267 = vmatpush1.bf16.msra.mxu0 %v2179
    %2268 = vmatprep.subr.bf16.mxu0 %v2176
    %2269 = vmatpush1.bf16.msra.mxu0 %v2175
    %2270 = vmatprep.subr.bf16.mxu0 %v2172
    %2271 = vmatpush1.bf16.msra.mxu0 %v2171
    %2272 = vmatprep.subr.bf16.mxu0 %v2168
    %2273 = vmatpush1.bf16.msra.mxu0 %v2167
    %2274 = vmatprep.subr.bf16.mxu0 %v2164
    %2275 = vmatpush1.bf16.msra.mxu0 %v2163
    %2276 = vmatprep.subr.bf16.mxu0 %v2160
    %2277 = vmatpush1.bf16.msra.mxu0 %v2159
    %2278 = vmatprep.subr.bf16.mxu0 0
    %2279 = vmatpush2.bf16.msra.mxu0 0
    %2280 = vmatprep.subr.bf16.mxu0 0
    %2281 = vmatpush2.bf16.msra.mxu0 0
    %2282 = vmatprep.subr.bf16.mxu0 0
    %2283 = vmatpush2.bf16.msra.mxu0 0
    %2284 = vmatprep.subr.bf16.mxu0 0
    %2285 = vmatpush2.bf16.msra.mxu0 0
    %2286 = vmatprep.subr.bf16.mxu0 0
    %2287 = vmatpush2.bf16.msra.mxu0 0
    %2288 = vmatprep.subr.bf16.mxu0 0
    %2289 = vmatpush2.bf16.msra.mxu0 0
    %2290 = vmatprep.subr.bf16.mxu0 0
    %2291 = vmatpush2.bf16.msra.mxu0 0
    %2292 = vmatprep.subr.bf16.mxu0 0
    %2293 = vmatpush2.bf16.msra.mxu0 0
    %2294 = vmatprep.mubr.bf16.mxu0 0
    %2295 = vmatmul.mubr.bf16.gmra.mxu0 %v2028
    %v2296 = vpop.f32.mrf.mxu0
    %v2297 = vadd.f32 0.0, %v2296
    %v2298 = vpop.f32.mrf.mxu0
    %v2299 = vadd.f32 0.0, %v2298
    %v2300 = vpop.f32.mrf.mxu0
    %v2301 = vpop.f32.mrf.mxu0
    %2302 = vdwg.mxu0
    %v2303 = vadd.f32 %v2024, %v2256
    %v2304 = vadd.f32 %v2025, %v2258
    %v2305 = vadd.f32 %v2026, %v2297
    %v2306 = vadd.f32 %v2027, %v2299
    %v2307 = vxor.u32 %v2303, 2147483648
    %v2308 = vmul.f32 %v2307, 1.442695
    %v2309 = vpow.pop %v2308
    %v2310 = vadd.f32 %v2309, 1.0
    %v2311 = vrcp.pop %v2310
    %v2312 = vmul.f32 1.0, %v2311
    %v2313 = vxor.u32 %v2304, 2147483648
    %v2314 = vmul.f32 %v2313, 1.442695
    %v2315 = vpow.pop %v2314
    %v2316 = vadd.f32 %v2315, 1.0
    %v2317 = vrcp.pop %v2316
    %v2318 = vmul.f32 1.0, %v2317
    %v2319 = vtanh.pop %v2305
    %v2320 = vxor.u32 %v2306, 2147483648
    %v2321 = vmul.f32 %v2320, 1.442695
    %v2322 = vpow.pop %v2321
    %v2323 = vadd.f32 %v2322, 1.0
    %v2324 = vrcp.pop %v2323
    %v2325 = vmul.f32 1.0, %v2324
    %v2326 = vmul.f32 %v2318, %v2018
    %v2327 = vmul.f32 %v2312, %v2319
    %v2328 = vadd.f32 %v2326, %v2327
    %v2329 = vtanh.pop %v2328
    %v2330 = vmul.f32 %v2325, %v2329
    %s2331 = scalar_lea.vmem [#allocation3], 40
    %2332 = vst [vmem:[%s2331] sm:$0xff] %v2330
    %s2333 = scalar_lea.vmem [#allocation2], 192
    %v2334 = vld [vmem:[%s2333] sm:$0xff]
    %v2335 = vld [vmem:[%s2333 + $0x8] sm:$0xff]
    %v2336 = vld [vmem:[%s2333 + $0x10] sm:$0xff]
    %v2337 = vld [vmem:[%s2333 + $0x18] sm:$0xff]
    %v2338 = vpack.c.bf16 %v2330, %v2330
    %v2339 = vld [vmem:[#allocation4] sm:$0xff]
    %v2340 = vld [vmem:[#allocation4 + $0x8] sm:$0xff]
    %v2341 = vld [vmem:[#allocation4 + $0x10] sm:$0xff]
    %v2342 = vld [vmem:[#allocation4 + $0x18] sm:$0xff]
    %v2343 = vld [vmem:[#allocation4 + $0x20] sm:$0xff]
    %v2344 = vld [vmem:[#allocation4 + $0x28] sm:$0xff]
    %v2345 = vld [vmem:[#allocation4 + $0x30] sm:$0xff]
    %v2346 = vld [vmem:[#allocation4 + $0x38] sm:$0xff]
    %v2347 = vld [vmem:[#allocation4 + $0x40] sm:$0xff]
    %v2348 = vld [vmem:[#allocation4 + $0x48] sm:$0xff]
    %v2349 = vld [vmem:[#allocation4 + $0x50] sm:$0xff]
    %v2350 = vld [vmem:[#allocation4 + $0x58] sm:$0xff]
    %v2351 = vld [vmem:[#allocation4 + $0x60] sm:$0xff]
    %v2352 = vld [vmem:[#allocation4 + $0x68] sm:$0xff]
    %v2353 = vld [vmem:[#allocation4 + $0x70] sm:$0xff]
    %v2354 = vld [vmem:[#allocation4 + $0x78] sm:$0xff]
    %v2355 = vld [vmem:[#allocation4 + $0x80] sm:$0xff]
    %v2356 = vld [vmem:[#allocation4 + $0x88] sm:$0xff]
    %v2357 = vld [vmem:[#allocation4 + $0x90] sm:$0xff]
    %v2358 = vld [vmem:[#allocation4 + $0x98] sm:$0xff]
    %v2359 = vld [vmem:[#allocation4 + $0xa0] sm:$0xff]
    %v2360 = vld [vmem:[#allocation4 + $0xa8] sm:$0xff]
    %v2361 = vld [vmem:[#allocation4 + $0xb0] sm:$0xff]
    %v2362 = vld [vmem:[#allocation4 + $0xb8] sm:$0xff]
    %v2363 = vld [vmem:[#allocation4 + $0xc0] sm:$0xff]
    %v2364 = vld [vmem:[#allocation4 + $0xc8] sm:$0xff]
    %v2365 = vld [vmem:[#allocation4 + $0xd0] sm:$0xff]
    %v2366 = vld [vmem:[#allocation4 + $0xd8] sm:$0xff]
    %v2367 = vld [vmem:[#allocation4 + $0xe0] sm:$0xff]
    %v2368 = vld [vmem:[#allocation4 + $0xe8] sm:$0xff]
    %v2369 = vld [vmem:[#allocation4 + $0xf0] sm:$0xff]
    %v2370 = vld [vmem:[#allocation4 + $0xf8] sm:$0xff]
    %v2403 = vunpack.c.l.b16 %v2339
    %v2404 = vunpack.c.h.b16 %v2339
    %v2405 = vunpack.c.l.b16 %v2340
    %v2406 = vunpack.c.h.b16 %v2340
    %v2407 = vunpack.c.l.b16 %v2341
    %v2408 = vunpack.c.h.b16 %v2341
    %v2409 = vunpack.c.l.b16 %v2342
    %v2410 = vunpack.c.h.b16 %v2342
    %v2411 = vunpack.c.l.b16 %v2343
    %v2412 = vunpack.c.h.b16 %v2343
    %v2413 = vunpack.c.l.b16 %v2344
    %v2414 = vunpack.c.h.b16 %v2344
    %v2415 = vunpack.c.l.b16 %v2345
    %v2416 = vunpack.c.h.b16 %v2345
    %v2417 = vunpack.c.l.b16 %v2346
    %v2418 = vunpack.c.h.b16 %v2346
    %v2419 = vunpack.c.l.b16 %v2347
    %v2420 = vunpack.c.h.b16 %v2347
    %v2421 = vunpack.c.l.b16 %v2348
    %v2422 = vunpack.c.h.b16 %v2348
    %v2423 = vunpack.c.l.b16 %v2349
    %v2424 = vunpack.c.h.b16 %v2349
    %v2425 = vunpack.c.l.b16 %v2350
    %v2426 = vunpack.c.h.b16 %v2350
    %v2427 = vunpack.c.l.b16 %v2351
    %v2428 = vunpack.c.h.b16 %v2351
    %v2429 = vunpack.c.l.b16 %v2352
    %v2430 = vunpack.c.h.b16 %v2352
    %v2431 = vunpack.c.l.b16 %v2353
    %v2432 = vunpack.c.h.b16 %v2353
    %v2433 = vunpack.c.l.b16 %v2354
    %v2434 = vunpack.c.h.b16 %v2354
    %v2435 = vunpack.c.l.b16 %v2355
    %v2436 = vunpack.c.h.b16 %v2355
    %v2437 = vunpack.c.l.b16 %v2356
    %v2438 = vunpack.c.h.b16 %v2356
    %v2439 = vunpack.c.l.b16 %v2357
    %v2440 = vunpack.c.h.b16 %v2357
    %v2441 = vunpack.c.l.b16 %v2358
    %v2442 = vunpack.c.h.b16 %v2358
    %v2443 = vunpack.c.l.b16 %v2359
    %v2444 = vunpack.c.h.b16 %v2359
    %v2445 = vunpack.c.l.b16 %v2360
    %v2446 = vunpack.c.h.b16 %v2360
    %v2447 = vunpack.c.l.b16 %v2361
    %v2448 = vunpack.c.h.b16 %v2361
    %v2449 = vunpack.c.l.b16 %v2362
    %v2450 = vunpack.c.h.b16 %v2362
    %v2451 = vunpack.c.l.b16 %v2363
    %v2452 = vunpack.c.h.b16 %v2363
    %v2453 = vunpack.c.l.b16 %v2364
    %v2454 = vunpack.c.h.b16 %v2364
    %v2455 = vunpack.c.l.b16 %v2365
    %v2456 = vunpack.c.h.b16 %v2365
    %v2457 = vunpack.c.l.b16 %v2366
    %v2458 = vunpack.c.h.b16 %v2366
    %v2459 = vunpack.c.l.b16 %v2367
    %v2460 = vunpack.c.h.b16 %v2367
    %v2461 = vunpack.c.l.b16 %v2368
    %v2462 = vunpack.c.h.b16 %v2368
    %v2463 = vunpack.c.l.b16 %v2369
    %v2464 = vunpack.c.h.b16 %v2369
    %v2465 = vunpack.c.l.b16 %v2370
    %v2466 = vunpack.c.h.b16 %v2370
    %v2467 = vpack.c.b16 %v2407, %v2403
    %v2468 = vpack.c.b16 %v2408, %v2404
    %v2469 = vpack.c.b16 %v2409, %v2405
    %v2470 = vpack.c.b16 %v2410, %v2406
    %v2471 = vpack.c.b16 %v2415, %v2411
    %v2472 = vpack.c.b16 %v2416, %v2412
    %v2473 = vpack.c.b16 %v2417, %v2413
    %v2474 = vpack.c.b16 %v2418, %v2414
    %v2475 = vpack.c.b16 %v2423, %v2419
    %v2476 = vpack.c.b16 %v2424, %v2420
    %v2477 = vpack.c.b16 %v2425, %v2421
    %v2478 = vpack.c.b16 %v2426, %v2422
    %v2479 = vpack.c.b16 %v2431, %v2427
    %v2480 = vpack.c.b16 %v2432, %v2428
    %v2481 = vpack.c.b16 %v2433, %v2429
    %v2482 = vpack.c.b16 %v2434, %v2430
    %v2483 = vpack.c.b16 %v2439, %v2435
    %v2484 = vpack.c.b16 %v2440, %v2436
    %v2485 = vpack.c.b16 %v2441, %v2437
    %v2486 = vpack.c.b16 %v2442, %v2438
    %v2487 = vpack.c.b16 %v2447, %v2443
    %v2488 = vpack.c.b16 %v2448, %v2444
    %v2489 = vpack.c.b16 %v2449, %v2445
    %v2490 = vpack.c.b16 %v2450, %v2446
    %v2491 = vpack.c.b16 %v2455, %v2451
    %v2492 = vpack.c.b16 %v2456, %v2452
    %v2493 = vpack.c.b16 %v2457, %v2453
    %v2494 = vpack.c.b16 %v2458, %v2454
    %v2495 = vpack.c.b16 %v2463, %v2459
    %v2496 = vpack.c.b16 %v2464, %v2460
    %v2497 = vpack.c.b16 %v2465, %v2461
    %v2498 = vpack.c.b16 %v2466, %v2462
    %2531 = vmatprep.subr.bf16.mxu0 %v2496
    %2532 = vmatpush1.bf16.msra.mxu0 %v2495
    %2533 = vmatprep.subr.bf16.mxu0 %v2492
    %2534 = vmatpush1.bf16.msra.mxu0 %v2491
    %2535 = vmatprep.subr.bf16.mxu0 %v2488
    %2536 = vmatpush1.bf16.msra.mxu0 %v2487
    %2537 = vmatprep.subr.bf16.mxu0 %v2484
    %2538 = vmatpush1.bf16.msra.mxu0 %v2483
    %2539 = vmatprep.subr.bf16.mxu0 %v2480
    %2540 = vmatpush1.bf16.msra.mxu0 %v2479
    %2541 = vmatprep.subr.bf16.mxu0 %v2476
    %2542 = vmatpush1.bf16.msra.mxu0 %v2475
    %2543 = vmatprep.subr.bf16.mxu0 %v2472
    %2544 = vmatpush1.bf16.msra.mxu0 %v2471
    %2545 = vmatprep.subr.bf16.mxu0 %v2468
    %2546 = vmatpush1.bf16.msra.mxu0 %v2467
    %2547 = vmatprep.subr.bf16.mxu0 0
    %2548 = vmatpush2.bf16.msra.mxu0 0
    %2549 = vmatprep.subr.bf16.mxu0 0
    %2550 = vmatpush2.bf16.msra.mxu0 0
    %2551 = vmatprep.subr.bf16.mxu0 0
    %2552 = vmatpush2.bf16.msra.mxu0 0
    %2553 = vmatprep.subr.bf16.mxu0 0
    %2554 = vmatpush2.bf16.msra.mxu0 0
    %2555 = vmatprep.subr.bf16.mxu0 0
    %2556 = vmatpush2.bf16.msra.mxu0 0
    %2557 = vmatprep.subr.bf16.mxu0 0
    %2558 = vmatpush2.bf16.msra.mxu0 0
    %2559 = vmatprep.subr.bf16.mxu0 0
    %2560 = vmatpush2.bf16.msra.mxu0 0
    %2561 = vmatprep.subr.bf16.mxu0 0
    %2562 = vmatpush2.bf16.msra.mxu0 0
    %2563 = vmatprep.mubr.bf16.mxu0 0
    %2564 = vmatmul.mubr.bf16.gmra.mxu0 %v2338
    %v2565 = vpop.f32.mrf.mxu0
    %v2566 = vadd.f32 0.0, %v2565
    %v2567 = vpop.f32.mrf.mxu0
    %v2568 = vadd.f32 0.0, %v2567
    %v2569 = vpop.f32.mrf.mxu0
    %v2570 = vpop.f32.mrf.mxu0
    %2571 = vdwg.mxu0
    %2572 = vmatprep.subr.bf16.mxu0 %v2498
    %2573 = vmatpush1.bf16.msra.mxu0 %v2497
    %2574 = vmatprep.subr.bf16.mxu0 %v2494
    %2575 = vmatpush1.bf16.msra.mxu0 %v2493
    %2576 = vmatprep.subr.bf16.mxu0 %v2490
    %2577 = vmatpush1.bf16.msra.mxu0 %v2489
    %2578 = vmatprep.subr.bf16.mxu0 %v2486
    %2579 = vmatpush1.bf16.msra.mxu0 %v2485
    %2580 = vmatprep.subr.bf16.mxu0 %v2482
    %2581 = vmatpush1.bf16.msra.mxu0 %v2481
    %2582 = vmatprep.subr.bf16.mxu0 %v2478
    %2583 = vmatpush1.bf16.msra.mxu0 %v2477
    %2584 = vmatprep.subr.bf16.mxu0 %v2474
    %2585 = vmatpush1.bf16.msra.mxu0 %v2473
    %2586 = vmatprep.subr.bf16.mxu0 %v2470
    %2587 = vmatpush1.bf16.msra.mxu0 %v2469
    %2588 = vmatprep.subr.bf16.mxu0 0
    %2589 = vmatpush2.bf16.msra.mxu0 0
    %2590 = vmatprep.subr.bf16.mxu0 0
    %2591 = vmatpush2.bf16.msra.mxu0 0
    %2592 = vmatprep.subr.bf16.mxu0 0
    %2593 = vmatpush2.bf16.msra.mxu0 0
    %2594 = vmatprep.subr.bf16.mxu0 0
    %2595 = vmatpush2.bf16.msra.mxu0 0
    %2596 = vmatprep.subr.bf16.mxu0 0
    %2597 = vmatpush2.bf16.msra.mxu0 0
    %2598 = vmatprep.subr.bf16.mxu0 0
    %2599 = vmatpush2.bf16.msra.mxu0 0
    %2600 = vmatprep.subr.bf16.mxu0 0
    %2601 = vmatpush2.bf16.msra.mxu0 0
    %2602 = vmatprep.subr.bf16.mxu0 0
    %2603 = vmatpush2.bf16.msra.mxu0 0
    %2604 = vmatprep.mubr.bf16.mxu0 0
    %2605 = vmatmul.mubr.bf16.gmra.mxu0 %v2338
    %v2606 = vpop.f32.mrf.mxu0
    %v2607 = vadd.f32 0.0, %v2606
    %v2608 = vpop.f32.mrf.mxu0
    %v2609 = vadd.f32 0.0, %v2608
    %v2610 = vpop.f32.mrf.mxu0
    %v2611 = vpop.f32.mrf.mxu0
    %2612 = vdwg.mxu0
    %v2613 = vadd.f32 %v2334, %v2566
    %v2614 = vadd.f32 %v2335, %v2568
    %v2615 = vadd.f32 %v2336, %v2607
    %v2616 = vadd.f32 %v2337, %v2609
    %v2617 = vxor.u32 %v2613, 2147483648
    %v2618 = vmul.f32 %v2617, 1.442695
    %v2619 = vpow.pop %v2618
    %v2620 = vadd.f32 %v2619, 1.0
    %v2621 = vrcp.pop %v2620
    %v2622 = vmul.f32 1.0, %v2621
    %v2623 = vxor.u32 %v2614, 2147483648
    %v2624 = vmul.f32 %v2623, 1.442695
    %v2625 = vpow.pop %v2624
    %v2626 = vadd.f32 %v2625, 1.0
    %v2627 = vrcp.pop %v2626
    %v2628 = vmul.f32 1.0, %v2627
    %v2629 = vtanh.pop %v2615
    %v2630 = vxor.u32 %v2616, 2147483648
    %v2631 = vmul.f32 %v2630, 1.442695
    %v2632 = vpow.pop %v2631
    %v2633 = vadd.f32 %v2632, 1.0
    %v2634 = vrcp.pop %v2633
    %v2635 = vmul.f32 1.0, %v2634
    %v2636 = vmul.f32 %v2628, %v2328
    %v2637 = vmul.f32 %v2622, %v2629
    %v2638 = vadd.f32 %v2636, %v2637
    %v2639 = vtanh.pop %v2638
    %v2640 = vmul.f32 %v2635, %v2639
    %s2641 = scalar_lea.vmem [#allocation3], 48
    %2642 = vst [vmem:[%s2641] sm:$0xff] %v2640
    %s2643 = scalar_lea.vmem [#allocation2], 224
    %v2644 = vld [vmem:[%s2643] sm:$0xff]
    %v2645 = vld [vmem:[%s2643 + $0x8] sm:$0xff]
    %v2646 = vld [vmem:[%s2643 + $0x10] sm:$0xff]
    %v2647 = vld [vmem:[%s2643 + $0x18] sm:$0xff]
    %v2648 = vpack.c.bf16 %v2640, %v2640
    %v2649 = vld [vmem:[#allocation4] sm:$0xff]
    %v2650 = vld [vmem:[#allocation4 + $0x8] sm:$0xff]
    %v2651 = vld [vmem:[#allocation4 + $0x10] sm:$0xff]
    %v2652 = vld [vmem:[#allocation4 + $0x18] sm:$0xff]
    %v2653 = vld [vmem:[#allocation4 + $0x20] sm:$0xff]
    %v2654 = vld [vmem:[#allocation4 + $0x28] sm:$0xff]
    %v2655 = vld [vmem:[#allocation4 + $0x30] sm:$0xff]
    %v2656 = vld [vmem:[#allocation4 + $0x38] sm:$0xff]
    %v2657 = vld [vmem:[#allocation4 + $0x40] sm:$0xff]
    %v2658 = vld [vmem:[#allocation4 + $0x48] sm:$0xff]
    %v2659 = vld [vmem:[#allocation4 + $0x50] sm:$0xff]
    %v2660 = vld [vmem:[#allocation4 + $0x58] sm:$0xff]
    %v2661 = vld [vmem:[#allocation4 + $0x60] sm:$0xff]
    %v2662 = vld [vmem:[#allocation4 + $0x68] sm:$0xff]
    %v2663 = vld [vmem:[#allocation4 + $0x70] sm:$0xff]
    %v2664 = vld [vmem:[#allocation4 + $0x78] sm:$0xff]
    %v2665 = vld [vmem:[#allocation4 + $0x80] sm:$0xff]
    %v2666 = vld [vmem:[#allocation4 + $0x88] sm:$0xff]
    %v2667 = vld [vmem:[#allocation4 + $0x90] sm:$0xff]
    %v2668 = vld [vmem:[#allocation4 + $0x98] sm:$0xff]
    %v2669 = vld [vmem:[#allocation4 + $0xa0] sm:$0xff]
    %v2670 = vld [vmem:[#allocation4 + $0xa8] sm:$0xff]
    %v2671 = vld [vmem:[#allocation4 + $0xb0] sm:$0xff]
    %v2672 = vld [vmem:[#allocation4 + $0xb8] sm:$0xff]
    %v2673 = vld [vmem:[#allocation4 + $0xc0] sm:$0xff]
    %v2674 = vld [vmem:[#allocation4 + $0xc8] sm:$0xff]
    %v2675 = vld [vmem:[#allocation4 + $0xd0] sm:$0xff]
    %v2676 = vld [vmem:[#allocation4 + $0xd8] sm:$0xff]
    %v2677 = vld [vmem:[#allocation4 + $0xe0] sm:$0xff]
    %v2678 = vld [vmem:[#allocation4 + $0xe8] sm:$0xff]
    %v2679 = vld [vmem:[#allocation4 + $0xf0] sm:$0xff]
    %v2680 = vld [vmem:[#allocation4 + $0xf8] sm:$0xff]
    %v2713 = vunpack.c.l.b16 %v2649
    %v2714 = vunpack.c.h.b16 %v2649
    %v2715 = vunpack.c.l.b16 %v2650
    %v2716 = vunpack.c.h.b16 %v2650
    %v2717 = vunpack.c.l.b16 %v2651
    %v2718 = vunpack.c.h.b16 %v2651
    %v2719 = vunpack.c.l.b16 %v2652
    %v2720 = vunpack.c.h.b16 %v2652
    %v2721 = vunpack.c.l.b16 %v2653
    %v2722 = vunpack.c.h.b16 %v2653
    %v2723 = vunpack.c.l.b16 %v2654
    %v2724 = vunpack.c.h.b16 %v2654
    %v2725 = vunpack.c.l.b16 %v2655
    %v2726 = vunpack.c.h.b16 %v2655
    %v2727 = vunpack.c.l.b16 %v2656
    %v2728 = vunpack.c.h.b16 %v2656
    %v2729 = vunpack.c.l.b16 %v2657
    %v2730 = vunpack.c.h.b16 %v2657
    %v2731 = vunpack.c.l.b16 %v2658
    %v2732 = vunpack.c.h.b16 %v2658
    %v2733 = vunpack.c.l.b16 %v2659
    %v2734 = vunpack.c.h.b16 %v2659
    %v2735 = vunpack.c.l.b16 %v2660
    %v2736 = vunpack.c.h.b16 %v2660
    %v2737 = vunpack.c.l.b16 %v2661
    %v2738 = vunpack.c.h.b16 %v2661
    %v2739 = vunpack.c.l.b16 %v2662
    %v2740 = vunpack.c.h.b16 %v2662
    %v2741 = vunpack.c.l.b16 %v2663
    %v2742 = vunpack.c.h.b16 %v2663
    %v2743 = vunpack.c.l.b16 %v2664
    %v2744 = vunpack.c.h.b16 %v2664
    %v2745 = vunpack.c.l.b16 %v2665
    %v2746 = vunpack.c.h.b16 %v2665
    %v2747 = vunpack.c.l.b16 %v2666
    %v2748 = vunpack.c.h.b16 %v2666
    %v2749 = vunpack.c.l.b16 %v2667
    %v2750 = vunpack.c.h.b16 %v2667
    %v2751 = vunpack.c.l.b16 %v2668
    %v2752 = vunpack.c.h.b16 %v2668
    %v2753 = vunpack.c.l.b16 %v2669
    %v2754 = vunpack.c.h.b16 %v2669
    %v2755 = vunpack.c.l.b16 %v2670
    %v2756 = vunpack.c.h.b16 %v2670
    %v2757 = vunpack.c.l.b16 %v2671
    %v2758 = vunpack.c.h.b16 %v2671
    %v2759 = vunpack.c.l.b16 %v2672
    %v2760 = vunpack.c.h.b16 %v2672
    %v2761 = vunpack.c.l.b16 %v2673
    %v2762 = vunpack.c.h.b16 %v2673
    %v2763 = vunpack.c.l.b16 %v2674
    %v2764 = vunpack.c.h.b16 %v2674
    %v2765 = vunpack.c.l.b16 %v2675
    %v2766 = vunpack.c.h.b16 %v2675
    %v2767 = vunpack.c.l.b16 %v2676
    %v2768 = vunpack.c.h.b16 %v2676
    %v2769 = vunpack.c.l.b16 %v2677
    %v2770 = vunpack.c.h.b16 %v2677
    %v2771 = vunpack.c.l.b16 %v2678
    %v2772 = vunpack.c.h.b16 %v2678
    %v2773 = vunpack.c.l.b16 %v2679
    %v2774 = vunpack.c.h.b16 %v2679
    %v2775 = vunpack.c.l.b16 %v2680
    %v2776 = vunpack.c.h.b16 %v2680
    %v2777 = vpack.c.b16 %v2717, %v2713
    %v2778 = vpack.c.b16 %v2718, %v2714
    %v2779 = vpack.c.b16 %v2719, %v2715
    %v2780 = vpack.c.b16 %v2720, %v2716
    %v2781 = vpack.c.b16 %v2725, %v2721
    %v2782 = vpack.c.b16 %v2726, %v2722
    %v2783 = vpack.c.b16 %v2727, %v2723
    %v2784 = vpack.c.b16 %v2728, %v2724
    %v2785 = vpack.c.b16 %v2733, %v2729
    %v2786 = vpack.c.b16 %v2734, %v2730
    %v2787 = vpack.c.b16 %v2735, %v2731
    %v2788 = vpack.c.b16 %v2736, %v2732
    %v2789 = vpack.c.b16 %v2741, %v2737
    %v2790 = vpack.c.b16 %v2742, %v2738
    %v2791 = vpack.c.b16 %v2743, %v2739
    %v2792 = vpack.c.b16 %v2744, %v2740
    %v2793 = vpack.c.b16 %v2749, %v2745
    %v2794 = vpack.c.b16 %v2750, %v2746
    %v2795 = vpack.c.b16 %v2751, %v2747
    %v2796 = vpack.c.b16 %v2752, %v2748
    %v2797 = vpack.c.b16 %v2757, %v2753
    %v2798 = vpack.c.b16 %v2758, %v2754
    %v2799 = vpack.c.b16 %v2759, %v2755
    %v2800 = vpack.c.b16 %v2760, %v2756
    %v2801 = vpack.c.b16 %v2765, %v2761
    %v2802 = vpack.c.b16 %v2766, %v2762
    %v2803 = vpack.c.b16 %v2767, %v2763
    %v2804 = vpack.c.b16 %v2768, %v2764
    %v2805 = vpack.c.b16 %v2773, %v2769
    %v2806 = vpack.c.b16 %v2774, %v2770
    %v2807 = vpack.c.b16 %v2775, %v2771
    %v2808 = vpack.c.b16 %v2776, %v2772
    %2841 = vmatprep.subr.bf16.mxu0 %v2806
    %2842 = vmatpush1.bf16.msra.mxu0 %v2805
    %2843 = vmatprep.subr.bf16.mxu0 %v2802
    %2844 = vmatpush1.bf16.msra.mxu0 %v2801
    %2845 = vmatprep.subr.bf16.mxu0 %v2798
    %2846 = vmatpush1.bf16.msra.mxu0 %v2797
    %2847 = vmatprep.subr.bf16.mxu0 %v2794
    %2848 = vmatpush1.bf16.msra.mxu0 %v2793
    %2849 = vmatprep.subr.bf16.mxu0 %v2790
    %2850 = vmatpush1.bf16.msra.mxu0 %v2789
    %2851 = vmatprep.subr.bf16.mxu0 %v2786
    %2852 = vmatpush1.bf16.msra.mxu0 %v2785
    %2853 = vmatprep.subr.bf16.mxu0 %v2782
    %2854 = vmatpush1.bf16.msra.mxu0 %v2781
    %2855 = vmatprep.subr.bf16.mxu0 %v2778
    %2856 = vmatpush1.bf16.msra.mxu0 %v2777
    %2857 = vmatprep.subr.bf16.mxu0 0
    %2858 = vmatpush2.bf16.msra.mxu0 0
    %2859 = vmatprep.subr.bf16.mxu0 0
    %2860 = vmatpush2.bf16.msra.mxu0 0
    %2861 = vmatprep.subr.bf16.mxu0 0
    %2862 = vmatpush2.bf16.msra.mxu0 0
    %2863 = vmatprep.subr.bf16.mxu0 0
    %2864 = vmatpush2.bf16.msra.mxu0 0
    %2865 = vmatprep.subr.bf16.mxu0 0
    %2866 = vmatpush2.bf16.msra.mxu0 0
    %2867 = vmatprep.subr.bf16.mxu0 0
    %2868 = vmatpush2.bf16.msra.mxu0 0
    %2869 = vmatprep.subr.bf16.mxu0 0
    %2870 = vmatpush2.bf16.msra.mxu0 0
    %2871 = vmatprep.subr.bf16.mxu0 0
    %2872 = vmatpush2.bf16.msra.mxu0 0
    %2873 = vmatprep.mubr.bf16.mxu0 0
    %2874 = vmatmul.mubr.bf16.gmra.mxu0 %v2648
    %v2875 = vpop.f32.mrf.mxu0
    %v2876 = vadd.f32 0.0, %v2875
    %v2877 = vpop.f32.mrf.mxu0
    %v2878 = vadd.f32 0.0, %v2877
    %v2879 = vpop.f32.mrf.mxu0
    %v2880 = vpop.f32.mrf.mxu0
    %2881 = vdwg.mxu0
    %2882 = vmatprep.subr.bf16.mxu0 %v2808
    %2883 = vmatpush1.bf16.msra.mxu0 %v2807
    %2884 = vmatprep.subr.bf16.mxu0 %v2804
    %2885 = vmatpush1.bf16.msra.mxu0 %v2803
    %2886 = vmatprep.subr.bf16.mxu0 %v2800
    %2887 = vmatpush1.bf16.msra.mxu0 %v2799
    %2888 = vmatprep.subr.bf16.mxu0 %v2796
    %2889 = vmatpush1.bf16.msra.mxu0 %v2795
    %2890 = vmatprep.subr.bf16.mxu0 %v2792
    %2891 = vmatpush1.bf16.msra.mxu0 %v2791
    %2892 = vmatprep.subr.bf16.mxu0 %v2788
    %2893 = vmatpush1.bf16.msra.mxu0 %v2787
    %2894 = vmatprep.subr.bf16.mxu0 %v2784
    %2895 = vmatpush1.bf16.msra.mxu0 %v2783
    %2896 = vmatprep.subr.bf16.mxu0 %v2780
    %2897 = vmatpush1.bf16.msra.mxu0 %v2779
    %2898 = vmatprep.subr.bf16.mxu0 0
    %2899 = vmatpush2.bf16.msra.mxu0 0
    %2900 = vmatprep.subr.bf16.mxu0 0
    %2901 = vmatpush2.bf16.msra.mxu0 0
    %2902 = vmatprep.subr.bf16.mxu0 0
    %2903 = vmatpush2.bf16.msra.mxu0 0
    %2904 = vmatprep.subr.bf16.mxu0 0
    %2905 = vmatpush2.bf16.msra.mxu0 0
    %2906 = vmatprep.subr.bf16.mxu0 0
    %2907 = vmatpush2.bf16.msra.mxu0 0
    %2908 = vmatprep.subr.bf16.mxu0 0
    %2909 = vmatpush2.bf16.msra.mxu0 0
    %2910 = vmatprep.subr.bf16.mxu0 0
    %2911 = vmatpush2.bf16.msra.mxu0 0
    %2912 = vmatprep.subr.bf16.mxu0 0
    %2913 = vmatpush2.bf16.msra.mxu0 0
    %2914 = vmatprep.mubr.bf16.mxu0 0
    %2915 = vmatmul.mubr.bf16.gmra.mxu0 %v2648
    %v2916 = vpop.f32.mrf.mxu0
    %v2917 = vadd.f32 0.0, %v2916
    %v2918 = vpop.f32.mrf.mxu0
    %v2919 = vadd.f32 0.0, %v2918
    %v2920 = vpop.f32.mrf.mxu0
    %v2921 = vpop.f32.mrf.mxu0
    %2922 = vdwg.mxu0
    %v2923 = vadd.f32 %v2644, %v2876
    %v2924 = vadd.f32 %v2645, %v2878
    %v2925 = vadd.f32 %v2646, %v2917
    %v2926 = vadd.f32 %v2647, %v2919
    %v2927 = vxor.u32 %v2923, 2147483648
    %v2928 = vmul.f32 %v2927, 1.442695
    %v2929 = vpow.pop %v2928
    %v2930 = vadd.f32 %v2929, 1.0
    %v2931 = vrcp.pop %v2930
    %v2932 = vmul.f32 1.0, %v2931
    %v2933 = vxor.u32 %v2924, 2147483648
    %v2934 = vmul.f32 %v2933, 1.442695
    %v2935 = vpow.pop %v2934
    %v2936 = vadd.f32 %v2935, 1.0
    %v2937 = vrcp.pop %v2936
    %v2938 = vmul.f32 1.0, %v2937
    %v2939 = vtanh.pop %v2925
    %v2940 = vxor.u32 %v2926, 2147483648
    %v2941 = vmul.f32 %v2940, 1.442695
    %v2942 = vpow.pop %v2941
    %v2943 = vadd.f32 %v2942, 1.0
    %v2944 = vrcp.pop %v2943
    %v2945 = vmul.f32 1.0, %v2944
    %v2946 = vmul.f32 %v2938, %v2638
    %v2947 = vmul.f32 %v2932, %v2939
    %v2948 = vadd.f32 %v2946, %v2947
    %v2949 = vtanh.pop %v2948
    %v2950 = vmul.f32 %v2945, %v2949
    %s2951 = scalar_lea.vmem [#allocation3], 56
    %2952 = vst [vmem:[%s2951] sm:$0xff] %v2950
    %2953 = vst [vmem:[#allocation8] sm:$0xff] %v2950
    %2954 = vst [vmem:[#allocation10] sm:$0xff] %v2948
    %v2955 = vld [vmem:[#allocation3] sm:$0xff]
    %v2956 = vld [vmem:[#allocation3 + $0x8] sm:$0xff]
    %v2957 = vld [vmem:[#allocation3 + $0x10] sm:$0xff]
    %v2958 = vld [vmem:[#allocation3 + $0x18] sm:$0xff]
    %v2959 = vld [vmem:[#allocation3 + $0x20] sm:$0xff]
    %v2960 = vld [vmem:[#allocation3 + $0x28] sm:$0xff]
    %v2961 = vld [vmem:[#allocation3 + $0x30] sm:$0xff]
    %v2962 = vld [vmem:[#allocation3 + $0x38] sm:$0xff]
    %v2963 = vpack.c.bf16 %v2956, %v2955
    %v2964 = vpack.c.bf16 %v2958, %v2957
    %v2965 = vpack.c.bf16 %v2960, %v2959
    %v2966 = vpack.c.bf16 %v2962, %v2961
    %v2967 = vld [vmem:[%s4] sm:$0xf]
    %v2968 = vld [vmem:[%s4 + $0x4] sm:$0xf]
    %v2969 = vld [vmem:[%s4 + $0x8] sm:$0xf]
    %v2970 = vld [vmem:[%s4 + $0xc] sm:$0xf]
    %v2971 = vld [vmem:[%s4 + $0x10] sm:$0xf]
    %v2972 = vld [vmem:[%s4 + $0x14] sm:$0xf]
    %v2973 = vld [vmem:[%s4 + $0x18] sm:$0xf]
    %v2974 = vld [vmem:[%s4 + $0x1c] sm:$0xf]
    %v2975 = vld [vmem:[%s4 + $0x20] sm:$0xf]
    %v2976 = vld [vmem:[%s4 + $0x24] sm:$0xf]
    %v2977 = vld [vmem:[%s4 + $0x28] sm:$0xf]
    %v2978 = vld [vmem:[%s4 + $0x2c] sm:$0xf]
    %v2979 = vld [vmem:[%s4 + $0x30] sm:$0xf]
    %v2980 = vld [vmem:[%s4 + $0x34] sm:$0xf]
    %v2981 = vld [vmem:[%s4 + $0x38] sm:$0xf]
    %v2982 = vld [vmem:[%s4 + $0x3c] sm:$0xf]
    %v2983 = vld [vmem:[%s5] sm:$0x1]
    %v2985 = vlaneseq
    %v2986 = vshrl.u32 %v2985, 7
    %v2987 = vsub.s32 0, %v2986
    %v2988 = vrot.slane %v2983, %v2987
    %v3006 = vunpack.c.l.b16 %v2967
    %v3007 = vunpack.c.l.b16 %v2968
    %v3008 = vunpack.c.l.b16 %v2969
    %v3009 = vunpack.c.l.b16 %v2970
    %v3010 = vunpack.c.l.b16 %v2971
    %v3011 = vunpack.c.l.b16 %v2972
    %v3012 = vunpack.c.l.b16 %v2973
    %v3013 = vunpack.c.l.b16 %v2974
    %v3014 = vunpack.c.l.b16 %v2975
    %v3015 = vunpack.c.l.b16 %v2976
    %v3016 = vunpack.c.l.b16 %v2977
    %v3017 = vunpack.c.l.b16 %v2978
    %v3018 = vunpack.c.l.b16 %v2979
    %v3019 = vunpack.c.l.b16 %v2980
    %v3020 = vunpack.c.l.b16 %v2981
    %v3021 = vunpack.c.l.b16 %v2982
    %v3022 = vpack.c.b16 %v3007, %v3006
    %v3023 = vpack.c.b16 %v3009, %v3008
    %v3024 = vpack.c.b16 %v3011, %v3010
    %v3025 = vpack.c.b16 %v3013, %v3012
    %v3026 = vpack.c.b16 %v3015, %v3014
    %v3027 = vpack.c.b16 %v3017, %v3016
    %v3028 = vpack.c.b16 %v3019, %v3018
    %v3029 = vpack.c.b16 %v3021, %v3020
    %3038 = vmatprep.subr.bf16.mxu0 0
    %3039 = vmatpush1.bf16.msra.mxu0 %v3029
    %3040 = vmatprep.subr.bf16.mxu0 0
    %3041 = vmatpush1.bf16.msra.mxu0 %v3028
    %3042 = vmatprep.subr.bf16.mxu0 0
    %3043 = vmatpush1.bf16.msra.mxu0 %v3027
    %3044 = vmatprep.subr.bf16.mxu0 0
    %3045 = vmatpush1.bf16.msra.mxu0 %v3026
    %3046 = vmatprep.subr.bf16.mxu0 0
    %3047 = vmatpush1.bf16.msra.mxu0 %v3025
    %3048 = vmatprep.subr.bf16.mxu0 0
    %3049 = vmatpush1.bf16.msra.mxu0 %v3024
    %3050 = vmatprep.subr.bf16.mxu0 0
    %3051 = vmatpush1.bf16.msra.mxu0 %v3023
    %3052 = vmatprep.subr.bf16.mxu0 0
    %3053 = vmatpush1.bf16.msra.mxu0 %v3022
    %3054 = vmatprep.subr.bf16.mxu0 0
    %3055 = vmatpush2.bf16.msra.mxu0 0
    %3056 = vmatprep.subr.bf16.mxu0 0
    %3057 = vmatpush2.bf16.msra.mxu0 0
    %3058 = vmatprep.subr.bf16.mxu0 0
    %3059 = vmatpush2.bf16.msra.mxu0 0
    %3060 = vmatprep.subr.bf16.mxu0 0
    %3061 = vmatpush2.bf16.msra.mxu0 0
    %3062 = vmatprep.subr.bf16.mxu0 0
    %3063 = vmatpush2.bf16.msra.mxu0 0
    %3064 = vmatprep.subr.bf16.mxu0 0
    %3065 = vmatpush2.bf16.msra.mxu0 0
    %3066 = vmatprep.subr.bf16.mxu0 0
    %3067 = vmatpush2.bf16.msra.mxu0 0
    %3068 = vmatprep.subr.bf16.mxu0 0
    %3069 = vmatpush2.bf16.msra.mxu0 0
    %3070 = vmatprep.mubr.bf16.mxu0 0
    %3071 = vmatmul.mubr.bf16.gmra.mxu0 %v2963
    %v3072 = vpop.f32.mrf.mxu0
    %v3073 = vadd.f32 %v2988, %v3072
    %v3074 = vpop.f32.mrf.mxu0
    %v3075 = vpop.f32.mrf.mxu0
    %v3076 = vadd.f32 %v2988, %v3075
    %v3077 = vpop.f32.mrf.mxu0
    %3078 = vmatprep.mubr.bf16.mxu0 0
    %3079 = vmatmul.mubr.bf16.gmra.mxu0 %v2964
    %v3080 = vpop.f32.mrf.mxu0
    %v3081 = vadd.f32 %v2988, %v3080
    %v3082 = vpop.f32.mrf.mxu0
    %v3083 = vpop.f32.mrf.mxu0
    %v3084 = vadd.f32 %v2988, %v3083
    %v3085 = vpop.f32.mrf.mxu0
    %3086 = vmatprep.mubr.bf16.mxu0 0
    %3087 = vmatmul.mubr.bf16.gmra.mxu0 %v2965
    %v3088 = vpop.f32.mrf.mxu0
    %v3089 = vadd.f32 %v2988, %v3088
    %v3090 = vpop.f32.mrf.mxu0
    %v3091 = vpop.f32.mrf.mxu0
    %v3092 = vadd.f32 %v2988, %v3091
    %v3093 = vpop.f32.mrf.mxu0
    %3094 = vmatprep.mubr.bf16.mxu0 0
    %3095 = vmatmul.mubr.bf16.gmra.mxu0 %v2966
    %v3096 = vpop.f32.mrf.mxu0
    %v3097 = vadd.f32 %v2988, %v3096
    %v3098 = vpop.f32.mrf.mxu0
    %v3099 = vpop.f32.mrf.mxu0
    %v3100 = vadd.f32 %v2988, %v3099
    %v3101 = vpop.f32.mrf.mxu0
    %3102 = vdwg.mxu0
    %3103 = vst [vmem:[#allocation7] sm:$0xff] %v3073
    %3104 = vst [vmem:[#allocation7 + $0x8] sm:$0xff] %v3076
    %3105 = vst [vmem:[#allocation7 + $0x10] sm:$0xff] %v3081
    %3106 = vst [vmem:[#allocation7 + $0x18] sm:$0xff] %v3084
    %3107 = vst [vmem:[#allocation7 + $0x20] sm:$0xff] %v3089
    %3108 = vst [vmem:[#allocation7 + $0x28] sm:$0xff] %v3092
    %3109 = vst [vmem:[#allocation7 + $0x30] sm:$0xff] %v3097
    %3110 = vst [vmem:[#allocation7 + $0x38] sm:$0xff] %v3100
    // Predicated region
    $region38: #{decode_sequence.1} parent=1 // pred_check
      _
    $region39: #{decode_sequence.1} parent=1 // pred_check_branch
      %3112 = sbr.rel (0) target = $region41
    $region40: #{decode_sequence.1} parent=1 // pred_region
      %s3114 = ssub.s32 1024, 1024
      %3115 = vsyncadd [#allocation6], %s3114
      %s3116 = sshll.u32 [#allocation7], 4
      %s3117 = int_to_ptr.vmem [resolvable:$true] %s3116
      %3122 = dma.vmem_to_hbm [thread:$0]  %s3117, 1024, %s8, [#allocation6], 128, 128, 8
    $region41: #{decode_sequence.1} parent=1 // pred_fallthru
      _
    // Predicated region
    $region42: #{decode_sequence.1} parent=1 // pred_check
      _
    $region43: #{decode_sequence.1} parent=1 // pred_check_branch
      %3124 = sbr.rel (0) target = $region45
    $region44: #{decode_sequence.1} parent=1 // pred_region
      %s3126 = ssub.s32 128, 128
      %3127 = vsyncadd [#allocation9], %s3126
      %s3129 = sshll.u32 [#allocation8], 4
      %s3130 = int_to_ptr.vmem [resolvable:$true] %s3129
      %3132 = dma.vmem_to_hbm [thread:$0]  %s3130, 128, %s9, [#allocation9]
    $region45: #{decode_sequence.1} parent=1 // pred_fallthru
      _
    // Predicated region
    $region46: #{decode_sequence.1} parent=1 // pred_check
      _
    $region47: #{decode_sequence.1} parent=1 // pred_check_branch
      %3134 = sbr.rel (0) target = $region49
    $region48: #{decode_sequence.1} parent=1 // pred_region
      %s3136 = ssub.s32 128, 128
      %3137 = vsyncadd [#allocation9], %s3136
      %s3139 = sshll.u32 [#allocation10], 4
      %s3140 = int_to_ptr.vmem [resolvable:$true] %s3139
      %3142 = dma.vmem_to_hbm [thread:$0]  %s3140, 128, %s10, [#allocation9]
    $region49: #{decode_sequence.1} parent=1 // pred_fallthru
      _
    // Predicated region
    $region50: #{decode_sequence.1} parent=1 // pred_check
      _
    $region51: #{decode_sequence.1} parent=1 // pred_check_branch
      %3144 = sbr.rel (0) target = $region53
    $region52: #{decode_sequence.1} parent=1 // pred_region
      %3145 = dma.done [#allocation6], 1024
    $region53: #{decode_sequence.1} parent=1 // pred_fallthru
      _
    // Predicated region
    $region54: #{decode_sequence.1} parent=1 // pred_check
      _
    $region55: #{decode_sequence.1} parent=1 // pred_check_branch
      %3147 = sbr.rel (0) target = $region57
    $region56: #{decode_sequence.1} parent=1 // pred_region
      %3148 = dma.done [#allocation9], 128
    $region57: #{decode_sequence.1} parent=1 // pred_fallthru
      _
    // Predicated region
    $region58: #{decode_sequence.1} parent=1 // pred_check
      _
    $region59: #{decode_sequence.1} parent=1 // pred_check_branch
      %3150 = sbr.rel (0) target = $region61
    $region60: #{decode_sequence.1} parent=1 // pred_region
      %3151 = dma.done [#allocation9], 128
    $region61: #{decode_sequence.1} parent=1 // pred_fallthru
      _
    %3152 = vsyncpa [#allocation5], 1
    %3153 = vsyncpa [#allocation6], 1
    %3154 = vsyncpa [#allocation9], 1

</llo_original>
